<compile_context>
chip_gen: v5e
topology: v5e:2x2
jax: 0.10.0
libtpu: 0.0.40
codegen_flags: <defaults>
</compile_context>

<pallas_src>
import jax
import jax.numpy as jnp
from jax.experimental import pallas as pl
from jax.experimental.pallas import tpu as pltpu

KH = KW = 3          # conv_kernel = 3
PAD = (KH - 1) // 2  # same padding
EPS = 1e-5           # nn.InstanceNorm2d default eps


def _im2col(src_ref, H, W, C):
    """Build the (H*W, KH*KW*C) patch matrix from a padded (Hp, Wp, C) ref."""
    cols = []
    for kh in range(KH):
        for kw in range(KW):
            cols.append(src_ref[kh:kh + H, kw:kw + W, :].reshape(H * W, C))
    return jnp.concatenate(cols, axis=-1)


def _input_layer_kernel(x_ref, w1_ref, b1_ref, w2_ref, b2_ref, o_ref,
                        xpad_ref, h1pad_ref):
    # x_ref:    (1, H, W, Cin)        unpadded NHWC input (one batch element)
    # w1_ref:   (KH*KW*Cin, Cout)     conv1 weights, im2col layout
    # b1_ref:   (1, Cout)
    # w2_ref:   (KH*KW*Cout, Cout)    conv2 weights, im2col layout
    # b2_ref:   (1, Cout)
    # o_ref:    (1, Cout, H*W)        lane-dense, NCHW-flat output slab
    # xpad_ref: (Hp, Wp, Cin)  VMEM scratch (zero-padded input)
    # h1pad_ref:(Hp, Wp, Cout) VMEM scratch (zero-padded conv1 output)
    _, H, W, Cin = x_ref.shape
    Cout = b1_ref.shape[-1]

    # ---- in-kernel zero padding of the input ----
    xpad_ref[...] = jnp.zeros_like(xpad_ref)
    xpad_ref[PAD:PAD + H, PAD:PAD + W, :] = x_ref[0].astype(jnp.float32)

    # ---- conv1: one im2col matmul (K = 9*Cin) + bias + ReLU ----
    patch1 = _im2col(xpad_ref, H, W, Cin)                        # (H*W, 9*Cin)
    h1 = jnp.dot(patch1, w1_ref[...], preferred_element_type=jnp.float32)
    h1 = jnp.maximum(h1 + b1_ref[...], 0.0)                      # (H*W, Cout)

    # ---- intermediate stays in VMEM, zero-padded for conv2 ----
    h1pad_ref[...] = jnp.zeros_like(h1pad_ref)
    h1pad_ref[PAD:PAD + H, PAD:PAD + W, :] = h1.reshape(H, W, Cout)

    # ---- conv2: one im2col matmul (K = 9*Cout) + bias ----
    patch2 = _im2col(h1pad_ref, H, W, Cout)                      # (H*W, 9*Cout)
    y = jnp.dot(patch2, w2_ref[...], preferred_element_type=jnp.float32)
    y = y + b2_ref[...]

    # ---- InstanceNorm2d(affine=False): per-channel mean/biased-var over H*W ----
    mean = jnp.mean(y, axis=0, keepdims=True)
    var = jnp.mean((y - mean) ** 2, axis=0, keepdims=True)
    y = (y - mean) * jax.lax.rsqrt(var + EPS)
    y = jnp.maximum(y, 0.0)                                      # (H*W, Cout)

    # ---- lane-dense store: (Cout, H*W) slab (256 lanes), already NCHW-flat ----
    o_ref[...] = y.T.reshape(1, Cout, H * W).astype(o_ref.dtype)


def input_layer_forward(x_nchw, w1, b1, w2, b2):
    """Pallas implementation of InputLayer.forward.

    x_nchw: (N, image_channels, H, W)              (PyTorch NCHW)
    w1:     (conv_channels, image_channels, 3, 3), b1: (conv_channels,)
    w2:     (conv_channels, conv_channels, 3, 3),  b2: (conv_channels,)
    returns (N, conv_channels, H, W)
    """
    N, Cin, H, W = x_nchw.shape
    Cout = w1.shape[0]
    Hp, Wp = H + 2 * PAD, W + 2 * PAD

    # NCHW -> NHWC (channels on the lane dim inside the kernel).
    x = jnp.transpose(x_nchw, (0, 2, 3, 1))
    # torch OIHW -> (KH*KW*Cin, Cout): row index = (kh*KW + kw)*Cin + ci,
    # matching the im2col column ordering in the kernel.
    w1_k = jnp.transpose(w1, (2, 3, 1, 0)).reshape(KH * KW * Cin, Cout)
    w2_k = jnp.transpose(w2, (2, 3, 1, 0)).reshape(KH * KW * Cout, Cout)

    out_flat = pl.pallas_call(
        _input_layer_kernel,
        out_shape=jax.ShapeDtypeStruct((N, Cout, H * W), jnp.float32),
        grid=(N,),
        in_specs=[
            pl.BlockSpec((1, H, W, Cin), lambda n: (n, 0, 0, 0)),
            pl.BlockSpec((KH * KW * Cin, Cout), lambda n: (0, 0)),
            pl.BlockSpec((1, Cout), lambda n: (0, 0)),
            pl.BlockSpec((KH * KW * Cout, Cout), lambda n: (0, 0)),
            pl.BlockSpec((1, Cout), lambda n: (0, 0)),
        ],
        out_specs=pl.BlockSpec((1, Cout, H * W), lambda n: (n, 0, 0)),
        scratch_shapes=[
            pltpu.VMEM((Hp, Wp, Cin), jnp.float32),
            pltpu.VMEM((Hp, Wp, Cout), jnp.float32),
        ],
        compiler_params=pltpu.CompilerParams(
            dimension_semantics=("parallel",)),
    )(x, w1_k, b1.reshape(1, Cout), w2_k, b2.reshape(1, Cout))

    # Output is already (N, Cout, H*W) in NCHW order: reshape only, no transpose.
    return out_flat.reshape(N, Cout, H, W)


def _ref_forward(x, w1, b1, w2, b2):
    """Pure-JAX reference matching the PyTorch semantics (NCHW)."""
    dn = jax.lax.conv_dimension_numbers(x.shape, w1.shape,
                                        ('NCHW', 'OIHW', 'NCHW'))
    y = jax.lax.conv_general_dilated(x, w1, (1, 1),
                                     [(PAD, PAD), (PAD, PAD)],
                                     dimension_numbers=dn)
    y = jax.nn.relu(y + b1[None, :, None, None])
    y = jax.lax.conv_general_dilated(y, w2, (1, 1),
                                     [(PAD, PAD), (PAD, PAD)],
                                     dimension_numbers=dn)
    y = y + b2[None, :, None, None]
    mean = jnp.mean(y, axis=(2, 3), keepdims=True)
    var = jnp.mean((y - mean) ** 2, axis=(2, 3), keepdims=True)
    y = (y - mean) / jnp.sqrt(var + EPS)
    return jax.nn.relu(y)


if __name__ == "__main__":
    key = jax.random.PRNGKey(0)
    k1, k2, k3, k4, k5 = jax.random.split(key, 5)

    N, image_channels, conv_channels, H, W = 2, 4, 8, 16, 16

    x = jax.random.normal(k1, (N, image_channels, H, W), jnp.float32)

    # Deterministic parameter init (uniform in +-1/sqrt(fan_in), PyTorch-style).
    fan1 = image_channels * KH * KW
    w1 = jax.random.uniform(k2, (conv_channels, image_channels, KH, KW),
                            jnp.float32, -1.0, 1.0) / jnp.sqrt(fan1)
    b1 = jax.random.uniform(k3, (conv_channels,),
                            jnp.float32, -1.0, 1.0) / jnp.sqrt(fan1)
    fan2 = conv_channels * KH * KW
    w2 = jax.random.uniform(k4, (conv_channels, conv_channels, KH, KW),
                            jnp.float32, -1.0, 1.0) / jnp.sqrt(fan2)
    b2 = jax.random.uniform(k5, (conv_channels,),
                            jnp.float32, -1.0, 1.0) / jnp.sqrt(fan2)

    out = jax.jit(input_layer_forward)(x, w1, b1, w2, b2)
    out = jax.block_until_ready(out)

    ref = _ref_forward(x, w1, b1, w2, b2)
    assert out.shape == (N, conv_channels, H, W)
    assert jnp.allclose(out, ref, atol=1e-4, rtol=1e-4), \
        f"max err {jnp.max(jnp.abs(out - ref))}"
    print("KERNEL_OK")
</pallas_src>

<mosaic_0001>
module attributes {stable_mosaic.version = 11 : i64} {
  func.func @_input_layer_kernel(%arg0: i32, %arg1: memref<1x16x16x4xf32, #tpu.memory_space<vmem>>, %arg2: memref<36x8xf32, #tpu.memory_space<vmem>>, %arg3: memref<1x8xf32, #tpu.memory_space<vmem>>, %arg4: memref<72x8xf32, #tpu.memory_space<vmem>>, %arg5: memref<1x8xf32, #tpu.memory_space<vmem>>, %arg6: memref<1x8x256xf32, #tpu.memory_space<vmem>>, %arg7: memref<18x18x4xf32, #tpu.memory_space<vmem>>, %arg8: memref<18x18x8xf32, #tpu.memory_space<vmem>>) attributes {dimension_semantics = [#tpu.dimension_semantics<parallel>], iteration_bounds = array<i64: 2>, scalar_prefetch = 0 : i64, scratch_operands = 2 : i64, tpu.core_type = #tpu.core_type<tc>, window_params = [{transform_indices = @transform_0, window_bounds = array<i64: 1, 16, 16, 4>}, {pipeline_mode = #tpu.pipeline_mode<synchronous>, transform_indices = @transform_1, window_bounds = array<i64: 36, 8>}, {pipeline_mode = #tpu.pipeline_mode<synchronous>, transform_indices = @transform_2, window_bounds = array<i64: 1, 8>}, {pipeline_mode = #tpu.pipeline_mode<synchronous>, transform_indices = @transform_3, window_bounds = array<i64: 72, 8>}, {pipeline_mode = #tpu.pipeline_mode<synchronous>, transform_indices = @transform_4, window_bounds = array<i64: 1, 8>}, {transform_indices = @transform_5, window_bounds = array<i64: 1, 8, 256>}]} {
    %cst = arith.constant 0.000000e+00 : f32
    %0 = vector.broadcast %cst : f32 to vector<18x18x4xf32>
    %c0 = arith.constant 0 : index
    %c0_0 = arith.constant 0 : index
    %c0_1 = arith.constant 0 : index
    %1 = vector.load %arg7[%c0, %c0_0, %c0_1] : memref<18x18x4xf32, #tpu.memory_space<vmem>>, vector<18x18x4xf32>
    tpu.vector_store %arg7[%c0, %c0_0, %c0_1], %0 {strides = array<i32>} : memref<18x18x4xf32, #tpu.memory_space<vmem>>, vector<18x18x4xf32>,
    %c0_2 = arith.constant 0 : index
    %c0_3 = arith.constant 0 : index
    %c0_4 = arith.constant 0 : index
    %c0_5 = arith.constant 0 : index
    %2 = vector.load %arg1[%c0_2, %c0_3, %c0_4, %c0_5] : memref<1x16x16x4xf32, #tpu.memory_space<vmem>>, vector<1x16x16x4xf32>
    %3 = vector.shape_cast %2 : vector<1x16x16x4xf32> to vector<16x16x4xf32>
    %c1 = arith.constant 1 : index
    %c1_6 = arith.constant 1 : index
    %c0_7 = arith.constant 0 : index
    %4 = vector.load %arg7[%c1, %c1_6, %c0_7] : memref<18x18x4xf32, #tpu.memory_space<vmem>>, vector<16x16x4xf32>
    tpu.vector_store %arg7[%c1, %c1_6, %c0_7], %3 {strides = array<i32>} : memref<18x18x4xf32, #tpu.memory_space<vmem>>, vector<16x16x4xf32>,
    %c0_8 = arith.constant 0 : index
    %c0_9 = arith.constant 0 : index
    %c0_10 = arith.constant 0 : index
    %5 = vector.load %arg7[%c0_8, %c0_9, %c0_10] : memref<18x18x4xf32, #tpu.memory_space<vmem>>, vector<16x16x4xf32>
    %6 = vector.shape_cast %5 : vector<16x16x4xf32> to vector<256x4xf32>
    %c0_11 = arith.constant 0 : index
    %c1_12 = arith.constant 1 : index
    %c0_13 = arith.constant 0 : index
    %7 = vector.load %arg7[%c0_11, %c1_12, %c0_13] : memref<18x18x4xf32, #tpu.memory_space<vmem>>, vector<16x16x4xf32>
    %8 = vector.shape_cast %7 : vector<16x16x4xf32> to vector<256x4xf32>
    %c0_14 = arith.constant 0 : index
    %c2 = arith.constant 2 : index
    %c0_15 = arith.constant 0 : index
    %9 = vector.load %arg7[%c0_14, %c2, %c0_15] : memref<18x18x4xf32, #tpu.memory_space<vmem>>, vector<16x16x4xf32>
    %10 = vector.shape_cast %9 : vector<16x16x4xf32> to vector<256x4xf32>
    %c1_16 = arith.constant 1 : index
    %c0_17 = arith.constant 0 : index
    %c0_18 = arith.constant 0 : index
    %11 = vector.load %arg7[%c1_16, %c0_17, %c0_18] : memref<18x18x4xf32, #tpu.memory_space<vmem>>, vector<16x16x4xf32>
    %12 = vector.shape_cast %11 : vector<16x16x4xf32> to vector<256x4xf32>
    %c1_19 = arith.constant 1 : index
    %c1_20 = arith.constant 1 : index
    %c0_21 = arith.constant 0 : index
    %13 = vector.load %arg7[%c1_19, %c1_20, %c0_21] : memref<18x18x4xf32, #tpu.memory_space<vmem>>, vector<16x16x4xf32>
    %14 = vector.shape_cast %13 : vector<16x16x4xf32> to vector<256x4xf32>
    %c1_22 = arith.constant 1 : index
    %c2_23 = arith.constant 2 : index
    %c0_24 = arith.constant 0 : index
    %15 = vector.load %arg7[%c1_22, %c2_23, %c0_24] : memref<18x18x4xf32, #tpu.memory_space<vmem>>, vector<16x16x4xf32>
    %16 = vector.shape_cast %15 : vector<16x16x4xf32> to vector<256x4xf32>
    %c2_25 = arith.constant 2 : index
    %c0_26 = arith.constant 0 : index
    %c0_27 = arith.constant 0 : index
    %17 = vector.load %arg7[%c2_25, %c0_26, %c0_27] : memref<18x18x4xf32, #tpu.memory_space<vmem>>, vector<16x16x4xf32>
    %18 = vector.shape_cast %17 : vector<16x16x4xf32> to vector<256x4xf32>
    %c2_28 = arith.constant 2 : index
    %c1_29 = arith.constant 1 : index
    %c0_30 = arith.constant 0 : index
    %19 = vector.load %arg7[%c2_28, %c1_29, %c0_30] : memref<18x18x4xf32, #tpu.memory_space<vmem>>, vector<16x16x4xf32>
    %20 = vector.shape_cast %19 : vector<16x16x4xf32> to vector<256x4xf32>
    %c2_31 = arith.constant 2 : index
    %c2_32 = arith.constant 2 : index
    %c0_33 = arith.constant 0 : index
    %21 = vector.load %arg7[%c2_31, %c2_32, %c0_33] : memref<18x18x4xf32, #tpu.memory_space<vmem>>, vector<16x16x4xf32>
    %22 = vector.shape_cast %21 : vector<16x16x4xf32> to vector<256x4xf32>
    %23 = tpu.concatenate %6, %8, %10, %12, %14, %16, %18, %20, %22 in 1 : vector<256x4xf32>, vector<256x4xf32>, vector<256x4xf32>, vector<256x4xf32>, vector<256x4xf32>, vector<256x4xf32>, vector<256x4xf32>, vector<256x4xf32>, vector<256x4xf32> -> vector<256x36xf32>
    %c0_34 = arith.constant 0 : index
    %c0_35 = arith.constant 0 : index
    %24 = vector.load %arg2[%c0_34, %c0_35] : memref<36x8xf32, #tpu.memory_space<vmem>>, vector<36x8xf32>
    %cst_36 = arith.constant dense<0.000000e+00> : vector<256x8xf32>
    %25 = tpu.matmul %23, %24, %cst_36 {dimension_numbers = #tpu.dot_dimension_numbers<[1], [0], [0], [1], [0, 0, 1, 1], [], []>} : vector<256x36xf32>, vector<36x8xf32>, vector<256x8xf32> -> vector<256x8xf32>
    %c0_37 = arith.constant 0 : index
    %c0_38 = arith.constant 0 : index
    %26 = vector.load %arg3[%c0_37, %c0_38] : memref<1x8xf32, #tpu.memory_space<vmem>>, vector<1x8xf32>
    %27 = vector.broadcast %26 : vector<1x8xf32> to vector<256x8xf32>
    %28 = arith.addf %25, %27 : vector<256x8xf32>
    %cst_39 = arith.constant 0.000000e+00 : f32
    %29 = vector.broadcast %cst_39 : f32 to vector<256x8xf32>
    %30 = arith.maximumf %28, %29 : vector<256x8xf32>
    %cst_40 = arith.constant 0.000000e+00 : f32
    %31 = vector.broadcast %cst_40 : f32 to vector<18x18x8xf32>
    %c0_41 = arith.constant 0 : index
    %c0_42 = arith.constant 0 : index
    %c0_43 = arith.constant 0 : index
    %32 = vector.load %arg8[%c0_41, %c0_42, %c0_43] : memref<18x18x8xf32, #tpu.memory_space<vmem>>, vector<18x18x8xf32>
    tpu.vector_store %arg8[%c0_41, %c0_42, %c0_43], %31 {strides = array<i32>} : memref<18x18x8xf32, #tpu.memory_space<vmem>>, vector<18x18x8xf32>,
    %33 = vector.shape_cast %30 : vector<256x8xf32> to vector<16x16x8xf32>
    %c1_44 = arith.constant 1 : index
    %c1_45 = arith.constant 1 : index
    %c0_46 = arith.constant 0 : index
    %34 = vector.load %arg8[%c1_44, %c1_45, %c0_46] : memref<18x18x8xf32, #tpu.memory_space<vmem>>, vector<16x16x8xf32>
    tpu.vector_store %arg8[%c1_44, %c1_45, %c0_46], %33 {strides = array<i32>} : memref<18x18x8xf32, #tpu.memory_space<vmem>>, vector<16x16x8xf32>,
    %c0_47 = arith.constant 0 : index
    %c0_48 = arith.constant 0 : index
    %c0_49 = arith.constant 0 : index
    %35 = vector.load %arg8[%c0_47, %c0_48, %c0_49] : memref<18x18x8xf32, #tpu.memory_space<vmem>>, vector<16x16x8xf32>
    %36 = vector.shape_cast %35 : vector<16x16x8xf32> to vector<256x8xf32>
    %c0_50 = arith.constant 0 : index
    %c1_51 = arith.constant 1 : index
    %c0_52 = arith.constant 0 : index
    %37 = vector.load %arg8[%c0_50, %c1_51, %c0_52] : memref<18x18x8xf32, #tpu.memory_space<vmem>>, vector<16x16x8xf32>
    %38 = vector.shape_cast %37 : vector<16x16x8xf32> to vector<256x8xf32>
    %c0_53 = arith.constant 0 : index
    %c2_54 = arith.constant 2 : index
    %c0_55 = arith.constant 0 : index
    %39 = vector.load %arg8[%c0_53, %c2_54, %c0_55] : memref<18x18x8xf32, #tpu.memory_space<vmem>>, vector<16x16x8xf32>
    %40 = vector.shape_cast %39 : vector<16x16x8xf32> to vector<256x8xf32>
    %c1_56 = arith.constant 1 : index
    %c0_57 = arith.constant 0 : index
    %c0_58 = arith.constant 0 : index
    %41 = vector.load %arg8[%c1_56, %c0_57, %c0_58] : memref<18x18x8xf32, #tpu.memory_space<vmem>>, vector<16x16x8xf32>
    %42 = vector.shape_cast %41 : vector<16x16x8xf32> to vector<256x8xf32>
    %c1_59 = arith.constant 1 : index
    %c1_60 = arith.constant 1 : index
    %c0_61 = arith.constant 0 : index
    %43 = vector.load %arg8[%c1_59, %c1_60, %c0_61] : memref<18x18x8xf32, #tpu.memory_space<vmem>>, vector<16x16x8xf32>
    %44 = vector.shape_cast %43 : vector<16x16x8xf32> to vector<256x8xf32>
    %c1_62 = arith.constant 1 : index
    %c2_63 = arith.constant 2 : index
    %c0_64 = arith.constant 0 : index
    %45 = vector.load %arg8[%c1_62, %c2_63, %c0_64] : memref<18x18x8xf32, #tpu.memory_space<vmem>>, vector<16x16x8xf32>
    %46 = vector.shape_cast %45 : vector<16x16x8xf32> to vector<256x8xf32>
    %c2_65 = arith.constant 2 : index
    %c0_66 = arith.constant 0 : index
    %c0_67 = arith.constant 0 : index
    %47 = vector.load %arg8[%c2_65, %c0_66, %c0_67] : memref<18x18x8xf32, #tpu.memory_space<vmem>>, vector<16x16x8xf32>
    %48 = vector.shape_cast %47 : vector<16x16x8xf32> to vector<256x8xf32>
    %c2_68 = arith.constant 2 : index
    %c1_69 = arith.constant 1 : index
    %c0_70 = arith.constant 0 : index
    %49 = vector.load %arg8[%c2_68, %c1_69, %c0_70] : memref<18x18x8xf32, #tpu.memory_space<vmem>>, vector<16x16x8xf32>
    %50 = vector.shape_cast %49 : vector<16x16x8xf32> to vector<256x8xf32>
    %c2_71 = arith.constant 2 : index
    %c2_72 = arith.constant 2 : index
    %c0_73 = arith.constant 0 : index
    %51 = vector.load %arg8[%c2_71, %c2_72, %c0_73] : memref<18x18x8xf32, #tpu.memory_space<vmem>>, vector<16x16x8xf32>
    %52 = vector.shape_cast %51 : vector<16x16x8xf32> to vector<256x8xf32>
    %53 = tpu.concatenate %36, %38, %40, %42, %44, %46, %48, %50, %52 in 1 : vector<256x8xf32>, vector<256x8xf32>, vector<256x8xf32>, vector<256x8xf32>, vector<256x8xf32>, vector<256x8xf32>, vector<256x8xf32>, vector<256x8xf32>, vector<256x8xf32> -> vector<256x72xf32>
    %c0_74 = arith.constant 0 : index
    %c0_75 = arith.constant 0 : index
    %54 = vector.load %arg4[%c0_74, %c0_75] : memref<72x8xf32, #tpu.memory_space<vmem>>, vector<72x8xf32>
    %cst_76 = arith.constant dense<0.000000e+00> : vector<256x8xf32>
    %55 = tpu.matmul %53, %54, %cst_76 {dimension_numbers = #tpu.dot_dimension_numbers<[1], [0], [0], [1], [0, 0, 1, 1], [], []>} : vector<256x72xf32>, vector<72x8xf32>, vector<256x8xf32> -> vector<256x8xf32>
    %c0_77 = arith.constant 0 : index
    %c0_78 = arith.constant 0 : index
    %56 = vector.load %arg5[%c0_77, %c0_78] : memref<1x8xf32, #tpu.memory_space<vmem>>, vector<1x8xf32>
    %57 = vector.broadcast %56 : vector<1x8xf32> to vector<256x8xf32>
    %58 = arith.addf %55, %57 : vector<256x8xf32>
    %cst_79 = arith.constant dense<0.000000e+00> : vector<8xf32>
    %59 = vector.multi_reduction <add>, %58, %cst_79 [0] : vector<256x8xf32> to vector<8xf32>
    %60 = vector.shape_cast %59 : vector<8xf32> to vector<1x8xf32>
    %cst_80 = arith.constant 2.560000e+02 : f32
    %61 = vector.broadcast %cst_80 : f32 to vector<1x8xf32>
    %62 = arith.divf %60, %61 : vector<1x8xf32>
    %63 = vector.broadcast %62 : vector<1x8xf32> to vector<256x8xf32>
    %64 = arith.subf %58, %63 : vector<256x8xf32>
    %65 = arith.mulf %64, %64 : vector<256x8xf32>
    %cst_81 = arith.constant dense<0.000000e+00> : vector<8xf32>
    %66 = vector.multi_reduction <add>, %65, %cst_81 [0] : vector<256x8xf32> to vector<8xf32>
    %67 = vector.shape_cast %66 : vector<8xf32> to vector<1x8xf32>
    %cst_82 = arith.constant 2.560000e+02 : f32
    %68 = vector.broadcast %cst_82 : f32 to vector<1x8xf32>
    %69 = arith.divf %67, %68 : vector<1x8xf32>
    %70 = vector.broadcast %62 : vector<1x8xf32> to vector<256x8xf32>
    %71 = arith.subf %58, %70 : vector<256x8xf32>
    %cst_83 = arith.constant 9.99999974E-6 : f32
    %72 = vector.broadcast %cst_83 : f32 to vector<1x8xf32>
    %73 = arith.addf %69, %72 : vector<1x8xf32>
    %74 = math.rsqrt %73 : vector<1x8xf32>
    %75 = vector.broadcast %74 : vector<1x8xf32> to vector<256x8xf32>
    %76 = arith.mulf %71, %75 : vector<256x8xf32>
    %cst_84 = arith.constant 0.000000e+00 : f32
    %77 = vector.broadcast %cst_84 : f32 to vector<256x8xf32>
    %78 = arith.maximumf %76, %77 : vector<256x8xf32>
    %79 = tpu.transpose %78, [1, 0] : vector<256x8xf32> -> vector<8x256xf32>
    %80 = vector.shape_cast %79 : vector<8x256xf32> to vector<1x8x256xf32>
    %c0_85 = arith.constant 0 : index
    %c0_86 = arith.constant 0 : index
    %c0_87 = arith.constant 0 : index
    %81 = vector.load %arg6[%c0_85, %c0_86, %c0_87] : memref<1x8x256xf32, #tpu.memory_space<vmem>>, vector<1x8x256xf32>
    tpu.vector_store %arg6[%c0_85, %c0_86, %c0_87], %80 {strides = array<i32>} : memref<1x8x256xf32, #tpu.memory_space<vmem>>, vector<1x8x256xf32>,
    return
  }
  func.func @transform_0(%arg0: i32) -> (i32, i32, i32, i32) {
    %c0_i32 = arith.constant 0 : i32
    %c0_i32_0 = arith.constant 0 : i32
    %c0_i32_1 = arith.constant 0 : i32
    %c0_i32_2 = arith.constant 0 : i32
    return %arg0, %c0_i32, %c0_i32_0, %c0_i32_1 : i32, i32, i32, i32
  }
  func.func @transform_1(%arg0: i32) -> (i32, i32) {
    %c0_i32 = arith.constant 0 : i32
    %c0_i32_0 = arith.constant 0 : i32
    %c0_i32_1 = arith.constant 0 : i32
    return %c0_i32, %c0_i32_0 : i32, i32
  }
  func.func @transform_2(%arg0: i32) -> (i32, i32) {
    %c0_i32 = arith.constant 0 : i32
    %c0_i32_0 = arith.constant 0 : i32
    %c0_i32_1 = arith.constant 0 : i32
    return %c0_i32, %c0_i32_0 : i32, i32
  }
  func.func @transform_3(%arg0: i32) -> (i32, i32) {
    %c0_i32 = arith.constant 0 : i32
    %c0_i32_0 = arith.constant 0 : i32
    %c0_i32_1 = arith.constant 0 : i32
    return %c0_i32, %c0_i32_0 : i32, i32
  }
  func.func @transform_4(%arg0: i32) -> (i32, i32) {
    %c0_i32 = arith.constant 0 : i32
    %c0_i32_0 = arith.constant 0 : i32
    %c0_i32_1 = arith.constant 0 : i32
    return %c0_i32, %c0_i32_0 : i32, i32
  }
  func.func @transform_5(%arg0: i32) -> (i32, i32, i32) {
    %c0_i32 = arith.constant 0 : i32
    %c0_i32_0 = arith.constant 0 : i32
    %c0_i32_1 = arith.constant 0 : i32
    return %arg0, %c0_i32, %c0_i32_0 : i32, i32, i32
  }
}

</mosaic_0001>

<llo_original>
// kernel: input_layer_forward.1
$region0: #{input_layer_forward.1}
  #allocation0 [shape = 'u32[]', space=smem, size = 0x4, offset = 0x4, fixed_abs, tag = 'smem constant byte address 0x4 - core index']
  #allocation1 [shape = 'u32[72,128]{1,0:T(1,128)}', space=vmem, size = 0x9000, scoped, tag = 'internal scratch']
  #allocation2 [shape = 'f32[18,18,4]{2,1,0:T(8,128)}', space=vmem, size = 0x36000, scoped, tag = 'scratch operand']
  #allocation3 [shape = 'f32[18,18,8]{2,1,0:T(8,128)}', space=vmem, size = 0x36000, scoped, tag = 'scratch operand']
  %s0 = inlined_call_operand.vmem [shape: f32[2,16,16,4], index: 0, kind: input, shape index: {}]
  %s1 = inlined_call_operand.vmem [shape: f32[36,8], index: 1, kind: input, shape index: {}]
  %s2 = inlined_call_operand.vmem [shape: f32[1,8], index: 2, kind: input, shape index: {}]
  %s3 = inlined_call_operand.vmem [shape: f32[72,8], index: 3, kind: input, shape index: {}]
  %s4 = inlined_call_operand.vmem [shape: f32[1,8], index: 4, kind: input, shape index: {}]
  %s5 = inlined_call_operand.vmem [shape: f32[2,8,256], index: 5, kind: output, shape index: {}]
  %s6 = sld [smem:[#allocation0]]
  $region53: #{input_layer_forward.1} parent=0
    _
  %s8 = ssub.s32 1, %s6
  %s9 = scalar_select 0, %s8, %s6
  loop: start=0, step=1, limit=4
  $region2: #{input_layer_forward.1} parent=0 // loop_pre_header
    _
  $region3: #{input_layer_forward.1} parent=0 // loop_header
    %s11 = sphi 0, %s15
    %p12 = scmp.ge.s32.totalorder %s11, 4
    %s21 = sphi 0, %s23
    %s24 = sphi 0, %s21
    %s25 = sphi 0, %s24
    %s41 = sphi 0, %s25
    %s45 = sphi 0, %s45
    %s47 = sphi 0, %s45
    %s48 = sphi 0, %s47
    %s62 = sphi 0, %s48
    %s66 = sphi 0, %s66
    %s68 = sphi 0, %s66
    %s69 = sphi 0, %s68
    %s83 = sphi 0, %s69
    %s87 = sphi 0, %s87
    %s89 = sphi 0, %s87
    %s90 = sphi 0, %s89
    %s104 = sphi 0, %s90
    %s108 = sphi 0, %s108
    %s110 = sphi 0, %s108
    %s111 = sphi 0, %s110
    %s125 = sphi 0, %s111
    %s131 = sphi 0, %s133
    %s134 = sphi 0, %s131
    %s135 = sphi 0, %s134
    %s151 = sphi 0, %s135
  $region4: #{input_layer_forward.1} parent=0 // loop_header_branch
    %14 = sbr.rel (%p12) target = $region8
  $region5: #{input_layer_forward.1} parent=0 // loop_body
    %s16 = ssub.s32 %s11, 1
    %s17 = ssub.s32 %s11, 2
    %s18 = sadd.s32 %s11, 1
    %s19 = ssub.s32 %s11, %s18
    %p20 = scmp.eq.s32.totalorder %s19, 0
    %s22 = sadd.s32 %s21, 1
    %s23 = scalar_select %p20, %s21, %s22
    %p26 = pneg %p20
    %p27 = scmp.eq.s32.totalorder %s11, 1
    %p28 = por %p26, %p27
    %p29 = scmp.ne.s32.totalorder %s21, %s24
    %p30 = scmp.eq.s32.totalorder %s11, 0
    %p31 = por %p29, %p30
    %p32 = scmp.ne.s32.totalorder %s21, %s24
    %p33 = scmp.eq.s32.totalorder %s16, 1
    %p34 = por %p32, %p33
    %p35 = scmp.ne.s32.totalorder %s24, %s25
    %p36 = scmp.eq.s32.totalorder %s16, 0
    %p37 = por %p35, %p36
    %p38 = scmp.ne.s32.totalorder %s24, %s25
    %p39 = scmp.eq.s32.totalorder %s17, 1
    %p40 = por %p38, %p39
    %p42 = scmp.ne.s32.totalorder %s25, %s41
    %p43 = scmp.eq.s32.totalorder %s17, 0
    %p44 = por %p42, %p43
    %s46 = sadd.s32 %s45, 1
    %p49 = scmp.eq.s32.totalorder %s11, 1
    %p50 = scmp.ne.s32.totalorder %s45, %s47
    %p51 = scmp.eq.s32.totalorder %s11, 0
    %p52 = por %p50, %p51
    %p53 = scmp.ne.s32.totalorder %s45, %s47
    %p54 = scmp.eq.s32.totalorder %s16, 1
    %p55 = por %p53, %p54
    %p56 = scmp.ne.s32.totalorder %s47, %s48
    %p57 = scmp.eq.s32.totalorder %s16, 0
    %p58 = por %p56, %p57
    %p59 = scmp.ne.s32.totalorder %s47, %s48
    %p60 = scmp.eq.s32.totalorder %s17, 1
    %p61 = por %p59, %p60
    %p63 = scmp.ne.s32.totalorder %s48, %s62
    %p64 = scmp.eq.s32.totalorder %s17, 0
    %p65 = por %p63, %p64
    %s67 = sadd.s32 %s66, 1
    %p70 = scmp.eq.s32.totalorder %s11, 1
    %p71 = scmp.ne.s32.totalorder %s66, %s68
    %p72 = scmp.eq.s32.totalorder %s11, 0
    %p73 = por %p71, %p72
    %p74 = scmp.ne.s32.totalorder %s66, %s68
    %p75 = scmp.eq.s32.totalorder %s16, 1
    %p76 = por %p74, %p75
    %p77 = scmp.ne.s32.totalorder %s68, %s69
    %p78 = scmp.eq.s32.totalorder %s16, 0
    %p79 = por %p77, %p78
    %p80 = scmp.ne.s32.totalorder %s68, %s69
    %p81 = scmp.eq.s32.totalorder %s17, 1
    %p82 = por %p80, %p81
    %p84 = scmp.ne.s32.totalorder %s69, %s83
    %p85 = scmp.eq.s32.totalorder %s17, 0
    %p86 = por %p84, %p85
    %s88 = sadd.s32 %s87, 1
    %p91 = scmp.eq.s32.totalorder %s11, 1
    %p92 = scmp.ne.s32.totalorder %s87, %s89
    %p93 = scmp.eq.s32.totalorder %s11, 0
    %p94 = por %p92, %p93
    %p95 = scmp.ne.s32.totalorder %s87, %s89
    %p96 = scmp.eq.s32.totalorder %s16, 1
    %p97 = por %p95, %p96
    %p98 = scmp.ne.s32.totalorder %s89, %s90
    %p99 = scmp.eq.s32.totalorder %s16, 0
    %p100 = por %p98, %p99
    %p101 = scmp.ne.s32.totalorder %s89, %s90
    %p102 = scmp.eq.s32.totalorder %s17, 1
    %p103 = por %p101, %p102
    %p105 = scmp.ne.s32.totalorder %s90, %s104
    %p106 = scmp.eq.s32.totalorder %s17, 0
    %p107 = por %p105, %p106
    %s109 = sadd.s32 %s108, 1
    %p112 = scmp.eq.s32.totalorder %s11, 1
    %p113 = scmp.ne.s32.totalorder %s108, %s110
    %p114 = scmp.eq.s32.totalorder %s11, 0
    %p115 = por %p113, %p114
    %p116 = scmp.ne.s32.totalorder %s108, %s110
    %p117 = scmp.eq.s32.totalorder %s16, 1
    %p118 = por %p116, %p117
    %p119 = scmp.ne.s32.totalorder %s110, %s111
    %p120 = scmp.eq.s32.totalorder %s16, 0
    %p121 = por %p119, %p120
    %p122 = scmp.ne.s32.totalorder %s110, %s111
    %p123 = scmp.eq.s32.totalorder %s17, 1
    %p124 = por %p122, %p123
    %p126 = scmp.ne.s32.totalorder %s111, %s125
    %p127 = scmp.eq.s32.totalorder %s17, 0
    %p128 = por %p126, %p127
    %s129 = ssub.s32 %s11, %s18
    %p130 = scmp.eq.s32.totalorder %s129, 0
    %s132 = sadd.s32 %s131, 1
    %s133 = scalar_select %p130, %s131, %s132
    %p136 = pneg %p130
    %p137 = scmp.eq.s32.totalorder %s11, 1
    %p138 = por %p136, %p137
    %p139 = scmp.ne.s32.totalorder %s131, %s134
    %p140 = scmp.eq.s32.totalorder %s11, 0
    %p141 = por %p139, %p140
    %p142 = scmp.ne.s32.totalorder %s131, %s134
    %p143 = scmp.eq.s32.totalorder %s16, 1
    %p144 = por %p142, %p143
    %p145 = scmp.ne.s32.totalorder %s134, %s135
    %p146 = scmp.eq.s32.totalorder %s16, 0
    %p147 = por %p145, %p146
    %p148 = scmp.ne.s32.totalorder %s134, %s135
    %p149 = scmp.eq.s32.totalorder %s17, 1
    %p150 = por %p148, %p149
    %p152 = scmp.ne.s32.totalorder %s135, %s151
    %p153 = scmp.eq.s32.totalorder %s17, 0
    %p154 = por %p152, %p153
    %p155 = scmp.le.s32.totalorder 1, %s11
    %p156 = scmp.lt.s32.totalorder %s11, 3
    %p157 = pnand %p155, %p156
    %p158 = pneg %p157
    // Predicated region
    $region9: #{input_layer_forward.1} parent=5 // pred_check
      _
    $region10: #{input_layer_forward.1} parent=5 // pred_check_branch
      %160 = sbr.rel (%p157) target = $region12
    $region11: #{input_layer_forward.1} parent=5 // pred_region
      %s161 = ssub.s32 %s11, 1
      // Predicated region
      $region13: #{input_layer_forward.1} parent=11 // pred_check
        %p162 = pneg %p58
      $region14: #{input_layer_forward.1} parent=11 // pred_check_branch
        %164 = sbr.rel (%p162) target = $region16
      $region15: #{input_layer_forward.1} parent=11 // pred_region
        _
      $region16: #{input_layer_forward.1} parent=11 // pred_fallthru
        _
      // Predicated region
      $region17: #{input_layer_forward.1} parent=11 // pred_check
        %p165 = pneg %p79
      $region18: #{input_layer_forward.1} parent=11 // pred_check_branch
        %167 = sbr.rel (%p165) target = $region20
      $region19: #{input_layer_forward.1} parent=11 // pred_region
        _
      $region20: #{input_layer_forward.1} parent=11 // pred_fallthru
        _
      // Predicated region
      $region21: #{input_layer_forward.1} parent=11 // pred_check
        %p168 = pneg %p100
      $region22: #{input_layer_forward.1} parent=11 // pred_check_branch
        %170 = sbr.rel (%p168) target = $region24
      $region23: #{input_layer_forward.1} parent=11 // pred_region
        _
      $region24: #{input_layer_forward.1} parent=11 // pred_fallthru
        _
      // Predicated region
      $region25: #{input_layer_forward.1} parent=11 // pred_check
        %p171 = pneg %p121
      $region26: #{input_layer_forward.1} parent=11 // pred_check_branch
        %173 = sbr.rel (%p171) target = $region28
      $region27: #{input_layer_forward.1} parent=11 // pred_region
        _
      $region28: #{input_layer_forward.1} parent=11 // pred_fallthru
        _
    $region12: #{input_layer_forward.1} parent=5 // pred_fallthru
      _
    %p174 = scmp.lt.s32.totalorder %s11, 2
    // Predicated region
    $region29: #{input_layer_forward.1} parent=5 // pred_check
      %p175 = pneg %p174
    $region30: #{input_layer_forward.1} parent=5 // pred_check_branch
      %177 = sbr.rel (%p175) target = $region32
    $region31: #{input_layer_forward.1} parent=5 // pred_region
      // Predicated region
      $region33: #{input_layer_forward.1} parent=31 // pred_check
        %p178 = pneg %p31
      $region34: #{input_layer_forward.1} parent=31 // pred_check_branch
        %180 = sbr.rel (%p178) target = $region36
      $region35: #{input_layer_forward.1} parent=31 // pred_region
        %p181 = scmp.lt.s32.totalorder %s11, 1
        %s182 = scalar_select %p181, %s11, 1
        %s183 = smul.addr %s182, 32
        %s184 = smul.addr %s183, 8
        %s185 = scalar_lea.vmem %s0, %s184
      $region36: #{input_layer_forward.1} parent=31 // pred_fallthru
        _
    $region32: #{input_layer_forward.1} parent=5 // pred_fallthru
      _
    %p186 = scmp.le.s32.totalorder 1, %s11
    %p187 = scmp.lt.s32.totalorder %s11, 3
    %p188 = pnand %p186, %p187
    %p189 = pneg %p188
    // Predicated region
    $region37: #{input_layer_forward.1} parent=5 // pred_check
      _
    $region38: #{input_layer_forward.1} parent=5 // pred_check_branch
      %191 = sbr.rel (%p188) target = $region40
    $region39: #{input_layer_forward.1} parent=5 // pred_region
      %s192 = ssub.s32 %s11, 1
      %p193 = scmp.lt.s32.totalorder %s16, 1
      %s194 = scalar_select %p193, %s16, 1
      %s195 = smul.addr %s194, 32
      %s196 = smul.addr %s195, 8
      %s197 = scalar_lea.vmem %s0, %s196
      %p198 = pneg %p37
      %p199 = pneg %p34
      %p200 = pneg %p58
      %p201 = pneg %p55
      %p202 = pneg %p79
      %p203 = pneg %p76
      %p204 = pneg %p100
      %p205 = pneg %p97
      %p206 = pneg %p121
      %p207 = pneg %p118
      %p208 = pneg %p147
      %p209 = pneg %p144
      %p210 = scmp.lt.s32.totalorder %s16, 1
      %s211 = scalar_select %p210, %s16, 1
      %s212 = smul.addr %s211, 2
      %s213 = smul.addr %s212, 8
      %s214 = scalar_lea.vmem %s5, %s213
      %p215 = scmp.lt.s32.totalorder %s16, 1
      %s216 = scalar_select %p215, %s16, 1
      %s217 = smul.addr %s216, 32
      %s218 = smul.addr %s217, 8
      %s219 = scalar_lea.vmem %s0, %s218
      %p220 = scmp.lt.s32.totalorder %s16, 1
      %s221 = scalar_select %p220, %s16, 1
      %s222 = smul.addr %s221, 2
      %s223 = smul.addr %s222, 8
      %s224 = scalar_lea.vmem %s5, %s223
      %vm225 = vcmask 31744
      %226 = vst.msk [vmem:[#allocation2] sm:$0xff] %vm225, 0.0
      %227 = vst.msk [vmem:[#allocation2 + $0x8] sm:$0xff] %vm225, 0.0
      %vm228 = vcmask 25600
      %229 = vst.msk [vmem:[#allocation2 + $0x10] sm:$0x3] %vm228, 0.0
      %230 = vst.msk [vmem:[#allocation2 + $0x18] sm:$0xff] %vm225, 0.0
      %231 = vst.msk [vmem:[#allocation2 + $0x20] sm:$0xff] %vm225, 0.0
      %232 = vst.msk [vmem:[#allocation2 + $0x28] sm:$0x3] %vm228, 0.0
      %233 = vst.msk [vmem:[#allocation2 + $0x30] sm:$0xff] %vm225, 0.0
      %234 = vst.msk [vmem:[#allocation2 + $0x38] sm:$0xff] %vm225, 0.0
      %235 = vst.msk [vmem:[#allocation2 + $0x40] sm:$0x3] %vm228, 0.0
      %236 = vst.msk [vmem:[#allocation2 + $0x48] sm:$0xff] %vm225, 0.0
      %237 = vst.msk [vmem:[#allocation2 + $0x50] sm:$0xff] %vm225, 0.0
      %238 = vst.msk [vmem:[#allocation2 + $0x58] sm:$0x3] %vm228, 0.0
      %239 = vst.msk [vmem:[#allocation2 + $0x60] sm:$0xff] %vm225, 0.0
      %240 = vst.msk [vmem:[#allocation2 + $0x68] sm:$0xff] %vm225, 0.0
      %241 = vst.msk [vmem:[#allocation2 + $0x70] sm:$0x3] %vm228, 0.0
      %242 = vst.msk [vmem:[#allocation2 + $0x78] sm:$0xff] %vm225, 0.0
      %243 = vst.msk [vmem:[#allocation2 + $0x80] sm:$0xff] %vm225, 0.0
      %244 = vst.msk [vmem:[#allocation2 + $0x88] sm:$0x3] %vm228, 0.0
      %245 = vst.msk [vmem:[#allocation2 + $0x90] sm:$0xff] %vm225, 0.0
      %246 = vst.msk [vmem:[#allocation2 + $0x98] sm:$0xff] %vm225, 0.0
      %247 = vst.msk [vmem:[#allocation2 + $0xa0] sm:$0x3] %vm228, 0.0
      %248 = vst.msk [vmem:[#allocation2 + $0xa8] sm:$0xff] %vm225, 0.0
      %249 = vst.msk [vmem:[#allocation2 + $0xb0] sm:$0xff] %vm225, 0.0
      %250 = vst.msk [vmem:[#allocation2 + $0xb8] sm:$0x3] %vm228, 0.0
      %251 = vst.msk [vmem:[#allocation2 + $0xc0] sm:$0xff] %vm225, 0.0
      %252 = vst.msk [vmem:[#allocation2 + $0xc8] sm:$0xff] %vm225, 0.0
      %253 = vst.msk [vmem:[#allocation2 + $0xd0] sm:$0x3] %vm228, 0.0
      %254 = vst.msk [vmem:[#allocation2 + $0xd8] sm:$0xff] %vm225, 0.0
      %255 = vst.msk [vmem:[#allocation2 + $0xe0] sm:$0xff] %vm225, 0.0
      %256 = vst.msk [vmem:[#allocation2 + $0xe8] sm:$0x3] %vm228, 0.0
      %257 = vst.msk [vmem:[#allocation2 + $0xf0] sm:$0xff] %vm225, 0.0
      %258 = vst.msk [vmem:[#allocation2 + $0xf8] sm:$0xff] %vm225, 0.0
      %259 = vst.msk [vmem:[#allocation2 + $0x100] sm:$0x3] %vm228, 0.0
      %260 = vst.msk [vmem:[#allocation2 + $0x108] sm:$0xff] %vm225, 0.0
      %261 = vst.msk [vmem:[#allocation2 + $0x110] sm:$0xff] %vm225, 0.0
      %262 = vst.msk [vmem:[#allocation2 + $0x118] sm:$0x3] %vm228, 0.0
      %263 = vst.msk [vmem:[#allocation2 + $0x120] sm:$0xff] %vm225, 0.0
      %264 = vst.msk [vmem:[#allocation2 + $0x128] sm:$0xff] %vm225, 0.0
      %265 = vst.msk [vmem:[#allocation2 + $0x130] sm:$0x3] %vm228, 0.0
      %266 = vst.msk [vmem:[#allocation2 + $0x138] sm:$0xff] %vm225, 0.0
      %267 = vst.msk [vmem:[#allocation2 + $0x140] sm:$0xff] %vm225, 0.0
      %268 = vst.msk [vmem:[#allocation2 + $0x148] sm:$0x3] %vm228, 0.0
      %269 = vst.msk [vmem:[#allocation2 + $0x150] sm:$0xff] %vm225, 0.0
      %270 = vst.msk [vmem:[#allocation2 + $0x158] sm:$0xff] %vm225, 0.0
      %271 = vst.msk [vmem:[#allocation2 + $0x160] sm:$0x3] %vm228, 0.0
      %272 = vst.msk [vmem:[#allocation2 + $0x168] sm:$0xff] %vm225, 0.0
      %273 = vst.msk [vmem:[#allocation2 + $0x170] sm:$0xff] %vm225, 0.0
      %274 = vst.msk [vmem:[#allocation2 + $0x178] sm:$0x3] %vm228, 0.0
      %275 = vst.msk [vmem:[#allocation2 + $0x180] sm:$0xff] %vm225, 0.0
      %276 = vst.msk [vmem:[#allocation2 + $0x188] sm:$0xff] %vm225, 0.0
      %277 = vst.msk [vmem:[#allocation2 + $0x190] sm:$0x3] %vm228, 0.0
      %278 = vst.msk [vmem:[#allocation2 + $0x198] sm:$0xff] %vm225, 0.0
      %279 = vst.msk [vmem:[#allocation2 + $0x1a0] sm:$0xff] %vm225, 0.0
      %280 = vst.msk [vmem:[#allocation2 + $0x1a8] sm:$0x3] %vm228, 0.0
      %v281 = vld [vmem:[%s219] sm:$0xff]
      %v282 = vld [vmem:[%s219 + $0x8] sm:$0xff]
      %v283 = vld [vmem:[%s219 + $0x10] sm:$0xff]
      %v284 = vld [vmem:[%s219 + $0x18] sm:$0xff]
      %v285 = vld [vmem:[%s219 + $0x20] sm:$0xff]
      %v286 = vld [vmem:[%s219 + $0x28] sm:$0xff]
      %v287 = vld [vmem:[%s219 + $0x30] sm:$0xff]
      %v288 = vld [vmem:[%s219 + $0x38] sm:$0xff]
      %v289 = vld [vmem:[%s219 + $0x40] sm:$0xff]
      %v290 = vld [vmem:[%s219 + $0x48] sm:$0xff]
      %v291 = vld [vmem:[%s219 + $0x50] sm:$0xff]
      %v292 = vld [vmem:[%s219 + $0x58] sm:$0xff]
      %v293 = vld [vmem:[%s219 + $0x60] sm:$0xff]
      %v294 = vld [vmem:[%s219 + $0x68] sm:$0xff]
      %v295 = vld [vmem:[%s219 + $0x70] sm:$0xff]
      %v296 = vld [vmem:[%s219 + $0x78] sm:$0xff]
      %v297 = vld [vmem:[%s219 + $0x80] sm:$0xff]
      %v298 = vld [vmem:[%s219 + $0x88] sm:$0xff]
      %v299 = vld [vmem:[%s219 + $0x90] sm:$0xff]
      %v300 = vld [vmem:[%s219 + $0x98] sm:$0xff]
      %v301 = vld [vmem:[%s219 + $0xa0] sm:$0xff]
      %v302 = vld [vmem:[%s219 + $0xa8] sm:$0xff]
      %v303 = vld [vmem:[%s219 + $0xb0] sm:$0xff]
      %v304 = vld [vmem:[%s219 + $0xb8] sm:$0xff]
      %v305 = vld [vmem:[%s219 + $0xc0] sm:$0xff]
      %v306 = vld [vmem:[%s219 + $0xc8] sm:$0xff]
      %v307 = vld [vmem:[%s219 + $0xd0] sm:$0xff]
      %v308 = vld [vmem:[%s219 + $0xd8] sm:$0xff]
      %v309 = vld [vmem:[%s219 + $0xe0] sm:$0xff]
      %v310 = vld [vmem:[%s219 + $0xe8] sm:$0xff]
      %v311 = vld [vmem:[%s219 + $0xf0] sm:$0xff]
      %v312 = vld [vmem:[%s219 + $0xf8] sm:$0xff]
      %s313 = scalar_lea.vmem [#allocation2], 24
      %314 = vst.msk [vmem:[%s313 + $0x1] sm:$0xff] %vm225, %v281
      %315 = vst.msk [vmem:[%s313 + $0x9] sm:$0xff] %vm225, %v282
      %316 = vst.msk [vmem:[%s313 + $0x19] sm:$0xff] %vm225, %v283
      %317 = vst.msk [vmem:[%s313 + $0x21] sm:$0xff] %vm225, %v284
      %318 = vst.msk [vmem:[%s313 + $0x31] sm:$0xff] %vm225, %v285
      %319 = vst.msk [vmem:[%s313 + $0x39] sm:$0xff] %vm225, %v286
      %320 = vst.msk [vmem:[%s313 + $0x49] sm:$0xff] %vm225, %v287
      %321 = vst.msk [vmem:[%s313 + $0x51] sm:$0xff] %vm225, %v288
      %322 = vst.msk [vmem:[%s313 + $0x61] sm:$0xff] %vm225, %v289
      %323 = vst.msk [vmem:[%s313 + $0x69] sm:$0xff] %vm225, %v290
      %324 = vst.msk [vmem:[%s313 + $0x79] sm:$0xff] %vm225, %v291
      %325 = vst.msk [vmem:[%s313 + $0x81] sm:$0xff] %vm225, %v292
      %326 = vst.msk [vmem:[%s313 + $0x91] sm:$0xff] %vm225, %v293
      %327 = vst.msk [vmem:[%s313 + $0x99] sm:$0xff] %vm225, %v294
      %328 = vst.msk [vmem:[%s313 + $0xa9] sm:$0xff] %vm225, %v295
      %329 = vst.msk [vmem:[%s313 + $0xb1] sm:$0xff] %vm225, %v296
      %330 = vst.msk [vmem:[%s313 + $0xc1] sm:$0xff] %vm225, %v297
      %331 = vst.msk [vmem:[%s313 + $0xc9] sm:$0xff] %vm225, %v298
      %332 = vst.msk [vmem:[%s313 + $0xd9] sm:$0xff] %vm225, %v299
      %333 = vst.msk [vmem:[%s313 + $0xe1] sm:$0xff] %vm225, %v300
      %334 = vst.msk [vmem:[%s313 + $0xf1] sm:$0xff] %vm225, %v301
      %335 = vst.msk [vmem:[%s313 + $0xf9] sm:$0xff] %vm225, %v302
      %336 = vst.msk [vmem:[%s313 + $0x109] sm:$0xff] %vm225, %v303
      %337 = vst.msk [vmem:[%s313 + $0x111] sm:$0xff] %vm225, %v304
      %338 = vst.msk [vmem:[%s313 + $0x121] sm:$0xff] %vm225, %v305
      %339 = vst.msk [vmem:[%s313 + $0x129] sm:$0xff] %vm225, %v306
      %340 = vst.msk [vmem:[%s313 + $0x139] sm:$0xff] %vm225, %v307
      %341 = vst.msk [vmem:[%s313 + $0x141] sm:$0xff] %vm225, %v308
      %342 = vst.msk [vmem:[%s313 + $0x151] sm:$0xff] %vm225, %v309
      %343 = vst.msk [vmem:[%s313 + $0x159] sm:$0xff] %vm225, %v310
      %344 = vst.msk [vmem:[%s313 + $0x169] sm:$0xff] %vm225, %v311
      %345 = vst.msk [vmem:[%s313 + $0x171] sm:$0xff] %vm225, %v312
      %v346 = vld [vmem:[#allocation2] sm:$0xff]
      %v347 = vld [vmem:[#allocation2 + $0x8] sm:$0xff]
      %v348 = vld [vmem:[#allocation2 + $0x18] sm:$0xff]
      %v349 = vld [vmem:[#allocation2 + $0x20] sm:$0xff]
      %v350 = vld [vmem:[#allocation2 + $0x30] sm:$0xff]
      %v351 = vld [vmem:[#allocation2 + $0x38] sm:$0xff]
      %v352 = vld [vmem:[#allocation2 + $0x48] sm:$0xff]
      %v353 = vld [vmem:[#allocation2 + $0x50] sm:$0xff]
      %v354 = vld [vmem:[#allocation2 + $0x60] sm:$0xff]
      %v355 = vld [vmem:[#allocation2 + $0x68] sm:$0xff]
      %v356 = vld [vmem:[#allocation2 + $0x78] sm:$0xff]
      %v357 = vld [vmem:[#allocation2 + $0x80] sm:$0xff]
      %v358 = vld [vmem:[#allocation2 + $0x90] sm:$0xff]
      %v359 = vld [vmem:[#allocation2 + $0x98] sm:$0xff]
      %v360 = vld [vmem:[#allocation2 + $0xa8] sm:$0xff]
      %v361 = vld [vmem:[#allocation2 + $0xb0] sm:$0xff]
      %v362 = vld [vmem:[#allocation2 + $0xc0] sm:$0xff]
      %v363 = vld [vmem:[#allocation2 + $0xc8] sm:$0xff]
      %v364 = vld [vmem:[#allocation2 + $0xd8] sm:$0xff]
      %v365 = vld [vmem:[#allocation2 + $0xe0] sm:$0xff]
      %v366 = vld [vmem:[#allocation2 + $0xf0] sm:$0xff]
      %v367 = vld [vmem:[#allocation2 + $0xf8] sm:$0xff]
      %v368 = vld [vmem:[#allocation2 + $0x108] sm:$0xff]
      %v369 = vld [vmem:[#allocation2 + $0x110] sm:$0xff]
      %v370 = vld [vmem:[#allocation2 + $0x120] sm:$0xff]
      %v371 = vld [vmem:[#allocation2 + $0x128] sm:$0xff]
      %v372 = vld [vmem:[#allocation2 + $0x138] sm:$0xff]
      %v373 = vld [vmem:[#allocation2 + $0x140] sm:$0xff]
      %v374 = vld [vmem:[#allocation2 + $0x150] sm:$0xff]
      %v375 = vld [vmem:[#allocation2 + $0x158] sm:$0xff]
      %v376 = vld [vmem:[#allocation2 + $0x168] sm:$0xff]
      %v377 = vld [vmem:[#allocation2 + $0x170] sm:$0xff]
      %v378 = vld [vmem:[#allocation2 + $0x1] sm:$0xff]
      %v379 = vld [vmem:[#allocation2 + $0x9] sm:$0xff]
      %v380 = vld [vmem:[#allocation2 + $0x19] sm:$0xff]
      %v381 = vld [vmem:[#allocation2 + $0x21] sm:$0xff]
      %v382 = vld [vmem:[#allocation2 + $0x31] sm:$0xff]
      %v383 = vld [vmem:[#allocation2 + $0x39] sm:$0xff]
      %v384 = vld [vmem:[#allocation2 + $0x49] sm:$0xff]
      %v385 = vld [vmem:[#allocation2 + $0x51] sm:$0xff]
      %v386 = vld [vmem:[#allocation2 + $0x61] sm:$0xff]
      %v387 = vld [vmem:[#allocation2 + $0x69] sm:$0xff]
      %v388 = vld [vmem:[#allocation2 + $0x79] sm:$0xff]
      %v389 = vld [vmem:[#allocation2 + $0x81] sm:$0xff]
      %v390 = vld [vmem:[#allocation2 + $0x91] sm:$0xff]
      %v391 = vld [vmem:[#allocation2 + $0x99] sm:$0xff]
      %v392 = vld [vmem:[#allocation2 + $0xa9] sm:$0xff]
      %v393 = vld [vmem:[#allocation2 + $0xb1] sm:$0xff]
      %v394 = vld [vmem:[#allocation2 + $0xc1] sm:$0xff]
      %v395 = vld [vmem:[#allocation2 + $0xc9] sm:$0xff]
      %v396 = vld [vmem:[#allocation2 + $0xd9] sm:$0xff]
      %v397 = vld [vmem:[#allocation2 + $0xe1] sm:$0xff]
      %v398 = vld [vmem:[#allocation2 + $0xf1] sm:$0xff]
      %v399 = vld [vmem:[#allocation2 + $0xf9] sm:$0xff]
      %v400 = vld [vmem:[#allocation2 + $0x109] sm:$0xff]
      %v401 = vld [vmem:[#allocation2 + $0x111] sm:$0xff]
      %v402 = vld [vmem:[#allocation2 + $0x121] sm:$0xff]
      %v403 = vld [vmem:[#allocation2 + $0x129] sm:$0xff]
      %v404 = vld [vmem:[#allocation2 + $0x139] sm:$0xff]
      %v405 = vld [vmem:[#allocation2 + $0x141] sm:$0xff]
      %v406 = vld [vmem:[#allocation2 + $0x151] sm:$0xff]
      %v407 = vld [vmem:[#allocation2 + $0x159] sm:$0xff]
      %v408 = vld [vmem:[#allocation2 + $0x169] sm:$0xff]
      %v409 = vld [vmem:[#allocation2 + $0x171] sm:$0xff]
      %v410 = vld [vmem:[#allocation2 + $0x2] sm:$0xff]
      %v411 = vld [vmem:[#allocation2 + $0xa] sm:$0xff]
      %v412 = vld [vmem:[#allocation2 + $0x1a] sm:$0xff]
      %v413 = vld [vmem:[#allocation2 + $0x22] sm:$0xff]
      %v414 = vld [vmem:[#allocation2 + $0x32] sm:$0xff]
      %v415 = vld [vmem:[#allocation2 + $0x3a] sm:$0xff]
      %v416 = vld [vmem:[#allocation2 + $0x4a] sm:$0xff]
      %v417 = vld [vmem:[#allocation2 + $0x52] sm:$0xff]
      %v418 = vld [vmem:[#allocation2 + $0x62] sm:$0xff]
      %v419 = vld [vmem:[#allocation2 + $0x6a] sm:$0xff]
      %v420 = vld [vmem:[#allocation2 + $0x7a] sm:$0xff]
      %v421 = vld [vmem:[#allocation2 + $0x82] sm:$0xff]
      %v422 = vld [vmem:[#allocation2 + $0x92] sm:$0xff]
      %v423 = vld [vmem:[#allocation2 + $0x9a] sm:$0xff]
      %v424 = vld [vmem:[#allocation2 + $0xaa] sm:$0xff]
      %v425 = vld [vmem:[#allocation2 + $0xb2] sm:$0xff]
      %v426 = vld [vmem:[#allocation2 + $0xc2] sm:$0xff]
      %v427 = vld [vmem:[#allocation2 + $0xca] sm:$0xff]
      %v428 = vld [vmem:[#allocation2 + $0xda] sm:$0xff]
      %v429 = vld [vmem:[#allocation2 + $0xe2] sm:$0xff]
      %v430 = vld [vmem:[#allocation2 + $0xf2] sm:$0xff]
      %v431 = vld [vmem:[#allocation2 + $0xfa] sm:$0xff]
      %v432 = vld [vmem:[#allocation2 + $0x10a] sm:$0xff]
      %v433 = vld [vmem:[#allocation2 + $0x112] sm:$0xff]
      %v434 = vld [vmem:[#allocation2 + $0x122] sm:$0xff]
      %v435 = vld [vmem:[#allocation2 + $0x12a] sm:$0xff]
      %v436 = vld [vmem:[#allocation2 + $0x13a] sm:$0xff]
      %v437 = vld [vmem:[#allocation2 + $0x142] sm:$0xff]
      %v438 = vld [vmem:[#allocation2 + $0x152] sm:$0xff]
      %v439 = vld [vmem:[#allocation2 + $0x15a] sm:$0xff]
      %v440 = vld [vmem:[#allocation2 + $0x16a] sm:$0xff]
      %v441 = vld [vmem:[#allocation2 + $0x172] sm:$0xff]
      %v442 = vld [vmem:[%s313] sm:$0xff]
      %v443 = vld [vmem:[%s313 + $0x8] sm:$0xff]
      %v444 = vld [vmem:[%s313 + $0x18] sm:$0xff]
      %v445 = vld [vmem:[%s313 + $0x20] sm:$0xff]
      %v446 = vld [vmem:[%s313 + $0x30] sm:$0xff]
      %v447 = vld [vmem:[%s313 + $0x38] sm:$0xff]
      %v448 = vld [vmem:[%s313 + $0x48] sm:$0xff]
      %v449 = vld [vmem:[%s313 + $0x50] sm:$0xff]
      %v450 = vld [vmem:[%s313 + $0x60] sm:$0xff]
      %v451 = vld [vmem:[%s313 + $0x68] sm:$0xff]
      %v452 = vld [vmem:[%s313 + $0x78] sm:$0xff]
      %v453 = vld [vmem:[%s313 + $0x80] sm:$0xff]
      %v454 = vld [vmem:[%s313 + $0x90] sm:$0xff]
      %v455 = vld [vmem:[%s313 + $0x98] sm:$0xff]
      %v456 = vld [vmem:[%s313 + $0xa8] sm:$0xff]
      %v457 = vld [vmem:[%s313 + $0xb0] sm:$0xff]
      %v458 = vld [vmem:[%s313 + $0xc0] sm:$0xff]
      %v459 = vld [vmem:[%s313 + $0xc8] sm:$0xff]
      %v460 = vld [vmem:[%s313 + $0xd8] sm:$0xff]
      %v461 = vld [vmem:[%s313 + $0xe0] sm:$0xff]
      %v462 = vld [vmem:[%s313 + $0xf0] sm:$0xff]
      %v463 = vld [vmem:[%s313 + $0xf8] sm:$0xff]
      %v464 = vld [vmem:[%s313 + $0x108] sm:$0xff]
      %v465 = vld [vmem:[%s313 + $0x110] sm:$0xff]
      %v466 = vld [vmem:[%s313 + $0x120] sm:$0xff]
      %v467 = vld [vmem:[%s313 + $0x128] sm:$0xff]
      %v468 = vld [vmem:[%s313 + $0x138] sm:$0xff]
      %v469 = vld [vmem:[%s313 + $0x140] sm:$0xff]
      %v470 = vld [vmem:[%s313 + $0x150] sm:$0xff]
      %v471 = vld [vmem:[%s313 + $0x158] sm:$0xff]
      %v472 = vld [vmem:[%s313 + $0x168] sm:$0xff]
      %v473 = vld [vmem:[%s313 + $0x170] sm:$0xff]
      %v474 = vld [vmem:[%s313 + $0x1] sm:$0xff]
      %v475 = vld [vmem:[%s313 + $0x9] sm:$0xff]
      %v476 = vld [vmem:[%s313 + $0x19] sm:$0xff]
      %v477 = vld [vmem:[%s313 + $0x21] sm:$0xff]
      %v478 = vld [vmem:[%s313 + $0x31] sm:$0xff]
      %v479 = vld [vmem:[%s313 + $0x39] sm:$0xff]
      %v480 = vld [vmem:[%s313 + $0x49] sm:$0xff]
      %v481 = vld [vmem:[%s313 + $0x51] sm:$0xff]
      %v482 = vld [vmem:[%s313 + $0x61] sm:$0xff]
      %v483 = vld [vmem:[%s313 + $0x69] sm:$0xff]
      %v484 = vld [vmem:[%s313 + $0x79] sm:$0xff]
      %v485 = vld [vmem:[%s313 + $0x81] sm:$0xff]
      %v486 = vld [vmem:[%s313 + $0x91] sm:$0xff]
      %v487 = vld [vmem:[%s313 + $0x99] sm:$0xff]
      %v488 = vld [vmem:[%s313 + $0xa9] sm:$0xff]
      %v489 = vld [vmem:[%s313 + $0xb1] sm:$0xff]
      %v490 = vld [vmem:[%s313 + $0xc1] sm:$0xff]
      %v491 = vld [vmem:[%s313 + $0xc9] sm:$0xff]
      %v492 = vld [vmem:[%s313 + $0xd9] sm:$0xff]
      %v493 = vld [vmem:[%s313 + $0xe1] sm:$0xff]
      %v494 = vld [vmem:[%s313 + $0xf1] sm:$0xff]
      %v495 = vld [vmem:[%s313 + $0xf9] sm:$0xff]
      %v496 = vld [vmem:[%s313 + $0x109] sm:$0xff]
      %v497 = vld [vmem:[%s313 + $0x111] sm:$0xff]
      %v498 = vld [vmem:[%s313 + $0x121] sm:$0xff]
      %v499 = vld [vmem:[%s313 + $0x129] sm:$0xff]
      %v500 = vld [vmem:[%s313 + $0x139] sm:$0xff]
      %v501 = vld [vmem:[%s313 + $0x141] sm:$0xff]
      %v502 = vld [vmem:[%s313 + $0x151] sm:$0xff]
      %v503 = vld [vmem:[%s313 + $0x159] sm:$0xff]
      %v504 = vld [vmem:[%s313 + $0x169] sm:$0xff]
      %v505 = vld [vmem:[%s313 + $0x171] sm:$0xff]
      %v506 = vld [vmem:[%s313 + $0x2] sm:$0xff]
      %v507 = vld [vmem:[%s313 + $0xa] sm:$0xff]
      %v508 = vld [vmem:[%s313 + $0x1a] sm:$0xff]
      %v509 = vld [vmem:[%s313 + $0x22] sm:$0xff]
      %v510 = vld [vmem:[%s313 + $0x32] sm:$0xff]
      %v511 = vld [vmem:[%s313 + $0x3a] sm:$0xff]
      %v512 = vld [vmem:[%s313 + $0x4a] sm:$0xff]
      %v513 = vld [vmem:[%s313 + $0x52] sm:$0xff]
      %v514 = vld [vmem:[%s313 + $0x62] sm:$0xff]
      %v515 = vld [vmem:[%s313 + $0x6a] sm:$0xff]
      %v516 = vld [vmem:[%s313 + $0x7a] sm:$0xff]
      %v517 = vld [vmem:[%s313 + $0x82] sm:$0xff]
      %v518 = vld [vmem:[%s313 + $0x92] sm:$0xff]
      %v519 = vld [vmem:[%s313 + $0x9a] sm:$0xff]
      %v520 = vld [vmem:[%s313 + $0xaa] sm:$0xff]
      %v521 = vld [vmem:[%s313 + $0xb2] sm:$0xff]
      %v522 = vld [vmem:[%s313 + $0xc2] sm:$0xff]
      %v523 = vld [vmem:[%s313 + $0xca] sm:$0xff]
      %v524 = vld [vmem:[%s313 + $0xda] sm:$0xff]
      %v525 = vld [vmem:[%s313 + $0xe2] sm:$0xff]
      %v526 = vld [vmem:[%s313 + $0xf2] sm:$0xff]
      %v527 = vld [vmem:[%s313 + $0xfa] sm:$0xff]
      %v528 = vld [vmem:[%s313 + $0x10a] sm:$0xff]
      %v529 = vld [vmem:[%s313 + $0x112] sm:$0xff]
      %v530 = vld [vmem:[%s313 + $0x122] sm:$0xff]
      %v531 = vld [vmem:[%s313 + $0x12a] sm:$0xff]
      %v532 = vld [vmem:[%s313 + $0x13a] sm:$0xff]
      %v533 = vld [vmem:[%s313 + $0x142] sm:$0xff]
      %v534 = vld [vmem:[%s313 + $0x152] sm:$0xff]
      %v535 = vld [vmem:[%s313 + $0x15a] sm:$0xff]
      %v536 = vld [vmem:[%s313 + $0x16a] sm:$0xff]
      %v537 = vld [vmem:[%s313 + $0x172] sm:$0xff]
      %s538 = scalar_lea.vmem [#allocation2], 48
      %v539 = vld [vmem:[%s538] sm:$0xff]
      %v540 = vld [vmem:[%s538 + $0x8] sm:$0xff]
      %v541 = vld [vmem:[%s538 + $0x18] sm:$0xff]
      %v542 = vld [vmem:[%s538 + $0x20] sm:$0xff]
      %v543 = vld [vmem:[%s538 + $0x30] sm:$0xff]
      %v544 = vld [vmem:[%s538 + $0x38] sm:$0xff]
      %v545 = vld [vmem:[%s538 + $0x48] sm:$0xff]
      %v546 = vld [vmem:[%s538 + $0x50] sm:$0xff]
      %v547 = vld [vmem:[%s538 + $0x60] sm:$0xff]
      %v548 = vld [vmem:[%s538 + $0x68] sm:$0xff]
      %v549 = vld [vmem:[%s538 + $0x78] sm:$0xff]
      %v550 = vld [vmem:[%s538 + $0x80] sm:$0xff]
      %v551 = vld [vmem:[%s538 + $0x90] sm:$0xff]
      %v552 = vld [vmem:[%s538 + $0x98] sm:$0xff]
      %v553 = vld [vmem:[%s538 + $0xa8] sm:$0xff]
      %v554 = vld [vmem:[%s538 + $0xb0] sm:$0xff]
      %v555 = vld [vmem:[%s538 + $0xc0] sm:$0xff]
      %v556 = vld [vmem:[%s538 + $0xc8] sm:$0xff]
      %v557 = vld [vmem:[%s538 + $0xd8] sm:$0xff]
      %v558 = vld [vmem:[%s538 + $0xe0] sm:$0xff]
      %v559 = vld [vmem:[%s538 + $0xf0] sm:$0xff]
      %v560 = vld [vmem:[%s538 + $0xf8] sm:$0xff]
      %v561 = vld [vmem:[%s538 + $0x108] sm:$0xff]
      %v562 = vld [vmem:[%s538 + $0x110] sm:$0xff]
      %v563 = vld [vmem:[%s538 + $0x120] sm:$0xff]
      %v564 = vld [vmem:[%s538 + $0x128] sm:$0xff]
      %v565 = vld [vmem:[%s538 + $0x138] sm:$0xff]
      %v566 = vld [vmem:[%s538 + $0x140] sm:$0xff]
      %v567 = vld [vmem:[%s538 + $0x150] sm:$0xff]
      %v568 = vld [vmem:[%s538 + $0x158] sm:$0xff]
      %v569 = vld [vmem:[%s538 + $0x168] sm:$0xff]
      %v570 = vld [vmem:[%s538 + $0x170] sm:$0xff]
      %v571 = vld [vmem:[%s538 + $0x1] sm:$0xff]
      %v572 = vld [vmem:[%s538 + $0x9] sm:$0xff]
      %v573 = vld [vmem:[%s538 + $0x19] sm:$0xff]
      %v574 = vld [vmem:[%s538 + $0x21] sm:$0xff]
      %v575 = vld [vmem:[%s538 + $0x31] sm:$0xff]
      %v576 = vld [vmem:[%s538 + $0x39] sm:$0xff]
      %v577 = vld [vmem:[%s538 + $0x49] sm:$0xff]
      %v578 = vld [vmem:[%s538 + $0x51] sm:$0xff]
      %v579 = vld [vmem:[%s538 + $0x61] sm:$0xff]
      %v580 = vld [vmem:[%s538 + $0x69] sm:$0xff]
      %v581 = vld [vmem:[%s538 + $0x79] sm:$0xff]
      %v582 = vld [vmem:[%s538 + $0x81] sm:$0xff]
      %v583 = vld [vmem:[%s538 + $0x91] sm:$0xff]
      %v584 = vld [vmem:[%s538 + $0x99] sm:$0xff]
      %v585 = vld [vmem:[%s538 + $0xa9] sm:$0xff]
      %v586 = vld [vmem:[%s538 + $0xb1] sm:$0xff]
      %v587 = vld [vmem:[%s538 + $0xc1] sm:$0xff]
      %v588 = vld [vmem:[%s538 + $0xc9] sm:$0xff]
      %v589 = vld [vmem:[%s538 + $0xd9] sm:$0xff]
      %v590 = vld [vmem:[%s538 + $0xe1] sm:$0xff]
      %v591 = vld [vmem:[%s538 + $0xf1] sm:$0xff]
      %v592 = vld [vmem:[%s538 + $0xf9] sm:$0xff]
      %v593 = vld [vmem:[%s538 + $0x109] sm:$0xff]
      %v594 = vld [vmem:[%s538 + $0x111] sm:$0xff]
      %v595 = vld [vmem:[%s538 + $0x121] sm:$0xff]
      %v596 = vld [vmem:[%s538 + $0x129] sm:$0xff]
      %v597 = vld [vmem:[%s538 + $0x139] sm:$0xff]
      %v598 = vld [vmem:[%s538 + $0x141] sm:$0xff]
      %v599 = vld [vmem:[%s538 + $0x151] sm:$0xff]
      %v600 = vld [vmem:[%s538 + $0x159] sm:$0xff]
      %v601 = vld [vmem:[%s538 + $0x169] sm:$0xff]
      %v602 = vld [vmem:[%s538 + $0x171] sm:$0xff]
      %v603 = vld [vmem:[%s538 + $0x2] sm:$0xff]
      %v604 = vld [vmem:[%s538 + $0xa] sm:$0xff]
      %v605 = vld [vmem:[%s538 + $0x1a] sm:$0xff]
      %v606 = vld [vmem:[%s538 + $0x22] sm:$0xff]
      %v607 = vld [vmem:[%s538 + $0x32] sm:$0xff]
      %v608 = vld [vmem:[%s538 + $0x3a] sm:$0xff]
      %v609 = vld [vmem:[%s538 + $0x4a] sm:$0xff]
      %v610 = vld [vmem:[%s538 + $0x52] sm:$0xff]
      %v611 = vld [vmem:[%s538 + $0x62] sm:$0xff]
      %v612 = vld [vmem:[%s538 + $0x6a] sm:$0xff]
      %v613 = vld [vmem:[%s538 + $0x7a] sm:$0xff]
      %v614 = vld [vmem:[%s538 + $0x82] sm:$0xff]
      %v615 = vld [vmem:[%s538 + $0x92] sm:$0xff]
      %v616 = vld [vmem:[%s538 + $0x9a] sm:$0xff]
      %v617 = vld [vmem:[%s538 + $0xaa] sm:$0xff]
      %v618 = vld [vmem:[%s538 + $0xb2] sm:$0xff]
      %v619 = vld [vmem:[%s538 + $0xc2] sm:$0xff]
      %v620 = vld [vmem:[%s538 + $0xca] sm:$0xff]
      %v621 = vld [vmem:[%s538 + $0xda] sm:$0xff]
      %v622 = vld [vmem:[%s538 + $0xe2] sm:$0xff]
      %v623 = vld [vmem:[%s538 + $0xf2] sm:$0xff]
      %v624 = vld [vmem:[%s538 + $0xfa] sm:$0xff]
      %v625 = vld [vmem:[%s538 + $0x10a] sm:$0xff]
      %v626 = vld [vmem:[%s538 + $0x112] sm:$0xff]
      %v627 = vld [vmem:[%s538 + $0x122] sm:$0xff]
      %v628 = vld [vmem:[%s538 + $0x12a] sm:$0xff]
      %v629 = vld [vmem:[%s538 + $0x13a] sm:$0xff]
      %v630 = vld [vmem:[%s538 + $0x142] sm:$0xff]
      %v631 = vld [vmem:[%s538 + $0x152] sm:$0xff]
      %v632 = vld [vmem:[%s538 + $0x15a] sm:$0xff]
      %v633 = vld [vmem:[%s538 + $0x16a] sm:$0xff]
      %v634 = vld [vmem:[%s538 + $0x172] sm:$0xff]
      %667 = vrot.lane.b32.xlu0 %v378, 4
      %v668 = vpop.permute.xlu0 %667
      %669 = vrot.lane.b32.xlu0 %v379, 4
      %v670 = vpop.permute.xlu0 %669
      %671 = vrot.lane.b32.xlu0 %v380, 4
      %v672 = vpop.permute.xlu0 %671
      %673 = vrot.lane.b32.xlu0 %v381, 4
      %v674 = vpop.permute.xlu0 %673
      %675 = vrot.lane.b32.xlu0 %v382, 4
      %v676 = vpop.permute.xlu0 %675
      %677 = vrot.lane.b32.xlu0 %v383, 4
      %v678 = vpop.permute.xlu0 %677
      %679 = vrot.lane.b32.xlu0 %v384, 4
      %v680 = vpop.permute.xlu0 %679
      %681 = vrot.lane.b32.xlu0 %v385, 4
      %v682 = vpop.permute.xlu0 %681
      %683 = vrot.lane.b32.xlu0 %v386, 4
      %v684 = vpop.permute.xlu0 %683
      %685 = vrot.lane.b32.xlu0 %v387, 4
      %v686 = vpop.permute.xlu0 %685
      %687 = vrot.lane.b32.xlu0 %v388, 4
      %v688 = vpop.permute.xlu0 %687
      %689 = vrot.lane.b32.xlu0 %v389, 4
      %v690 = vpop.permute.xlu0 %689
      %691 = vrot.lane.b32.xlu0 %v390, 4
      %v692 = vpop.permute.xlu0 %691
      %693 = vrot.lane.b32.xlu0 %v391, 4
      %v694 = vpop.permute.xlu0 %693
      %695 = vrot.lane.b32.xlu0 %v392, 4
      %v696 = vpop.permute.xlu0 %695
      %697 = vrot.lane.b32.xlu0 %v393, 4
      %v698 = vpop.permute.xlu0 %697
      %699 = vrot.lane.b32.xlu0 %v394, 4
      %v700 = vpop.permute.xlu0 %699
      %701 = vrot.lane.b32.xlu0 %v395, 4
      %v702 = vpop.permute.xlu0 %701
      %703 = vrot.lane.b32.xlu0 %v396, 4
      %v704 = vpop.permute.xlu0 %703
      %705 = vrot.lane.b32.xlu0 %v397, 4
      %v706 = vpop.permute.xlu0 %705
      %707 = vrot.lane.b32.xlu0 %v398, 4
      %v708 = vpop.permute.xlu0 %707
      %709 = vrot.lane.b32.xlu0 %v399, 4
      %v710 = vpop.permute.xlu0 %709
      %711 = vrot.lane.b32.xlu0 %v400, 4
      %v712 = vpop.permute.xlu0 %711
      %713 = vrot.lane.b32.xlu0 %v401, 4
      %v714 = vpop.permute.xlu0 %713
      %715 = vrot.lane.b32.xlu0 %v402, 4
      %v716 = vpop.permute.xlu0 %715
      %717 = vrot.lane.b32.xlu0 %v403, 4
      %v718 = vpop.permute.xlu0 %717
      %719 = vrot.lane.b32.xlu0 %v404, 4
      %v720 = vpop.permute.xlu0 %719
      %721 = vrot.lane.b32.xlu0 %v405, 4
      %v722 = vpop.permute.xlu0 %721
      %723 = vrot.lane.b32.xlu0 %v406, 4
      %v724 = vpop.permute.xlu0 %723
      %725 = vrot.lane.b32.xlu0 %v407, 4
      %v726 = vpop.permute.xlu0 %725
      %727 = vrot.lane.b32.xlu0 %v408, 4
      %v728 = vpop.permute.xlu0 %727
      %729 = vrot.lane.b32.xlu0 %v409, 4
      %v730 = vpop.permute.xlu0 %729
      %795 = vrot.lane.b32.xlu0 %v410, 8
      %v796 = vpop.permute.xlu0 %795
      %797 = vrot.lane.b32.xlu0 %v411, 8
      %v798 = vpop.permute.xlu0 %797
      %799 = vrot.lane.b32.xlu0 %v412, 8
      %v800 = vpop.permute.xlu0 %799
      %801 = vrot.lane.b32.xlu0 %v413, 8
      %v802 = vpop.permute.xlu0 %801
      %803 = vrot.lane.b32.xlu0 %v414, 8
      %v804 = vpop.permute.xlu0 %803
      %805 = vrot.lane.b32.xlu0 %v415, 8
      %v806 = vpop.permute.xlu0 %805
      %807 = vrot.lane.b32.xlu0 %v416, 8
      %v808 = vpop.permute.xlu0 %807
      %809 = vrot.lane.b32.xlu0 %v417, 8
      %v810 = vpop.permute.xlu0 %809
      %811 = vrot.lane.b32.xlu0 %v418, 8
      %v812 = vpop.permute.xlu0 %811
      %813 = vrot.lane.b32.xlu0 %v419, 8
      %v814 = vpop.permute.xlu0 %813
      %815 = vrot.lane.b32.xlu0 %v420, 8
      %v816 = vpop.permute.xlu0 %815
      %817 = vrot.lane.b32.xlu0 %v421, 8
      %v818 = vpop.permute.xlu0 %817
      %819 = vrot.lane.b32.xlu0 %v422, 8
      %v820 = vpop.permute.xlu0 %819
      %821 = vrot.lane.b32.xlu0 %v423, 8
      %v822 = vpop.permute.xlu0 %821
      %823 = vrot.lane.b32.xlu0 %v424, 8
      %v824 = vpop.permute.xlu0 %823
      %825 = vrot.lane.b32.xlu0 %v425, 8
      %v826 = vpop.permute.xlu0 %825
      %827 = vrot.lane.b32.xlu0 %v426, 8
      %v828 = vpop.permute.xlu0 %827
      %829 = vrot.lane.b32.xlu0 %v427, 8
      %v830 = vpop.permute.xlu0 %829
      %831 = vrot.lane.b32.xlu0 %v428, 8
      %v832 = vpop.permute.xlu0 %831
      %833 = vrot.lane.b32.xlu0 %v429, 8
      %v834 = vpop.permute.xlu0 %833
      %835 = vrot.lane.b32.xlu0 %v430, 8
      %v836 = vpop.permute.xlu0 %835
      %837 = vrot.lane.b32.xlu0 %v431, 8
      %v838 = vpop.permute.xlu0 %837
      %839 = vrot.lane.b32.xlu0 %v432, 8
      %v840 = vpop.permute.xlu0 %839
      %841 = vrot.lane.b32.xlu0 %v433, 8
      %v842 = vpop.permute.xlu0 %841
      %843 = vrot.lane.b32.xlu0 %v434, 8
      %v844 = vpop.permute.xlu0 %843
      %845 = vrot.lane.b32.xlu0 %v435, 8
      %v846 = vpop.permute.xlu0 %845
      %847 = vrot.lane.b32.xlu0 %v436, 8
      %v848 = vpop.permute.xlu0 %847
      %849 = vrot.lane.b32.xlu0 %v437, 8
      %v850 = vpop.permute.xlu0 %849
      %851 = vrot.lane.b32.xlu0 %v438, 8
      %v852 = vpop.permute.xlu0 %851
      %853 = vrot.lane.b32.xlu0 %v439, 8
      %v854 = vpop.permute.xlu0 %853
      %855 = vrot.lane.b32.xlu0 %v440, 8
      %v856 = vpop.permute.xlu0 %855
      %857 = vrot.lane.b32.xlu0 %v441, 8
      %v858 = vpop.permute.xlu0 %857
      %923 = vrot.lane.b32.xlu0 %v442, 12
      %v924 = vpop.permute.xlu0 %923
      %925 = vrot.lane.b32.xlu0 %v443, 12
      %v926 = vpop.permute.xlu0 %925
      %927 = vrot.lane.b32.xlu0 %v444, 12
      %v928 = vpop.permute.xlu0 %927
      %929 = vrot.lane.b32.xlu0 %v445, 12
      %v930 = vpop.permute.xlu0 %929
      %931 = vrot.lane.b32.xlu0 %v446, 12
      %v932 = vpop.permute.xlu0 %931
      %933 = vrot.lane.b32.xlu0 %v447, 12
      %v934 = vpop.permute.xlu0 %933
      %935 = vrot.lane.b32.xlu0 %v448, 12
      %v936 = vpop.permute.xlu0 %935
      %937 = vrot.lane.b32.xlu0 %v449, 12
      %v938 = vpop.permute.xlu0 %937
      %939 = vrot.lane.b32.xlu0 %v450, 12
      %v940 = vpop.permute.xlu0 %939
      %941 = vrot.lane.b32.xlu0 %v451, 12
      %v942 = vpop.permute.xlu0 %941
      %943 = vrot.lane.b32.xlu0 %v452, 12
      %v944 = vpop.permute.xlu0 %943
      %945 = vrot.lane.b32.xlu0 %v453, 12
      %v946 = vpop.permute.xlu0 %945
      %947 = vrot.lane.b32.xlu0 %v454, 12
      %v948 = vpop.permute.xlu0 %947
      %949 = vrot.lane.b32.xlu0 %v455, 12
      %v950 = vpop.permute.xlu0 %949
      %951 = vrot.lane.b32.xlu0 %v456, 12
      %v952 = vpop.permute.xlu0 %951
      %953 = vrot.lane.b32.xlu0 %v457, 12
      %v954 = vpop.permute.xlu0 %953
      %955 = vrot.lane.b32.xlu0 %v458, 12
      %v956 = vpop.permute.xlu0 %955
      %957 = vrot.lane.b32.xlu0 %v459, 12
      %v958 = vpop.permute.xlu0 %957
      %959 = vrot.lane.b32.xlu0 %v460, 12
      %v960 = vpop.permute.xlu0 %959
      %961 = vrot.lane.b32.xlu0 %v461, 12
      %v962 = vpop.permute.xlu0 %961
      %963 = vrot.lane.b32.xlu0 %v462, 12
      %v964 = vpop.permute.xlu0 %963
      %965 = vrot.lane.b32.xlu0 %v463, 12
      %v966 = vpop.permute.xlu0 %965
      %967 = vrot.lane.b32.xlu0 %v464, 12
      %v968 = vpop.permute.xlu0 %967
      %969 = vrot.lane.b32.xlu0 %v465, 12
      %v970 = vpop.permute.xlu0 %969
      %971 = vrot.lane.b32.xlu0 %v466, 12
      %v972 = vpop.permute.xlu0 %971
      %973 = vrot.lane.b32.xlu0 %v467, 12
      %v974 = vpop.permute.xlu0 %973
      %975 = vrot.lane.b32.xlu0 %v468, 12
      %v976 = vpop.permute.xlu0 %975
      %977 = vrot.lane.b32.xlu0 %v469, 12
      %v978 = vpop.permute.xlu0 %977
      %979 = vrot.lane.b32.xlu0 %v470, 12
      %v980 = vpop.permute.xlu0 %979
      %981 = vrot.lane.b32.xlu0 %v471, 12
      %v982 = vpop.permute.xlu0 %981
      %983 = vrot.lane.b32.xlu0 %v472, 12
      %v984 = vpop.permute.xlu0 %983
      %985 = vrot.lane.b32.xlu0 %v473, 12
      %v986 = vpop.permute.xlu0 %985
      %1051 = vrot.lane.b32.xlu0 %v474, 16
      %v1052 = vpop.permute.xlu0 %1051
      %1053 = vrot.lane.b32.xlu0 %v475, 16
      %v1054 = vpop.permute.xlu0 %1053
      %1055 = vrot.lane.b32.xlu0 %v476, 16
      %v1056 = vpop.permute.xlu0 %1055
      %1057 = vrot.lane.b32.xlu0 %v477, 16
      %v1058 = vpop.permute.xlu0 %1057
      %1059 = vrot.lane.b32.xlu0 %v478, 16
      %v1060 = vpop.permute.xlu0 %1059
      %1061 = vrot.lane.b32.xlu0 %v479, 16
      %v1062 = vpop.permute.xlu0 %1061
      %1063 = vrot.lane.b32.xlu0 %v480, 16
      %v1064 = vpop.permute.xlu0 %1063
      %1065 = vrot.lane.b32.xlu0 %v481, 16
      %v1066 = vpop.permute.xlu0 %1065
      %1067 = vrot.lane.b32.xlu0 %v482, 16
      %v1068 = vpop.permute.xlu0 %1067
      %1069 = vrot.lane.b32.xlu0 %v483, 16
      %v1070 = vpop.permute.xlu0 %1069
      %1071 = vrot.lane.b32.xlu0 %v484, 16
      %v1072 = vpop.permute.xlu0 %1071
      %1073 = vrot.lane.b32.xlu0 %v485, 16
      %v1074 = vpop.permute.xlu0 %1073
      %1075 = vrot.lane.b32.xlu0 %v486, 16
      %v1076 = vpop.permute.xlu0 %1075
      %1077 = vrot.lane.b32.xlu0 %v487, 16
      %v1078 = vpop.permute.xlu0 %1077
      %1079 = vrot.lane.b32.xlu0 %v488, 16
      %v1080 = vpop.permute.xlu0 %1079
      %1081 = vrot.lane.b32.xlu0 %v489, 16
      %v1082 = vpop.permute.xlu0 %1081
      %1083 = vrot.lane.b32.xlu0 %v490, 16
      %v1084 = vpop.permute.xlu0 %1083
      %1085 = vrot.lane.b32.xlu0 %v491, 16
      %v1086 = vpop.permute.xlu0 %1085
      %1087 = vrot.lane.b32.xlu0 %v492, 16
      %v1088 = vpop.permute.xlu0 %1087
      %1089 = vrot.lane.b32.xlu0 %v493, 16
      %v1090 = vpop.permute.xlu0 %1089
      %1091 = vrot.lane.b32.xlu0 %v494, 16
      %v1092 = vpop.permute.xlu0 %1091
      %1093 = vrot.lane.b32.xlu0 %v495, 16
      %v1094 = vpop.permute.xlu0 %1093
      %1095 = vrot.lane.b32.xlu0 %v496, 16
      %v1096 = vpop.permute.xlu0 %1095
      %1097 = vrot.lane.b32.xlu0 %v497, 16
      %v1098 = vpop.permute.xlu0 %1097
      %1099 = vrot.lane.b32.xlu0 %v498, 16
      %v1100 = vpop.permute.xlu0 %1099
      %1101 = vrot.lane.b32.xlu0 %v499, 16
      %v1102 = vpop.permute.xlu0 %1101
      %1103 = vrot.lane.b32.xlu0 %v500, 16
      %v1104 = vpop.permute.xlu0 %1103
      %1105 = vrot.lane.b32.xlu0 %v501, 16
      %v1106 = vpop.permute.xlu0 %1105
      %1107 = vrot.lane.b32.xlu0 %v502, 16
      %v1108 = vpop.permute.xlu0 %1107
      %1109 = vrot.lane.b32.xlu0 %v503, 16
      %v1110 = vpop.permute.xlu0 %1109
      %1111 = vrot.lane.b32.xlu0 %v504, 16
      %v1112 = vpop.permute.xlu0 %1111
      %1113 = vrot.lane.b32.xlu0 %v505, 16
      %v1114 = vpop.permute.xlu0 %1113
      %1179 = vrot.lane.b32.xlu0 %v506, 20
      %v1180 = vpop.permute.xlu0 %1179
      %1181 = vrot.lane.b32.xlu0 %v507, 20
      %v1182 = vpop.permute.xlu0 %1181
      %1183 = vrot.lane.b32.xlu0 %v508, 20
      %v1184 = vpop.permute.xlu0 %1183
      %1185 = vrot.lane.b32.xlu0 %v509, 20
      %v1186 = vpop.permute.xlu0 %1185
      %1187 = vrot.lane.b32.xlu0 %v510, 20
      %v1188 = vpop.permute.xlu0 %1187
      %1189 = vrot.lane.b32.xlu0 %v511, 20
      %v1190 = vpop.permute.xlu0 %1189
      %1191 = vrot.lane.b32.xlu0 %v512, 20
      %v1192 = vpop.permute.xlu0 %1191
      %1193 = vrot.lane.b32.xlu0 %v513, 20
      %v1194 = vpop.permute.xlu0 %1193
      %1195 = vrot.lane.b32.xlu0 %v514, 20
      %v1196 = vpop.permute.xlu0 %1195
      %1197 = vrot.lane.b32.xlu0 %v515, 20
      %v1198 = vpop.permute.xlu0 %1197
      %1199 = vrot.lane.b32.xlu0 %v516, 20
      %v1200 = vpop.permute.xlu0 %1199
      %1201 = vrot.lane.b32.xlu0 %v517, 20
      %v1202 = vpop.permute.xlu0 %1201
      %1203 = vrot.lane.b32.xlu0 %v518, 20
      %v1204 = vpop.permute.xlu0 %1203
      %1205 = vrot.lane.b32.xlu0 %v519, 20
      %v1206 = vpop.permute.xlu0 %1205
      %1207 = vrot.lane.b32.xlu0 %v520, 20
      %v1208 = vpop.permute.xlu0 %1207
      %1209 = vrot.lane.b32.xlu0 %v521, 20
      %v1210 = vpop.permute.xlu0 %1209
      %1211 = vrot.lane.b32.xlu0 %v522, 20
      %v1212 = vpop.permute.xlu0 %1211
      %1213 = vrot.lane.b32.xlu0 %v523, 20
      %v1214 = vpop.permute.xlu0 %1213
      %1215 = vrot.lane.b32.xlu0 %v524, 20
      %v1216 = vpop.permute.xlu0 %1215
      %1217 = vrot.lane.b32.xlu0 %v525, 20
      %v1218 = vpop.permute.xlu0 %1217
      %1219 = vrot.lane.b32.xlu0 %v526, 20
      %v1220 = vpop.permute.xlu0 %1219
      %1221 = vrot.lane.b32.xlu0 %v527, 20
      %v1222 = vpop.permute.xlu0 %1221
      %1223 = vrot.lane.b32.xlu0 %v528, 20
      %v1224 = vpop.permute.xlu0 %1223
      %1225 = vrot.lane.b32.xlu0 %v529, 20
      %v1226 = vpop.permute.xlu0 %1225
      %1227 = vrot.lane.b32.xlu0 %v530, 20
      %v1228 = vpop.permute.xlu0 %1227
      %1229 = vrot.lane.b32.xlu0 %v531, 20
      %v1230 = vpop.permute.xlu0 %1229
      %1231 = vrot.lane.b32.xlu0 %v532, 20
      %v1232 = vpop.permute.xlu0 %1231
      %1233 = vrot.lane.b32.xlu0 %v533, 20
      %v1234 = vpop.permute.xlu0 %1233
      %1235 = vrot.lane.b32.xlu0 %v534, 20
      %v1236 = vpop.permute.xlu0 %1235
      %1237 = vrot.lane.b32.xlu0 %v535, 20
      %v1238 = vpop.permute.xlu0 %1237
      %1239 = vrot.lane.b32.xlu0 %v536, 20
      %v1240 = vpop.permute.xlu0 %1239
      %1241 = vrot.lane.b32.xlu0 %v537, 20
      %v1242 = vpop.permute.xlu0 %1241
      %1307 = vrot.lane.b32.xlu0 %v539, 24
      %v1308 = vpop.permute.xlu0 %1307
      %1309 = vrot.lane.b32.xlu0 %v540, 24
      %v1310 = vpop.permute.xlu0 %1309
      %1311 = vrot.lane.b32.xlu0 %v541, 24
      %v1312 = vpop.permute.xlu0 %1311
      %1313 = vrot.lane.b32.xlu0 %v542, 24
      %v1314 = vpop.permute.xlu0 %1313
      %1315 = vrot.lane.b32.xlu0 %v543, 24
      %v1316 = vpop.permute.xlu0 %1315
      %1317 = vrot.lane.b32.xlu0 %v544, 24
      %v1318 = vpop.permute.xlu0 %1317
      %1319 = vrot.lane.b32.xlu0 %v545, 24
      %v1320 = vpop.permute.xlu0 %1319
      %1321 = vrot.lane.b32.xlu0 %v546, 24
      %v1322 = vpop.permute.xlu0 %1321
      %1323 = vrot.lane.b32.xlu0 %v547, 24
      %v1324 = vpop.permute.xlu0 %1323
      %1325 = vrot.lane.b32.xlu0 %v548, 24
      %v1326 = vpop.permute.xlu0 %1325
      %1327 = vrot.lane.b32.xlu0 %v549, 24
      %v1328 = vpop.permute.xlu0 %1327
      %1329 = vrot.lane.b32.xlu0 %v550, 24
      %v1330 = vpop.permute.xlu0 %1329
      %1331 = vrot.lane.b32.xlu0 %v551, 24
      %v1332 = vpop.permute.xlu0 %1331
      %1333 = vrot.lane.b32.xlu0 %v552, 24
      %v1334 = vpop.permute.xlu0 %1333
      %1335 = vrot.lane.b32.xlu0 %v553, 24
      %v1336 = vpop.permute.xlu0 %1335
      %1337 = vrot.lane.b32.xlu0 %v554, 24
      %v1338 = vpop.permute.xlu0 %1337
      %1339 = vrot.lane.b32.xlu0 %v555, 24
      %v1340 = vpop.permute.xlu0 %1339
      %1341 = vrot.lane.b32.xlu0 %v556, 24
      %v1342 = vpop.permute.xlu0 %1341
      %1343 = vrot.lane.b32.xlu0 %v557, 24
      %v1344 = vpop.permute.xlu0 %1343
      %1345 = vrot.lane.b32.xlu0 %v558, 24
      %v1346 = vpop.permute.xlu0 %1345
      %1347 = vrot.lane.b32.xlu0 %v559, 24
      %v1348 = vpop.permute.xlu0 %1347
      %1349 = vrot.lane.b32.xlu0 %v560, 24
      %v1350 = vpop.permute.xlu0 %1349
      %1351 = vrot.lane.b32.xlu0 %v561, 24
      %v1352 = vpop.permute.xlu0 %1351
      %1353 = vrot.lane.b32.xlu0 %v562, 24
      %v1354 = vpop.permute.xlu0 %1353
      %1355 = vrot.lane.b32.xlu0 %v563, 24
      %v1356 = vpop.permute.xlu0 %1355
      %1357 = vrot.lane.b32.xlu0 %v564, 24
      %v1358 = vpop.permute.xlu0 %1357
      %1359 = vrot.lane.b32.xlu0 %v565, 24
      %v1360 = vpop.permute.xlu0 %1359
      %1361 = vrot.lane.b32.xlu0 %v566, 24
      %v1362 = vpop.permute.xlu0 %1361
      %1363 = vrot.lane.b32.xlu0 %v567, 24
      %v1364 = vpop.permute.xlu0 %1363
      %1365 = vrot.lane.b32.xlu0 %v568, 24
      %v1366 = vpop.permute.xlu0 %1365
      %1367 = vrot.lane.b32.xlu0 %v569, 24
      %v1368 = vpop.permute.xlu0 %1367
      %1369 = vrot.lane.b32.xlu0 %v570, 24
      %v1370 = vpop.permute.xlu0 %1369
      %1435 = vrot.lane.b32.xlu0 %v571, 28
      %v1436 = vpop.permute.xlu0 %1435
      %1437 = vrot.lane.b32.xlu0 %v572, 28
      %v1438 = vpop.permute.xlu0 %1437
      %1439 = vrot.lane.b32.xlu0 %v573, 28
      %v1440 = vpop.permute.xlu0 %1439
      %1441 = vrot.lane.b32.xlu0 %v574, 28
      %v1442 = vpop.permute.xlu0 %1441
      %1443 = vrot.lane.b32.xlu0 %v575, 28
      %v1444 = vpop.permute.xlu0 %1443
      %1445 = vrot.lane.b32.xlu0 %v576, 28
      %v1446 = vpop.permute.xlu0 %1445
      %1447 = vrot.lane.b32.xlu0 %v577, 28
      %v1448 = vpop.permute.xlu0 %1447
      %1449 = vrot.lane.b32.xlu0 %v578, 28
      %v1450 = vpop.permute.xlu0 %1449
      %1451 = vrot.lane.b32.xlu0 %v579, 28
      %v1452 = vpop.permute.xlu0 %1451
      %1453 = vrot.lane.b32.xlu0 %v580, 28
      %v1454 = vpop.permute.xlu0 %1453
      %1455 = vrot.lane.b32.xlu0 %v581, 28
      %v1456 = vpop.permute.xlu0 %1455
      %1457 = vrot.lane.b32.xlu0 %v582, 28
      %v1458 = vpop.permute.xlu0 %1457
      %1459 = vrot.lane.b32.xlu0 %v583, 28
      %v1460 = vpop.permute.xlu0 %1459
      %1461 = vrot.lane.b32.xlu0 %v584, 28
      %v1462 = vpop.permute.xlu0 %1461
      %1463 = vrot.lane.b32.xlu0 %v585, 28
      %v1464 = vpop.permute.xlu0 %1463
      %1465 = vrot.lane.b32.xlu0 %v586, 28
      %v1466 = vpop.permute.xlu0 %1465
      %1467 = vrot.lane.b32.xlu0 %v587, 28
      %v1468 = vpop.permute.xlu0 %1467
      %1469 = vrot.lane.b32.xlu0 %v588, 28
      %v1470 = vpop.permute.xlu0 %1469
      %1471 = vrot.lane.b32.xlu0 %v589, 28
      %v1472 = vpop.permute.xlu0 %1471
      %1473 = vrot.lane.b32.xlu0 %v590, 28
      %v1474 = vpop.permute.xlu0 %1473
      %1475 = vrot.lane.b32.xlu0 %v591, 28
      %v1476 = vpop.permute.xlu0 %1475
      %1477 = vrot.lane.b32.xlu0 %v592, 28
      %v1478 = vpop.permute.xlu0 %1477
      %1479 = vrot.lane.b32.xlu0 %v593, 28
      %v1480 = vpop.permute.xlu0 %1479
      %1481 = vrot.lane.b32.xlu0 %v594, 28
      %v1482 = vpop.permute.xlu0 %1481
      %1483 = vrot.lane.b32.xlu0 %v595, 28
      %v1484 = vpop.permute.xlu0 %1483
      %1485 = vrot.lane.b32.xlu0 %v596, 28
      %v1486 = vpop.permute.xlu0 %1485
      %1487 = vrot.lane.b32.xlu0 %v597, 28
      %v1488 = vpop.permute.xlu0 %1487
      %1489 = vrot.lane.b32.xlu0 %v598, 28
      %v1490 = vpop.permute.xlu0 %1489
      %1491 = vrot.lane.b32.xlu0 %v599, 28
      %v1492 = vpop.permute.xlu0 %1491
      %1493 = vrot.lane.b32.xlu0 %v600, 28
      %v1494 = vpop.permute.xlu0 %1493
      %1495 = vrot.lane.b32.xlu0 %v601, 28
      %v1496 = vpop.permute.xlu0 %1495
      %1497 = vrot.lane.b32.xlu0 %v602, 28
      %v1498 = vpop.permute.xlu0 %1497
      %1563 = vrot.lane.b32.xlu0 %v603, 32
      %v1564 = vpop.permute.xlu0 %1563
      %1565 = vrot.lane.b32.xlu0 %v604, 32
      %v1566 = vpop.permute.xlu0 %1565
      %1567 = vrot.lane.b32.xlu0 %v605, 32
      %v1568 = vpop.permute.xlu0 %1567
      %1569 = vrot.lane.b32.xlu0 %v606, 32
      %v1570 = vpop.permute.xlu0 %1569
      %1571 = vrot.lane.b32.xlu0 %v607, 32
      %v1572 = vpop.permute.xlu0 %1571
      %1573 = vrot.lane.b32.xlu0 %v608, 32
      %v1574 = vpop.permute.xlu0 %1573
      %1575 = vrot.lane.b32.xlu0 %v609, 32
      %v1576 = vpop.permute.xlu0 %1575
      %1577 = vrot.lane.b32.xlu0 %v610, 32
      %v1578 = vpop.permute.xlu0 %1577
      %1579 = vrot.lane.b32.xlu0 %v611, 32
      %v1580 = vpop.permute.xlu0 %1579
      %1581 = vrot.lane.b32.xlu0 %v612, 32
      %v1582 = vpop.permute.xlu0 %1581
      %1583 = vrot.lane.b32.xlu0 %v613, 32
      %v1584 = vpop.permute.xlu0 %1583
      %1585 = vrot.lane.b32.xlu0 %v614, 32
      %v1586 = vpop.permute.xlu0 %1585
      %1587 = vrot.lane.b32.xlu0 %v615, 32
      %v1588 = vpop.permute.xlu0 %1587
      %1589 = vrot.lane.b32.xlu0 %v616, 32
      %v1590 = vpop.permute.xlu0 %1589
      %1591 = vrot.lane.b32.xlu0 %v617, 32
      %v1592 = vpop.permute.xlu0 %1591
      %1593 = vrot.lane.b32.xlu0 %v618, 32
      %v1594 = vpop.permute.xlu0 %1593
      %1595 = vrot.lane.b32.xlu0 %v619, 32
      %v1596 = vpop.permute.xlu0 %1595
      %1597 = vrot.lane.b32.xlu0 %v620, 32
      %v1598 = vpop.permute.xlu0 %1597
      %1599 = vrot.lane.b32.xlu0 %v621, 32
      %v1600 = vpop.permute.xlu0 %1599
      %1601 = vrot.lane.b32.xlu0 %v622, 32
      %v1602 = vpop.permute.xlu0 %1601
      %1603 = vrot.lane.b32.xlu0 %v623, 32
      %v1604 = vpop.permute.xlu0 %1603
      %1605 = vrot.lane.b32.xlu0 %v624, 32
      %v1606 = vpop.permute.xlu0 %1605
      %1607 = vrot.lane.b32.xlu0 %v625, 32
      %v1608 = vpop.permute.xlu0 %1607
      %1609 = vrot.lane.b32.xlu0 %v626, 32
      %v1610 = vpop.permute.xlu0 %1609
      %1611 = vrot.lane.b32.xlu0 %v627, 32
      %v1612 = vpop.permute.xlu0 %1611
      %1613 = vrot.lane.b32.xlu0 %v628, 32
      %v1614 = vpop.permute.xlu0 %1613
      %1615 = vrot.lane.b32.xlu0 %v629, 32
      %v1616 = vpop.permute.xlu0 %1615
      %1617 = vrot.lane.b32.xlu0 %v630, 32
      %v1618 = vpop.permute.xlu0 %1617
      %1619 = vrot.lane.b32.xlu0 %v631, 32
      %v1620 = vpop.permute.xlu0 %1619
      %1621 = vrot.lane.b32.xlu0 %v632, 32
      %v1622 = vpop.permute.xlu0 %1621
      %1623 = vrot.lane.b32.xlu0 %v633, 32
      %v1624 = vpop.permute.xlu0 %1623
      %1625 = vrot.lane.b32.xlu0 %v634, 32
      %v1626 = vpop.permute.xlu0 %1625
      %v1659 = vsel %vm225, %v346, %v668
      %v1660 = vsel %vm225, %v347, %v670
      %v1661 = vsel %vm225, %v348, %v672
      %v1662 = vsel %vm225, %v349, %v674
      %v1663 = vsel %vm225, %v350, %v676
      %v1664 = vsel %vm225, %v351, %v678
      %v1665 = vsel %vm225, %v352, %v680
      %v1666 = vsel %vm225, %v353, %v682
      %v1667 = vsel %vm225, %v354, %v684
      %v1668 = vsel %vm225, %v355, %v686
      %v1669 = vsel %vm225, %v356, %v688
      %v1670 = vsel %vm225, %v357, %v690
      %v1671 = vsel %vm225, %v358, %v692
      %v1672 = vsel %vm225, %v359, %v694
      %v1673 = vsel %vm225, %v360, %v696
      %v1674 = vsel %vm225, %v361, %v698
      %v1675 = vsel %vm225, %v362, %v700
      %v1676 = vsel %vm225, %v363, %v702
      %v1677 = vsel %vm225, %v364, %v704
      %v1678 = vsel %vm225, %v365, %v706
      %v1679 = vsel %vm225, %v366, %v708
      %v1680 = vsel %vm225, %v367, %v710
      %v1681 = vsel %vm225, %v368, %v712
      %v1682 = vsel %vm225, %v369, %v714
      %v1683 = vsel %vm225, %v370, %v716
      %v1684 = vsel %vm225, %v371, %v718
      %v1685 = vsel %vm225, %v372, %v720
      %v1686 = vsel %vm225, %v373, %v722
      %v1687 = vsel %vm225, %v374, %v724
      %v1688 = vsel %vm225, %v375, %v726
      %v1689 = vsel %vm225, %v376, %v728
      %v1690 = vsel %vm225, %v377, %v730
      %vm1691 = vcmask 64512
      %v1692 = vsel %vm1691, %v1659, %v796
      %v1693 = vsel %vm1691, %v1660, %v798
      %v1694 = vsel %vm1691, %v1661, %v800
      %v1695 = vsel %vm1691, %v1662, %v802
      %v1696 = vsel %vm1691, %v1663, %v804
      %v1697 = vsel %vm1691, %v1664, %v806
      %v1698 = vsel %vm1691, %v1665, %v808
      %v1699 = vsel %vm1691, %v1666, %v810
      %v1700 = vsel %vm1691, %v1667, %v812
      %v1701 = vsel %vm1691, %v1668, %v814
      %v1702 = vsel %vm1691, %v1669, %v816
      %v1703 = vsel %vm1691, %v1670, %v818
      %v1704 = vsel %vm1691, %v1671, %v820
      %v1705 = vsel %vm1691, %v1672, %v822
      %v1706 = vsel %vm1691, %v1673, %v824
      %v1707 = vsel %vm1691, %v1674, %v826
      %v1708 = vsel %vm1691, %v1675, %v828
      %v1709 = vsel %vm1691, %v1676, %v830
      %v1710 = vsel %vm1691, %v1677, %v832
      %v1711 = vsel %vm1691, %v1678, %v834
      %v1712 = vsel %vm1691, %v1679, %v836
      %v1713 = vsel %vm1691, %v1680, %v838
      %v1714 = vsel %vm1691, %v1681, %v840
      %v1715 = vsel %vm1691, %v1682, %v842
      %v1716 = vsel %vm1691, %v1683, %v844
      %v1717 = vsel %vm1691, %v1684, %v846
      %v1718 = vsel %vm1691, %v1685, %v848
      %v1719 = vsel %vm1691, %v1686, %v850
      %v1720 = vsel %vm1691, %v1687, %v852
      %v1721 = vsel %vm1691, %v1688, %v854
      %v1722 = vsel %vm1691, %v1689, %v856
      %v1723 = vsel %vm1691, %v1690, %v858
      %vm1724 = vcmask 97280
      %v1725 = vsel %vm1724, %v1692, %v924
      %v1726 = vsel %vm1724, %v1693, %v926
      %v1727 = vsel %vm1724, %v1694, %v928
      %v1728 = vsel %vm1724, %v1695, %v930
      %v1729 = vsel %vm1724, %v1696, %v932
      %v1730 = vsel %vm1724, %v1697, %v934
      %v1731 = vsel %vm1724, %v1698, %v936
      %v1732 = vsel %vm1724, %v1699, %v938
      %v1733 = vsel %vm1724, %v1700, %v940
      %v1734 = vsel %vm1724, %v1701, %v942
      %v1735 = vsel %vm1724, %v1702, %v944
      %v1736 = vsel %vm1724, %v1703, %v946
      %v1737 = vsel %vm1724, %v1704, %v948
      %v1738 = vsel %vm1724, %v1705, %v950
      %v1739 = vsel %vm1724, %v1706, %v952
      %v1740 = vsel %vm1724, %v1707, %v954
      %v1741 = vsel %vm1724, %v1708, %v956
      %v1742 = vsel %vm1724, %v1709, %v958
      %v1743 = vsel %vm1724, %v1710, %v960
      %v1744 = vsel %vm1724, %v1711, %v962
      %v1745 = vsel %vm1724, %v1712, %v964
      %v1746 = vsel %vm1724, %v1713, %v966
      %v1747 = vsel %vm1724, %v1714, %v968
      %v1748 = vsel %vm1724, %v1715, %v970
      %v1749 = vsel %vm1724, %v1716, %v972
      %v1750 = vsel %vm1724, %v1717, %v974
      %v1751 = vsel %vm1724, %v1718, %v976
      %v1752 = vsel %vm1724, %v1719, %v978
      %v1753 = vsel %vm1724, %v1720, %v980
      %v1754 = vsel %vm1724, %v1721, %v982
      %v1755 = vsel %vm1724, %v1722, %v984
      %v1756 = vsel %vm1724, %v1723, %v986
      %vm1757 = vcmask 130048
      %v1758 = vsel %vm1757, %v1725, %v1052
      %v1759 = vsel %vm1757, %v1726, %v1054
      %v1760 = vsel %vm1757, %v1727, %v1056
      %v1761 = vsel %vm1757, %v1728, %v1058
      %v1762 = vsel %vm1757, %v1729, %v1060
      %v1763 = vsel %vm1757, %v1730, %v1062
      %v1764 = vsel %vm1757, %v1731, %v1064
      %v1765 = vsel %vm1757, %v1732, %v1066
      %v1766 = vsel %vm1757, %v1733, %v1068
      %v1767 = vsel %vm1757, %v1734, %v1070
      %v1768 = vsel %vm1757, %v1735, %v1072
      %v1769 = vsel %vm1757, %v1736, %v1074
      %v1770 = vsel %vm1757, %v1737, %v1076
      %v1771 = vsel %vm1757, %v1738, %v1078
      %v1772 = vsel %vm1757, %v1739, %v1080
      %v1773 = vsel %vm1757, %v1740, %v1082
      %v1774 = vsel %vm1757, %v1741, %v1084
      %v1775 = vsel %vm1757, %v1742, %v1086
      %v1776 = vsel %vm1757, %v1743, %v1088
      %v1777 = vsel %vm1757, %v1744, %v1090
      %v1778 = vsel %vm1757, %v1745, %v1092
      %v1779 = vsel %vm1757, %v1746, %v1094
      %v1780 = vsel %vm1757, %v1747, %v1096
      %v1781 = vsel %vm1757, %v1748, %v1098
      %v1782 = vsel %vm1757, %v1749, %v1100
      %v1783 = vsel %vm1757, %v1750, %v1102
      %v1784 = vsel %vm1757, %v1751, %v1104
      %v1785 = vsel %vm1757, %v1752, %v1106
      %v1786 = vsel %vm1757, %v1753, %v1108
      %v1787 = vsel %vm1757, %v1754, %v1110
      %v1788 = vsel %vm1757, %v1755, %v1112
      %v1789 = vsel %vm1757, %v1756, %v1114
      %vm1790 = vcmask 162816
      %v1791 = vsel %vm1790, %v1758, %v1180
      %v1792 = vsel %vm1790, %v1759, %v1182
      %v1793 = vsel %vm1790, %v1760, %v1184
      %v1794 = vsel %vm1790, %v1761, %v1186
      %v1795 = vsel %vm1790, %v1762, %v1188
      %v1796 = vsel %vm1790, %v1763, %v1190
      %v1797 = vsel %vm1790, %v1764, %v1192
      %v1798 = vsel %vm1790, %v1765, %v1194
      %v1799 = vsel %vm1790, %v1766, %v1196
      %v1800 = vsel %vm1790, %v1767, %v1198
      %v1801 = vsel %vm1790, %v1768, %v1200
      %v1802 = vsel %vm1790, %v1769, %v1202
      %v1803 = vsel %vm1790, %v1770, %v1204
      %v1804 = vsel %vm1790, %v1771, %v1206
      %v1805 = vsel %vm1790, %v1772, %v1208
      %v1806 = vsel %vm1790, %v1773, %v1210
      %v1807 = vsel %vm1790, %v1774, %v1212
      %v1808 = vsel %vm1790, %v1775, %v1214
      %v1809 = vsel %vm1790, %v1776, %v1216
      %v1810 = vsel %vm1790, %v1777, %v1218
      %v1811 = vsel %vm1790, %v1778, %v1220
      %v1812 = vsel %vm1790, %v1779, %v1222
      %v1813 = vsel %vm1790, %v1780, %v1224
      %v1814 = vsel %vm1790, %v1781, %v1226
      %v1815 = vsel %vm1790, %v1782, %v1228
      %v1816 = vsel %vm1790, %v1783, %v1230
      %v1817 = vsel %vm1790, %v1784, %v1232
      %v1818 = vsel %vm1790, %v1785, %v1234
      %v1819 = vsel %vm1790, %v1786, %v1236
      %v1820 = vsel %vm1790, %v1787, %v1238
      %v1821 = vsel %vm1790, %v1788, %v1240
      %v1822 = vsel %vm1790, %v1789, %v1242
      %vm1823 = vcmask 195584
      %v1824 = vsel %vm1823, %v1791, %v1308
      %v1825 = vsel %vm1823, %v1792, %v1310
      %v1826 = vsel %vm1823, %v1793, %v1312
      %v1827 = vsel %vm1823, %v1794, %v1314
      %v1828 = vsel %vm1823, %v1795, %v1316
      %v1829 = vsel %vm1823, %v1796, %v1318
      %v1830 = vsel %vm1823, %v1797, %v1320
      %v1831 = vsel %vm1823, %v1798, %v1322
      %v1832 = vsel %vm1823, %v1799, %v1324
      %v1833 = vsel %vm1823, %v1800, %v1326
      %v1834 = vsel %vm1823, %v1801, %v1328
      %v1835 = vsel %vm1823, %v1802, %v1330
      %v1836 = vsel %vm1823, %v1803, %v1332
      %v1837 = vsel %vm1823, %v1804, %v1334
      %v1838 = vsel %vm1823, %v1805, %v1336
      %v1839 = vsel %vm1823, %v1806, %v1338
      %v1840 = vsel %vm1823, %v1807, %v1340
      %v1841 = vsel %vm1823, %v1808, %v1342
      %v1842 = vsel %vm1823, %v1809, %v1344
      %v1843 = vsel %vm1823, %v1810, %v1346
      %v1844 = vsel %vm1823, %v1811, %v1348
      %v1845 = vsel %vm1823, %v1812, %v1350
      %v1846 = vsel %vm1823, %v1813, %v1352
      %v1847 = vsel %vm1823, %v1814, %v1354
      %v1848 = vsel %vm1823, %v1815, %v1356
      %v1849 = vsel %vm1823, %v1816, %v1358
      %v1850 = vsel %vm1823, %v1817, %v1360
      %v1851 = vsel %vm1823, %v1818, %v1362
      %v1852 = vsel %vm1823, %v1819, %v1364
      %v1853 = vsel %vm1823, %v1820, %v1366
      %v1854 = vsel %vm1823, %v1821, %v1368
      %v1855 = vsel %vm1823, %v1822, %v1370
      %vm1856 = vcmask 228352
      %v1857 = vsel %vm1856, %v1824, %v1436
      %v1858 = vsel %vm1856, %v1825, %v1438
      %v1859 = vsel %vm1856, %v1826, %v1440
      %v1860 = vsel %vm1856, %v1827, %v1442
      %v1861 = vsel %vm1856, %v1828, %v1444
      %v1862 = vsel %vm1856, %v1829, %v1446
      %v1863 = vsel %vm1856, %v1830, %v1448
      %v1864 = vsel %vm1856, %v1831, %v1450
      %v1865 = vsel %vm1856, %v1832, %v1452
      %v1866 = vsel %vm1856, %v1833, %v1454
      %v1867 = vsel %vm1856, %v1834, %v1456
      %v1868 = vsel %vm1856, %v1835, %v1458
      %v1869 = vsel %vm1856, %v1836, %v1460
      %v1870 = vsel %vm1856, %v1837, %v1462
      %v1871 = vsel %vm1856, %v1838, %v1464
      %v1872 = vsel %vm1856, %v1839, %v1466
      %v1873 = vsel %vm1856, %v1840, %v1468
      %v1874 = vsel %vm1856, %v1841, %v1470
      %v1875 = vsel %vm1856, %v1842, %v1472
      %v1876 = vsel %vm1856, %v1843, %v1474
      %v1877 = vsel %vm1856, %v1844, %v1476
      %v1878 = vsel %vm1856, %v1845, %v1478
      %v1879 = vsel %vm1856, %v1846, %v1480
      %v1880 = vsel %vm1856, %v1847, %v1482
      %v1881 = vsel %vm1856, %v1848, %v1484
      %v1882 = vsel %vm1856, %v1849, %v1486
      %v1883 = vsel %vm1856, %v1850, %v1488
      %v1884 = vsel %vm1856, %v1851, %v1490
      %v1885 = vsel %vm1856, %v1852, %v1492
      %v1886 = vsel %vm1856, %v1853, %v1494
      %v1887 = vsel %vm1856, %v1854, %v1496
      %v1888 = vsel %vm1856, %v1855, %v1498
      %vm1889 = vcmask 261120
      %v1890 = vsel %vm1889, %v1857, %v1564
      %v1891 = vsel %vm1889, %v1858, %v1566
      %v1892 = vsel %vm1889, %v1859, %v1568
      %v1893 = vsel %vm1889, %v1860, %v1570
      %v1894 = vsel %vm1889, %v1861, %v1572
      %v1895 = vsel %vm1889, %v1862, %v1574
      %v1896 = vsel %vm1889, %v1863, %v1576
      %v1897 = vsel %vm1889, %v1864, %v1578
      %v1898 = vsel %vm1889, %v1865, %v1580
      %v1899 = vsel %vm1889, %v1866, %v1582
      %v1900 = vsel %vm1889, %v1867, %v1584
      %v1901 = vsel %vm1889, %v1868, %v1586
      %v1902 = vsel %vm1889, %v1869, %v1588
      %v1903 = vsel %vm1889, %v1870, %v1590
      %v1904 = vsel %vm1889, %v1871, %v1592
      %v1905 = vsel %vm1889, %v1872, %v1594
      %v1906 = vsel %vm1889, %v1873, %v1596
      %v1907 = vsel %vm1889, %v1874, %v1598
      %v1908 = vsel %vm1889, %v1875, %v1600
      %v1909 = vsel %vm1889, %v1876, %v1602
      %v1910 = vsel %vm1889, %v1877, %v1604
      %v1911 = vsel %vm1889, %v1878, %v1606
      %v1912 = vsel %vm1889, %v1879, %v1608
      %v1913 = vsel %vm1889, %v1880, %v1610
      %v1914 = vsel %vm1889, %v1881, %v1612
      %v1915 = vsel %vm1889, %v1882, %v1614
      %v1916 = vsel %vm1889, %v1883, %v1616
      %v1917 = vsel %vm1889, %v1884, %v1618
      %v1918 = vsel %vm1889, %v1885, %v1620
      %v1919 = vsel %vm1889, %v1886, %v1622
      %v1920 = vsel %vm1889, %v1887, %v1624
      %v1921 = vsel %vm1889, %v1888, %v1626
      %v1922 = vld [vmem:[%s1] sm:$0xff]
      %v1923 = vld [vmem:[%s1 + $0x8] sm:$0xff]
      %v1924 = vld [vmem:[%s1 + $0x10] sm:$0xff]
      %v1925 = vld [vmem:[%s1 + $0x18] sm:$0xff]
      %v1926 = vld [vmem:[%s1 + $0x20] sm:$0xf]
      %v1927 = vld [vmem:[%s2] sm:$0x1]
      %v1929 = vperm.slane %v1927, 0
      %vm1931 = vcmask 293888
      %v1933 = vsel %vm1931, %v1890, 0
      %v1936 = vsel %vm1931, %v1891, 0
      %v1939 = vsel %vm1931, %v1892, 0
      %v1942 = vsel %vm1931, %v1893, 0
      %v1945 = vsel %vm1931, %v1894, 0
      %v1948 = vsel %vm1931, %v1895, 0
      %v1951 = vsel %vm1931, %v1896, 0
      %v1954 = vsel %vm1931, %v1897, 0
      %v1957 = vsel %vm1931, %v1898, 0
      %v1960 = vsel %vm1931, %v1899, 0
      %v1963 = vsel %vm1931, %v1900, 0
      %v1966 = vsel %vm1931, %v1901, 0
      %v1969 = vsel %vm1931, %v1902, 0
      %v1972 = vsel %vm1931, %v1903, 0
      %v1975 = vsel %vm1931, %v1904, 0
      %v1978 = vsel %vm1931, %v1905, 0
      %v1981 = vsel %vm1931, %v1906, 0
      %v1984 = vsel %vm1931, %v1907, 0
      %v1987 = vsel %vm1931, %v1908, 0
      %v1990 = vsel %vm1931, %v1909, 0
      %v1993 = vsel %vm1931, %v1910, 0
      %v1996 = vsel %vm1931, %v1911, 0
      %v1999 = vsel %vm1931, %v1912, 0
      %v2002 = vsel %vm1931, %v1913, 0
      %v2005 = vsel %vm1931, %v1914, 0
      %v2008 = vsel %vm1931, %v1915, 0
      %v2011 = vsel %vm1931, %v1916, 0
      %v2014 = vsel %vm1931, %v1917, 0
      %v2017 = vsel %vm1931, %v1918, 0
      %v2020 = vsel %vm1931, %v1919, 0
      %v2023 = vsel %vm1931, %v1920, 0
      %v2026 = vsel %vm1931, %v1921, 0
      %vm2028 = vcmask 1043456
      %v2030 = vsel %vm2028, %v1926, 0
      %2032 = vmatpush.msra.mxu0 0.0
      %2033 = vmatpush.msra.mxu0 0.0
      %2034 = vmatpush.msra.mxu0 0.0
      %2035 = vmatpush.msra.mxu0 0.0
      %2036 = vmatpush.msra.mxu0 0.0
      %2037 = vmatpush.msra.mxu0 0.0
      %2038 = vmatpush.msra.mxu0 0.0
      %2039 = vmatpush.msra.mxu0 0.0
      %2040 = vmatpush.msra.mxu0 0.0
      %2041 = vmatpush.msra.mxu0 0.0
      %2042 = vmatpush.msra.mxu0 0.0
      %2043 = vmatpush.msra.mxu0 %v2030
      %2044 = vmatpush.msra.mxu0 %v1925
      %2045 = vmatpush.msra.mxu0 %v1924
      %2046 = vmatpush.msra.mxu0 %v1923
      %2047 = vmatpush.msra.mxu0 %v1922
      %2048 = vmatmul.f32.gmra.mxu0 %v1933
      %v2049 = vpop.f32.mrf.mxu0
      %v2050 = vadd.f32 %v1929, %v2049
      %2051 = vmatmul.f32.gmra.mxu0 %v1936
      %v2052 = vpop.f32.mrf.mxu0
      %v2053 = vadd.f32 %v1929, %v2052
      %2054 = vmatmul.f32.gmra.mxu0 %v1939
      %v2055 = vpop.f32.mrf.mxu0
      %v2056 = vadd.f32 %v1929, %v2055
      %2057 = vmatmul.f32.gmra.mxu0 %v1942
      %v2058 = vpop.f32.mrf.mxu0
      %v2059 = vadd.f32 %v1929, %v2058
      %2060 = vmatmul.f32.gmra.mxu0 %v1945
      %v2061 = vpop.f32.mrf.mxu0
      %v2062 = vadd.f32 %v1929, %v2061
      %2063 = vmatmul.f32.gmra.mxu0 %v1948
      %v2064 = vpop.f32.mrf.mxu0
      %v2065 = vadd.f32 %v1929, %v2064
      %2066 = vmatmul.f32.gmra.mxu0 %v1951
      %v2067 = vpop.f32.mrf.mxu0
      %v2068 = vadd.f32 %v1929, %v2067
      %2069 = vmatmul.f32.gmra.mxu0 %v1954
      %v2070 = vpop.f32.mrf.mxu0
      %v2071 = vadd.f32 %v1929, %v2070
      %2072 = vmatmul.f32.gmra.mxu0 %v1957
      %v2073 = vpop.f32.mrf.mxu0
      %v2074 = vadd.f32 %v1929, %v2073
      %2075 = vmatmul.f32.gmra.mxu0 %v1960
      %v2076 = vpop.f32.mrf.mxu0
      %v2077 = vadd.f32 %v1929, %v2076
      %2078 = vmatmul.f32.gmra.mxu0 %v1963
      %v2079 = vpop.f32.mrf.mxu0
      %v2080 = vadd.f32 %v1929, %v2079
      %2081 = vmatmul.f32.gmra.mxu0 %v1966
      %v2082 = vpop.f32.mrf.mxu0
      %v2083 = vadd.f32 %v1929, %v2082
      %2084 = vmatmul.f32.gmra.mxu0 %v1969
      %v2085 = vpop.f32.mrf.mxu0
      %v2086 = vadd.f32 %v1929, %v2085
      %2087 = vmatmul.f32.gmra.mxu0 %v1972
      %v2088 = vpop.f32.mrf.mxu0
      %v2089 = vadd.f32 %v1929, %v2088
      %2090 = vmatmul.f32.gmra.mxu0 %v1975
      %v2091 = vpop.f32.mrf.mxu0
      %v2092 = vadd.f32 %v1929, %v2091
      %2093 = vmatmul.f32.gmra.mxu0 %v1978
      %v2094 = vpop.f32.mrf.mxu0
      %v2095 = vadd.f32 %v1929, %v2094
      %2096 = vmatmul.f32.gmra.mxu0 %v1981
      %v2097 = vpop.f32.mrf.mxu0
      %v2098 = vadd.f32 %v1929, %v2097
      %2099 = vmatmul.f32.gmra.mxu0 %v1984
      %v2100 = vpop.f32.mrf.mxu0
      %v2101 = vadd.f32 %v1929, %v2100
      %2102 = vmatmul.f32.gmra.mxu0 %v1987
      %v2103 = vpop.f32.mrf.mxu0
      %v2104 = vadd.f32 %v1929, %v2103
      %2105 = vmatmul.f32.gmra.mxu0 %v1990
      %v2106 = vpop.f32.mrf.mxu0
      %v2107 = vadd.f32 %v1929, %v2106
      %2108 = vmatmul.f32.gmra.mxu0 %v1993
      %v2109 = vpop.f32.mrf.mxu0
      %v2110 = vadd.f32 %v1929, %v2109
      %2111 = vmatmul.f32.gmra.mxu0 %v1996
      %v2112 = vpop.f32.mrf.mxu0
      %v2113 = vadd.f32 %v1929, %v2112
      %2114 = vmatmul.f32.gmra.mxu0 %v1999
      %v2115 = vpop.f32.mrf.mxu0
      %v2116 = vadd.f32 %v1929, %v2115
      %2117 = vmatmul.f32.gmra.mxu0 %v2002
      %v2118 = vpop.f32.mrf.mxu0
      %v2119 = vadd.f32 %v1929, %v2118
      %2120 = vmatmul.f32.gmra.mxu0 %v2005
      %v2121 = vpop.f32.mrf.mxu0
      %v2122 = vadd.f32 %v1929, %v2121
      %2123 = vmatmul.f32.gmra.mxu0 %v2008
      %v2124 = vpop.f32.mrf.mxu0
      %v2125 = vadd.f32 %v1929, %v2124
      %2126 = vmatmul.f32.gmra.mxu0 %v2011
      %v2127 = vpop.f32.mrf.mxu0
      %v2128 = vadd.f32 %v1929, %v2127
      %2129 = vmatmul.f32.gmra.mxu0 %v2014
      %v2130 = vpop.f32.mrf.mxu0
      %v2131 = vadd.f32 %v1929, %v2130
      %2132 = vmatmul.f32.gmra.mxu0 %v2017
      %v2133 = vpop.f32.mrf.mxu0
      %v2134 = vadd.f32 %v1929, %v2133
      %2135 = vmatmul.f32.gmra.mxu0 %v2020
      %v2136 = vpop.f32.mrf.mxu0
      %v2137 = vadd.f32 %v1929, %v2136
      %2138 = vmatmul.f32.gmra.mxu0 %v2023
      %v2139 = vpop.f32.mrf.mxu0
      %v2140 = vadd.f32 %v1929, %v2139
      %2141 = vmatmul.f32.gmra.mxu0 %v2026
      %v2142 = vpop.f32.mrf.mxu0
      %v2143 = vadd.f32 %v1929, %v2142
      %2144 = vdwg.mxu0
      %v2145 = vmax.f32 %v2050, 0.0
      %v2146 = vmax.f32 %v2053, 0.0
      %v2147 = vmax.f32 %v2056, 0.0
      %v2148 = vmax.f32 %v2059, 0.0
      %v2149 = vmax.f32 %v2062, 0.0
      %v2150 = vmax.f32 %v2065, 0.0
      %v2151 = vmax.f32 %v2068, 0.0
      %v2152 = vmax.f32 %v2071, 0.0
      %v2153 = vmax.f32 %v2074, 0.0
      %v2154 = vmax.f32 %v2077, 0.0
      %v2155 = vmax.f32 %v2080, 0.0
      %v2156 = vmax.f32 %v2083, 0.0
      %v2157 = vmax.f32 %v2086, 0.0
      %v2158 = vmax.f32 %v2089, 0.0
      %v2159 = vmax.f32 %v2092, 0.0
      %v2160 = vmax.f32 %v2095, 0.0
      %v2161 = vmax.f32 %v2098, 0.0
      %v2162 = vmax.f32 %v2101, 0.0
      %v2163 = vmax.f32 %v2104, 0.0
      %v2164 = vmax.f32 %v2107, 0.0
      %v2165 = vmax.f32 %v2110, 0.0
      %v2166 = vmax.f32 %v2113, 0.0
      %v2167 = vmax.f32 %v2116, 0.0
      %v2168 = vmax.f32 %v2119, 0.0
      %v2169 = vmax.f32 %v2122, 0.0
      %v2170 = vmax.f32 %v2125, 0.0
      %v2171 = vmax.f32 %v2128, 0.0
      %v2172 = vmax.f32 %v2131, 0.0
      %v2173 = vmax.f32 %v2134, 0.0
      %v2174 = vmax.f32 %v2137, 0.0
      %v2175 = vmax.f32 %v2140, 0.0
      %v2176 = vmax.f32 %v2143, 0.0
      %2177 = vst.msk [vmem:[#allocation3] sm:$0xff] %vm1691, 0.0
      %2178 = vst.msk [vmem:[#allocation3 + $0x8] sm:$0xff] %vm1691, 0.0
      %vm2179 = vcmask 58368
      %2180 = vst.msk [vmem:[#allocation3 + $0x10] sm:$0x3] %vm2179, 0.0
      %2181 = vst.msk [vmem:[#allocation3 + $0x18] sm:$0xff] %vm1691, 0.0
      %2182 = vst.msk [vmem:[#allocation3 + $0x20] sm:$0xff] %vm1691, 0.0
      %2183 = vst.msk [vmem:[#allocation3 + $0x28] sm:$0x3] %vm2179, 0.0
      %2184 = vst.msk [vmem:[#allocation3 + $0x30] sm:$0xff] %vm1691, 0.0
      %2185 = vst.msk [vmem:[#allocation3 + $0x38] sm:$0xff] %vm1691, 0.0
      %2186 = vst.msk [vmem:[#allocation3 + $0x40] sm:$0x3] %vm2179, 0.0
      %2187 = vst.msk [vmem:[#allocation3 + $0x48] sm:$0xff] %vm1691, 0.0
      %2188 = vst.msk [vmem:[#allocation3 + $0x50] sm:$0xff] %vm1691, 0.0
      %2189 = vst.msk [vmem:[#allocation3 + $0x58] sm:$0x3] %vm2179, 0.0
      %2190 = vst.msk [vmem:[#allocation3 + $0x60] sm:$0xff] %vm1691, 0.0
      %2191 = vst.msk [vmem:[#allocation3 + $0x68] sm:$0xff] %vm1691, 0.0
      %2192 = vst.msk [vmem:[#allocation3 + $0x70] sm:$0x3] %vm2179, 0.0
      %2193 = vst.msk [vmem:[#allocation3 + $0x78] sm:$0xff] %vm1691, 0.0
      %2194 = vst.msk [vmem:[#allocation3 + $0x80] sm:$0xff] %vm1691, 0.0
      %2195 = vst.msk [vmem:[#allocation3 + $0x88] sm:$0x3] %vm2179, 0.0
      %2196 = vst.msk [vmem:[#allocation3 + $0x90] sm:$0xff] %vm1691, 0.0
      %2197 = vst.msk [vmem:[#allocation3 + $0x98] sm:$0xff] %vm1691, 0.0
      %2198 = vst.msk [vmem:[#allocation3 + $0xa0] sm:$0x3] %vm2179, 0.0
      %2199 = vst.msk [vmem:[#allocation3 + $0xa8] sm:$0xff] %vm1691, 0.0
      %2200 = vst.msk [vmem:[#allocation3 + $0xb0] sm:$0xff] %vm1691, 0.0
      %2201 = vst.msk [vmem:[#allocation3 + $0xb8] sm:$0x3] %vm2179, 0.0
      %2202 = vst.msk [vmem:[#allocation3 + $0xc0] sm:$0xff] %vm1691, 0.0
      %2203 = vst.msk [vmem:[#allocation3 + $0xc8] sm:$0xff] %vm1691, 0.0
      %2204 = vst.msk [vmem:[#allocation3 + $0xd0] sm:$0x3] %vm2179, 0.0
      %2205 = vst.msk [vmem:[#allocation3 + $0xd8] sm:$0xff] %vm1691, 0.0
      %2206 = vst.msk [vmem:[#allocation3 + $0xe0] sm:$0xff] %vm1691, 0.0
      %2207 = vst.msk [vmem:[#allocation3 + $0xe8] sm:$0x3] %vm2179, 0.0
      %2208 = vst.msk [vmem:[#allocation3 + $0xf0] sm:$0xff] %vm1691, 0.0
      %2209 = vst.msk [vmem:[#allocation3 + $0xf8] sm:$0xff] %vm1691, 0.0
      %2210 = vst.msk [vmem:[#allocation3 + $0x100] sm:$0x3] %vm2179, 0.0
      %2211 = vst.msk [vmem:[#allocation3 + $0x108] sm:$0xff] %vm1691, 0.0
      %2212 = vst.msk [vmem:[#allocation3 + $0x110] sm:$0xff] %vm1691, 0.0
      %2213 = vst.msk [vmem:[#allocation3 + $0x118] sm:$0x3] %vm2179, 0.0
      %2214 = vst.msk [vmem:[#allocation3 + $0x120] sm:$0xff] %vm1691, 0.0
      %2215 = vst.msk [vmem:[#allocation3 + $0x128] sm:$0xff] %vm1691, 0.0
      %2216 = vst.msk [vmem:[#allocation3 + $0x130] sm:$0x3] %vm2179, 0.0
      %2217 = vst.msk [vmem:[#allocation3 + $0x138] sm:$0xff] %vm1691, 0.0
      %2218 = vst.msk [vmem:[#allocation3 + $0x140] sm:$0xff] %vm1691, 0.0
      %2219 = vst.msk [vmem:[#allocation3 + $0x148] sm:$0x3] %vm2179, 0.0
      %2220 = vst.msk [vmem:[#allocation3 + $0x150] sm:$0xff] %vm1691, 0.0
      %2221 = vst.msk [vmem:[#allocation3 + $0x158] sm:$0xff] %vm1691, 0.0
      %2222 = vst.msk [vmem:[#allocation3 + $0x160] sm:$0x3] %vm2179, 0.0
      %2223 = vst.msk [vmem:[#allocation3 + $0x168] sm:$0xff] %vm1691, 0.0
      %2224 = vst.msk [vmem:[#allocation3 + $0x170] sm:$0xff] %vm1691, 0.0
      %2225 = vst.msk [vmem:[#allocation3 + $0x178] sm:$0x3] %vm2179, 0.0
      %2226 = vst.msk [vmem:[#allocation3 + $0x180] sm:$0xff] %vm1691, 0.0
      %2227 = vst.msk [vmem:[#allocation3 + $0x188] sm:$0xff] %vm1691, 0.0
      %2228 = vst.msk [vmem:[#allocation3 + $0x190] sm:$0x3] %vm2179, 0.0
      %2229 = vst.msk [vmem:[#allocation3 + $0x198] sm:$0xff] %vm1691, 0.0
      %2230 = vst.msk [vmem:[#allocation3 + $0x1a0] sm:$0xff] %vm1691, 0.0
      %2231 = vst.msk [vmem:[#allocation3 + $0x1a8] sm:$0x3] %vm2179, 0.0
      %s2232 = scalar_lea.vmem [#allocation3], 24
      %2233 = vst.msk [vmem:[%s2232 + $0x1] sm:$0xff] %vm1691, %v2145
      %2234 = vst.msk [vmem:[%s2232 + $0x9] sm:$0xff] %vm1691, %v2146
      %2235 = vst.msk [vmem:[%s2232 + $0x19] sm:$0xff] %vm1691, %v2147
      %2236 = vst.msk [vmem:[%s2232 + $0x21] sm:$0xff] %vm1691, %v2148
      %2237 = vst.msk [vmem:[%s2232 + $0x31] sm:$0xff] %vm1691, %v2149
      %2238 = vst.msk [vmem:[%s2232 + $0x39] sm:$0xff] %vm1691, %v2150
      %2239 = vst.msk [vmem:[%s2232 + $0x49] sm:$0xff] %vm1691, %v2151
      %2240 = vst.msk [vmem:[%s2232 + $0x51] sm:$0xff] %vm1691, %v2152
      %2241 = vst.msk [vmem:[%s2232 + $0x61] sm:$0xff] %vm1691, %v2153
      %2242 = vst.msk [vmem:[%s2232 + $0x69] sm:$0xff] %vm1691, %v2154
      %2243 = vst.msk [vmem:[%s2232 + $0x79] sm:$0xff] %vm1691, %v2155
      %2244 = vst.msk [vmem:[%s2232 + $0x81] sm:$0xff] %vm1691, %v2156
      %2245 = vst.msk [vmem:[%s2232 + $0x91] sm:$0xff] %vm1691, %v2157
      %2246 = vst.msk [vmem:[%s2232 + $0x99] sm:$0xff] %vm1691, %v2158
      %2247 = vst.msk [vmem:[%s2232 + $0xa9] sm:$0xff] %vm1691, %v2159
      %2248 = vst.msk [vmem:[%s2232 + $0xb1] sm:$0xff] %vm1691, %v2160
      %2249 = vst.msk [vmem:[%s2232 + $0xc1] sm:$0xff] %vm1691, %v2161
      %2250 = vst.msk [vmem:[%s2232 + $0xc9] sm:$0xff] %vm1691, %v2162
      %2251 = vst.msk [vmem:[%s2232 + $0xd9] sm:$0xff] %vm1691, %v2163
      %2252 = vst.msk [vmem:[%s2232 + $0xe1] sm:$0xff] %vm1691, %v2164
      %2253 = vst.msk [vmem:[%s2232 + $0xf1] sm:$0xff] %vm1691, %v2165
      %2254 = vst.msk [vmem:[%s2232 + $0xf9] sm:$0xff] %vm1691, %v2166
      %2255 = vst.msk [vmem:[%s2232 + $0x109] sm:$0xff] %vm1691, %v2167
      %2256 = vst.msk [vmem:[%s2232 + $0x111] sm:$0xff] %vm1691, %v2168
      %2257 = vst.msk [vmem:[%s2232 + $0x121] sm:$0xff] %vm1691, %v2169
      %2258 = vst.msk [vmem:[%s2232 + $0x129] sm:$0xff] %vm1691, %v2170
      %2259 = vst.msk [vmem:[%s2232 + $0x139] sm:$0xff] %vm1691, %v2171
      %2260 = vst.msk [vmem:[%s2232 + $0x141] sm:$0xff] %vm1691, %v2172
      %2261 = vst.msk [vmem:[%s2232 + $0x151] sm:$0xff] %vm1691, %v2173
      %2262 = vst.msk [vmem:[%s2232 + $0x159] sm:$0xff] %vm1691, %v2174
      %2263 = vst.msk [vmem:[%s2232 + $0x169] sm:$0xff] %vm1691, %v2175
      %2264 = vst.msk [vmem:[%s2232 + $0x171] sm:$0xff] %vm1691, %v2176
      %v2265 = vld [vmem:[#allocation3] sm:$0xff]
      %v2266 = vld [vmem:[#allocation3 + $0x8] sm:$0xff]
      %v2267 = vld [vmem:[#allocation3 + $0x18] sm:$0xff]
      %v2268 = vld [vmem:[#allocation3 + $0x20] sm:$0xff]
      %v2269 = vld [vmem:[#allocation3 + $0x30] sm:$0xff]
      %v2270 = vld [vmem:[#allocation3 + $0x38] sm:$0xff]
      %v2271 = vld [vmem:[#allocation3 + $0x48] sm:$0xff]
      %v2272 = vld [vmem:[#allocation3 + $0x50] sm:$0xff]
      %v2273 = vld [vmem:[#allocation3 + $0x60] sm:$0xff]
      %v2274 = vld [vmem:[#allocation3 + $0x68] sm:$0xff]
      %v2275 = vld [vmem:[#allocation3 + $0x78] sm:$0xff]
      %v2276 = vld [vmem:[#allocation3 + $0x80] sm:$0xff]
      %v2277 = vld [vmem:[#allocation3 + $0x90] sm:$0xff]
      %v2278 = vld [vmem:[#allocation3 + $0x98] sm:$0xff]
      %v2279 = vld [vmem:[#allocation3 + $0xa8] sm:$0xff]
      %v2280 = vld [vmem:[#allocation3 + $0xb0] sm:$0xff]
      %v2281 = vld [vmem:[#allocation3 + $0xc0] sm:$0xff]
      %v2282 = vld [vmem:[#allocation3 + $0xc8] sm:$0xff]
      %v2283 = vld [vmem:[#allocation3 + $0xd8] sm:$0xff]
      %v2284 = vld [vmem:[#allocation3 + $0xe0] sm:$0xff]
      %v2285 = vld [vmem:[#allocation3 + $0xf0] sm:$0xff]
      %v2286 = vld [vmem:[#allocation3 + $0xf8] sm:$0xff]
      %v2287 = vld [vmem:[#allocation3 + $0x108] sm:$0xff]
      %v2288 = vld [vmem:[#allocation3 + $0x110] sm:$0xff]
      %v2289 = vld [vmem:[#allocation3 + $0x120] sm:$0xff]
      %v2290 = vld [vmem:[#allocation3 + $0x128] sm:$0xff]
      %v2291 = vld [vmem:[#allocation3 + $0x138] sm:$0xff]
      %v2292 = vld [vmem:[#allocation3 + $0x140] sm:$0xff]
      %v2293 = vld [vmem:[#allocation3 + $0x150] sm:$0xff]
      %v2294 = vld [vmem:[#allocation3 + $0x158] sm:$0xff]
      %v2295 = vld [vmem:[#allocation3 + $0x168] sm:$0xff]
      %v2296 = vld [vmem:[#allocation3 + $0x170] sm:$0xff]
      %v2297 = vld [vmem:[#allocation3 + $0x1] sm:$0xff]
      %v2298 = vld [vmem:[#allocation3 + $0x9] sm:$0xff]
      %v2299 = vld [vmem:[#allocation3 + $0x19] sm:$0xff]
      %v2300 = vld [vmem:[#allocation3 + $0x21] sm:$0xff]
      %v2301 = vld [vmem:[#allocation3 + $0x31] sm:$0xff]
      %v2302 = vld [vmem:[#allocation3 + $0x39] sm:$0xff]
      %v2303 = vld [vmem:[#allocation3 + $0x49] sm:$0xff]
      %v2304 = vld [vmem:[#allocation3 + $0x51] sm:$0xff]
      %v2305 = vld [vmem:[#allocation3 + $0x61] sm:$0xff]
      %v2306 = vld [vmem:[#allocation3 + $0x69] sm:$0xff]
      %v2307 = vld [vmem:[#allocation3 + $0x79] sm:$0xff]
      %v2308 = vld [vmem:[#allocation3 + $0x81] sm:$0xff]
      %v2309 = vld [vmem:[#allocation3 + $0x91] sm:$0xff]
      %v2310 = vld [vmem:[#allocation3 + $0x99] sm:$0xff]
      %v2311 = vld [vmem:[#allocation3 + $0xa9] sm:$0xff]
      %v2312 = vld [vmem:[#allocation3 + $0xb1] sm:$0xff]
      %v2313 = vld [vmem:[#allocation3 + $0xc1] sm:$0xff]
      %v2314 = vld [vmem:[#allocation3 + $0xc9] sm:$0xff]
      %v2315 = vld [vmem:[#allocation3 + $0xd9] sm:$0xff]
      %v2316 = vld [vmem:[#allocation3 + $0xe1] sm:$0xff]
      %v2317 = vld [vmem:[#allocation3 + $0xf1] sm:$0xff]
      %v2318 = vld [vmem:[#allocation3 + $0xf9] sm:$0xff]
      %v2319 = vld [vmem:[#allocation3 + $0x109] sm:$0xff]
      %v2320 = vld [vmem:[#allocation3 + $0x111] sm:$0xff]
      %v2321 = vld [vmem:[#allocation3 + $0x121] sm:$0xff]
      %v2322 = vld [vmem:[#allocation3 + $0x129] sm:$0xff]
      %v2323 = vld [vmem:[#allocation3 + $0x139] sm:$0xff]
      %v2324 = vld [vmem:[#allocation3 + $0x141] sm:$0xff]
      %v2325 = vld [vmem:[#allocation3 + $0x151] sm:$0xff]
      %v2326 = vld [vmem:[#allocation3 + $0x159] sm:$0xff]
      %v2327 = vld [vmem:[#allocation3 + $0x169] sm:$0xff]
      %v2328 = vld [vmem:[#allocation3 + $0x171] sm:$0xff]
      %v2329 = vld [vmem:[#allocation3 + $0x2] sm:$0xff]
      %v2330 = vld [vmem:[#allocation3 + $0xa] sm:$0xff]
      %v2331 = vld [vmem:[#allocation3 + $0x1a] sm:$0xff]
      %v2332 = vld [vmem:[#allocation3 + $0x22] sm:$0xff]
      %v2333 = vld [vmem:[#allocation3 + $0x32] sm:$0xff]
      %v2334 = vld [vmem:[#allocation3 + $0x3a] sm:$0xff]
      %v2335 = vld [vmem:[#allocation3 + $0x4a] sm:$0xff]
      %v2336 = vld [vmem:[#allocation3 + $0x52] sm:$0xff]
      %v2337 = vld [vmem:[#allocation3 + $0x62] sm:$0xff]
      %v2338 = vld [vmem:[#allocation3 + $0x6a] sm:$0xff]
      %v2339 = vld [vmem:[#allocation3 + $0x7a] sm:$0xff]
      %v2340 = vld [vmem:[#allocation3 + $0x82] sm:$0xff]
      %v2341 = vld [vmem:[#allocation3 + $0x92] sm:$0xff]
      %v2342 = vld [vmem:[#allocation3 + $0x9a] sm:$0xff]
      %v2343 = vld [vmem:[#allocation3 + $0xaa] sm:$0xff]
      %v2344 = vld [vmem:[#allocation3 + $0xb2] sm:$0xff]
      %v2345 = vld [vmem:[#allocation3 + $0xc2] sm:$0xff]
      %v2346 = vld [vmem:[#allocation3 + $0xca] sm:$0xff]
      %v2347 = vld [vmem:[#allocation3 + $0xda] sm:$0xff]
      %v2348 = vld [vmem:[#allocation3 + $0xe2] sm:$0xff]
      %v2349 = vld [vmem:[#allocation3 + $0xf2] sm:$0xff]
      %v2350 = vld [vmem:[#allocation3 + $0xfa] sm:$0xff]
      %v2351 = vld [vmem:[#allocation3 + $0x10a] sm:$0xff]
      %v2352 = vld [vmem:[#allocation3 + $0x112] sm:$0xff]
      %v2353 = vld [vmem:[#allocation3 + $0x122] sm:$0xff]
      %v2354 = vld [vmem:[#allocation3 + $0x12a] sm:$0xff]
      %v2355 = vld [vmem:[#allocation3 + $0x13a] sm:$0xff]
      %v2356 = vld [vmem:[#allocation3 + $0x142] sm:$0xff]
      %v2357 = vld [vmem:[#allocation3 + $0x152] sm:$0xff]
      %v2358 = vld [vmem:[#allocation3 + $0x15a] sm:$0xff]
      %v2359 = vld [vmem:[#allocation3 + $0x16a] sm:$0xff]
      %v2360 = vld [vmem:[#allocation3 + $0x172] sm:$0xff]
      %v2361 = vld [vmem:[%s2232] sm:$0xff]
      %v2362 = vld [vmem:[%s2232 + $0x8] sm:$0xff]
      %v2363 = vld [vmem:[%s2232 + $0x18] sm:$0xff]
      %v2364 = vld [vmem:[%s2232 + $0x20] sm:$0xff]
      %v2365 = vld [vmem:[%s2232 + $0x30] sm:$0xff]
      %v2366 = vld [vmem:[%s2232 + $0x38] sm:$0xff]
      %v2367 = vld [vmem:[%s2232 + $0x48] sm:$0xff]
      %v2368 = vld [vmem:[%s2232 + $0x50] sm:$0xff]
      %v2369 = vld [vmem:[%s2232 + $0x60] sm:$0xff]
      %v2370 = vld [vmem:[%s2232 + $0x68] sm:$0xff]
      %v2371 = vld [vmem:[%s2232 + $0x78] sm:$0xff]
      %v2372 = vld [vmem:[%s2232 + $0x80] sm:$0xff]
      %v2373 = vld [vmem:[%s2232 + $0x90] sm:$0xff]
      %v2374 = vld [vmem:[%s2232 + $0x98] sm:$0xff]
      %v2375 = vld [vmem:[%s2232 + $0xa8] sm:$0xff]
      %v2376 = vld [vmem:[%s2232 + $0xb0] sm:$0xff]
      %v2377 = vld [vmem:[%s2232 + $0xc0] sm:$0xff]
      %v2378 = vld [vmem:[%s2232 + $0xc8] sm:$0xff]
      %v2379 = vld [vmem:[%s2232 + $0xd8] sm:$0xff]
      %v2380 = vld [vmem:[%s2232 + $0xe0] sm:$0xff]
      %v2381 = vld [vmem:[%s2232 + $0xf0] sm:$0xff]
      %v2382 = vld [vmem:[%s2232 + $0xf8] sm:$0xff]
      %v2383 = vld [vmem:[%s2232 + $0x108] sm:$0xff]
      %v2384 = vld [vmem:[%s2232 + $0x110] sm:$0xff]
      %v2385 = vld [vmem:[%s2232 + $0x120] sm:$0xff]
      %v2386 = vld [vmem:[%s2232 + $0x128] sm:$0xff]
      %v2387 = vld [vmem:[%s2232 + $0x138] sm:$0xff]
      %v2388 = vld [vmem:[%s2232 + $0x140] sm:$0xff]
      %v2389 = vld [vmem:[%s2232 + $0x150] sm:$0xff]
      %v2390 = vld [vmem:[%s2232 + $0x158] sm:$0xff]
      %v2391 = vld [vmem:[%s2232 + $0x168] sm:$0xff]
      %v2392 = vld [vmem:[%s2232 + $0x170] sm:$0xff]
      %v2393 = vld [vmem:[%s2232 + $0x1] sm:$0xff]
      %v2394 = vld [vmem:[%s2232 + $0x9] sm:$0xff]
      %v2395 = vld [vmem:[%s2232 + $0x19] sm:$0xff]
      %v2396 = vld [vmem:[%s2232 + $0x21] sm:$0xff]
      %v2397 = vld [vmem:[%s2232 + $0x31] sm:$0xff]
      %v2398 = vld [vmem:[%s2232 + $0x39] sm:$0xff]
      %v2399 = vld [vmem:[%s2232 + $0x49] sm:$0xff]
      %v2400 = vld [vmem:[%s2232 + $0x51] sm:$0xff]
      %v2401 = vld [vmem:[%s2232 + $0x61] sm:$0xff]
      %v2402 = vld [vmem:[%s2232 + $0x69] sm:$0xff]
      %v2403 = vld [vmem:[%s2232 + $0x79] sm:$0xff]
      %v2404 = vld [vmem:[%s2232 + $0x81] sm:$0xff]
      %v2405 = vld [vmem:[%s2232 + $0x91] sm:$0xff]
      %v2406 = vld [vmem:[%s2232 + $0x99] sm:$0xff]
      %v2407 = vld [vmem:[%s2232 + $0xa9] sm:$0xff]
      %v2408 = vld [vmem:[%s2232 + $0xb1] sm:$0xff]
      %v2409 = vld [vmem:[%s2232 + $0xc1] sm:$0xff]
      %v2410 = vld [vmem:[%s2232 + $0xc9] sm:$0xff]
      %v2411 = vld [vmem:[%s2232 + $0xd9] sm:$0xff]
      %v2412 = vld [vmem:[%s2232 + $0xe1] sm:$0xff]
      %v2413 = vld [vmem:[%s2232 + $0xf1] sm:$0xff]
      %v2414 = vld [vmem:[%s2232 + $0xf9] sm:$0xff]
      %v2415 = vld [vmem:[%s2232 + $0x109] sm:$0xff]
      %v2416 = vld [vmem:[%s2232 + $0x111] sm:$0xff]
      %v2417 = vld [vmem:[%s2232 + $0x121] sm:$0xff]
      %v2418 = vld [vmem:[%s2232 + $0x129] sm:$0xff]
      %v2419 = vld [vmem:[%s2232 + $0x139] sm:$0xff]
      %v2420 = vld [vmem:[%s2232 + $0x141] sm:$0xff]
      %v2421 = vld [vmem:[%s2232 + $0x151] sm:$0xff]
      %v2422 = vld [vmem:[%s2232 + $0x159] sm:$0xff]
      %v2423 = vld [vmem:[%s2232 + $0x169] sm:$0xff]
      %v2424 = vld [vmem:[%s2232 + $0x171] sm:$0xff]
      %v2425 = vld [vmem:[%s2232 + $0x2] sm:$0xff]
      %v2426 = vld [vmem:[%s2232 + $0xa] sm:$0xff]
      %v2427 = vld [vmem:[%s2232 + $0x1a] sm:$0xff]
      %v2428 = vld [vmem:[%s2232 + $0x22] sm:$0xff]
      %v2429 = vld [vmem:[%s2232 + $0x32] sm:$0xff]
      %v2430 = vld [vmem:[%s2232 + $0x3a] sm:$0xff]
      %v2431 = vld [vmem:[%s2232 + $0x4a] sm:$0xff]
      %v2432 = vld [vmem:[%s2232 + $0x52] sm:$0xff]
      %v2433 = vld [vmem:[%s2232 + $0x62] sm:$0xff]
      %v2434 = vld [vmem:[%s2232 + $0x6a] sm:$0xff]
      %v2435 = vld [vmem:[%s2232 + $0x7a] sm:$0xff]
      %v2436 = vld [vmem:[%s2232 + $0x82] sm:$0xff]
      %v2437 = vld [vmem:[%s2232 + $0x92] sm:$0xff]
      %v2438 = vld [vmem:[%s2232 + $0x9a] sm:$0xff]
      %v2439 = vld [vmem:[%s2232 + $0xaa] sm:$0xff]
      %v2440 = vld [vmem:[%s2232 + $0xb2] sm:$0xff]
      %v2441 = vld [vmem:[%s2232 + $0xc2] sm:$0xff]
      %v2442 = vld [vmem:[%s2232 + $0xca] sm:$0xff]
      %v2443 = vld [vmem:[%s2232 + $0xda] sm:$0xff]
      %v2444 = vld [vmem:[%s2232 + $0xe2] sm:$0xff]
      %v2445 = vld [vmem:[%s2232 + $0xf2] sm:$0xff]
      %v2446 = vld [vmem:[%s2232 + $0xfa] sm:$0xff]
      %v2447 = vld [vmem:[%s2232 + $0x10a] sm:$0xff]
      %v2448 = vld [vmem:[%s2232 + $0x112] sm:$0xff]
      %v2449 = vld [vmem:[%s2232 + $0x122] sm:$0xff]
      %v2450 = vld [vmem:[%s2232 + $0x12a] sm:$0xff]
      %v2451 = vld [vmem:[%s2232 + $0x13a] sm:$0xff]
      %v2452 = vld [vmem:[%s2232 + $0x142] sm:$0xff]
      %v2453 = vld [vmem:[%s2232 + $0x152] sm:$0xff]
      %v2454 = vld [vmem:[%s2232 + $0x15a] sm:$0xff]
      %v2455 = vld [vmem:[%s2232 + $0x16a] sm:$0xff]
      %v2456 = vld [vmem:[%s2232 + $0x172] sm:$0xff]
      %s2457 = scalar_lea.vmem [#allocation3], 48
      %v2458 = vld [vmem:[%s2457] sm:$0xff]
      %v2459 = vld [vmem:[%s2457 + $0x8] sm:$0xff]
      %v2460 = vld [vmem:[%s2457 + $0x18] sm:$0xff]
      %v2461 = vld [vmem:[%s2457 + $0x20] sm:$0xff]
      %v2462 = vld [vmem:[%s2457 + $0x30] sm:$0xff]
      %v2463 = vld [vmem:[%s2457 + $0x38] sm:$0xff]
      %v2464 = vld [vmem:[%s2457 + $0x48] sm:$0xff]
      %v2465 = vld [vmem:[%s2457 + $0x50] sm:$0xff]
      %v2466 = vld [vmem:[%s2457 + $0x60] sm:$0xff]
      %v2467 = vld [vmem:[%s2457 + $0x68] sm:$0xff]
      %v2468 = vld [vmem:[%s2457 + $0x78] sm:$0xff]
      %v2469 = vld [vmem:[%s2457 + $0x80] sm:$0xff]
      %v2470 = vld [vmem:[%s2457 + $0x90] sm:$0xff]
      %v2471 = vld [vmem:[%s2457 + $0x98] sm:$0xff]
      %v2472 = vld [vmem:[%s2457 + $0xa8] sm:$0xff]
      %v2473 = vld [vmem:[%s2457 + $0xb0] sm:$0xff]
      %v2474 = vld [vmem:[%s2457 + $0xc0] sm:$0xff]
      %v2475 = vld [vmem:[%s2457 + $0xc8] sm:$0xff]
      %v2476 = vld [vmem:[%s2457 + $0xd8] sm:$0xff]
      %v2477 = vld [vmem:[%s2457 + $0xe0] sm:$0xff]
      %v2478 = vld [vmem:[%s2457 + $0xf0] sm:$0xff]
      %v2479 = vld [vmem:[%s2457 + $0xf8] sm:$0xff]
      %v2480 = vld [vmem:[%s2457 + $0x108] sm:$0xff]
      %v2481 = vld [vmem:[%s2457 + $0x110] sm:$0xff]
      %v2482 = vld [vmem:[%s2457 + $0x120] sm:$0xff]
      %v2483 = vld [vmem:[%s2457 + $0x128] sm:$0xff]
      %v2484 = vld [vmem:[%s2457 + $0x138] sm:$0xff]
      %v2485 = vld [vmem:[%s2457 + $0x140] sm:$0xff]
      %v2486 = vld [vmem:[%s2457 + $0x150] sm:$0xff]
      %v2487 = vld [vmem:[%s2457 + $0x158] sm:$0xff]
      %v2488 = vld [vmem:[%s2457 + $0x168] sm:$0xff]
      %v2489 = vld [vmem:[%s2457 + $0x170] sm:$0xff]
      %v2490 = vld [vmem:[%s2457 + $0x1] sm:$0xff]
      %v2491 = vld [vmem:[%s2457 + $0x9] sm:$0xff]
      %v2492 = vld [vmem:[%s2457 + $0x19] sm:$0xff]
      %v2493 = vld [vmem:[%s2457 + $0x21] sm:$0xff]
      %v2494 = vld [vmem:[%s2457 + $0x31] sm:$0xff]
      %v2495 = vld [vmem:[%s2457 + $0x39] sm:$0xff]
      %v2496 = vld [vmem:[%s2457 + $0x49] sm:$0xff]
      %v2497 = vld [vmem:[%s2457 + $0x51] sm:$0xff]
      %v2498 = vld [vmem:[%s2457 + $0x61] sm:$0xff]
      %v2499 = vld [vmem:[%s2457 + $0x69] sm:$0xff]
      %v2500 = vld [vmem:[%s2457 + $0x79] sm:$0xff]
      %v2501 = vld [vmem:[%s2457 + $0x81] sm:$0xff]
      %v2502 = vld [vmem:[%s2457 + $0x91] sm:$0xff]
      %v2503 = vld [vmem:[%s2457 + $0x99] sm:$0xff]
      %v2504 = vld [vmem:[%s2457 + $0xa9] sm:$0xff]
      %v2505 = vld [vmem:[%s2457 + $0xb1] sm:$0xff]
      %v2506 = vld [vmem:[%s2457 + $0xc1] sm:$0xff]
      %v2507 = vld [vmem:[%s2457 + $0xc9] sm:$0xff]
      %v2508 = vld [vmem:[%s2457 + $0xd9] sm:$0xff]
      %v2509 = vld [vmem:[%s2457 + $0xe1] sm:$0xff]
      %v2510 = vld [vmem:[%s2457 + $0xf1] sm:$0xff]
      %v2511 = vld [vmem:[%s2457 + $0xf9] sm:$0xff]
      %v2512 = vld [vmem:[%s2457 + $0x109] sm:$0xff]
      %v2513 = vld [vmem:[%s2457 + $0x111] sm:$0xff]
      %v2514 = vld [vmem:[%s2457 + $0x121] sm:$0xff]
      %v2515 = vld [vmem:[%s2457 + $0x129] sm:$0xff]
      %v2516 = vld [vmem:[%s2457 + $0x139] sm:$0xff]
      %v2517 = vld [vmem:[%s2457 + $0x141] sm:$0xff]
      %v2518 = vld [vmem:[%s2457 + $0x151] sm:$0xff]
      %v2519 = vld [vmem:[%s2457 + $0x159] sm:$0xff]
      %v2520 = vld [vmem:[%s2457 + $0x169] sm:$0xff]
      %v2521 = vld [vmem:[%s2457 + $0x171] sm:$0xff]
      %v2522 = vld [vmem:[%s2457 + $0x2] sm:$0xff]
      %v2523 = vld [vmem:[%s2457 + $0xa] sm:$0xff]
      %v2524 = vld [vmem:[%s2457 + $0x1a] sm:$0xff]
      %v2525 = vld [vmem:[%s2457 + $0x22] sm:$0xff]
      %v2526 = vld [vmem:[%s2457 + $0x32] sm:$0xff]
      %v2527 = vld [vmem:[%s2457 + $0x3a] sm:$0xff]
      %v2528 = vld [vmem:[%s2457 + $0x4a] sm:$0xff]
      %v2529 = vld [vmem:[%s2457 + $0x52] sm:$0xff]
      %v2530 = vld [vmem:[%s2457 + $0x62] sm:$0xff]
      %v2531 = vld [vmem:[%s2457 + $0x6a] sm:$0xff]
      %v2532 = vld [vmem:[%s2457 + $0x7a] sm:$0xff]
      %v2533 = vld [vmem:[%s2457 + $0x82] sm:$0xff]
      %v2534 = vld [vmem:[%s2457 + $0x92] sm:$0xff]
      %v2535 = vld [vmem:[%s2457 + $0x9a] sm:$0xff]
      %v2536 = vld [vmem:[%s2457 + $0xaa] sm:$0xff]
      %v2537 = vld [vmem:[%s2457 + $0xb2] sm:$0xff]
      %v2538 = vld [vmem:[%s2457 + $0xc2] sm:$0xff]
      %v2539 = vld [vmem:[%s2457 + $0xca] sm:$0xff]
      %v2540 = vld [vmem:[%s2457 + $0xda] sm:$0xff]
      %v2541 = vld [vmem:[%s2457 + $0xe2] sm:$0xff]
      %v2542 = vld [vmem:[%s2457 + $0xf2] sm:$0xff]
      %v2543 = vld [vmem:[%s2457 + $0xfa] sm:$0xff]
      %v2544 = vld [vmem:[%s2457 + $0x10a] sm:$0xff]
      %v2545 = vld [vmem:[%s2457 + $0x112] sm:$0xff]
      %v2546 = vld [vmem:[%s2457 + $0x122] sm:$0xff]
      %v2547 = vld [vmem:[%s2457 + $0x12a] sm:$0xff]
      %v2548 = vld [vmem:[%s2457 + $0x13a] sm:$0xff]
      %v2549 = vld [vmem:[%s2457 + $0x142] sm:$0xff]
      %v2550 = vld [vmem:[%s2457 + $0x152] sm:$0xff]
      %v2551 = vld [vmem:[%s2457 + $0x15a] sm:$0xff]
      %v2552 = vld [vmem:[%s2457 + $0x16a] sm:$0xff]
      %v2553 = vld [vmem:[%s2457 + $0x172] sm:$0xff]
      %2586 = vrot.lane.b32.xlu0 %v2297, 8
      %v2587 = vpop.permute.xlu0 %2586
      %2588 = vrot.lane.b32.xlu0 %v2298, 8
      %v2589 = vpop.permute.xlu0 %2588
      %2590 = vrot.lane.b32.xlu0 %v2299, 8
      %v2591 = vpop.permute.xlu0 %2590
      %2592 = vrot.lane.b32.xlu0 %v2300, 8
      %v2593 = vpop.permute.xlu0 %2592
      %2594 = vrot.lane.b32.xlu0 %v2301, 8
      %v2595 = vpop.permute.xlu0 %2594
      %2596 = vrot.lane.b32.xlu0 %v2302, 8
      %v2597 = vpop.permute.xlu0 %2596
      %2598 = vrot.lane.b32.xlu0 %v2303, 8
      %v2599 = vpop.permute.xlu0 %2598
      %2600 = vrot.lane.b32.xlu0 %v2304, 8
      %v2601 = vpop.permute.xlu0 %2600
      %2602 = vrot.lane.b32.xlu0 %v2305, 8
      %v2603 = vpop.permute.xlu0 %2602
      %2604 = vrot.lane.b32.xlu0 %v2306, 8
      %v2605 = vpop.permute.xlu0 %2604
      %2606 = vrot.lane.b32.xlu0 %v2307, 8
      %v2607 = vpop.permute.xlu0 %2606
      %2608 = vrot.lane.b32.xlu0 %v2308, 8
      %v2609 = vpop.permute.xlu0 %2608
      %2610 = vrot.lane.b32.xlu0 %v2309, 8
      %v2611 = vpop.permute.xlu0 %2610
      %2612 = vrot.lane.b32.xlu0 %v2310, 8
      %v2613 = vpop.permute.xlu0 %2612
      %2614 = vrot.lane.b32.xlu0 %v2311, 8
      %v2615 = vpop.permute.xlu0 %2614
      %2616 = vrot.lane.b32.xlu0 %v2312, 8
      %v2617 = vpop.permute.xlu0 %2616
      %2618 = vrot.lane.b32.xlu0 %v2313, 8
      %v2619 = vpop.permute.xlu0 %2618
      %2620 = vrot.lane.b32.xlu0 %v2314, 8
      %v2621 = vpop.permute.xlu0 %2620
      %2622 = vrot.lane.b32.xlu0 %v2315, 8
      %v2623 = vpop.permute.xlu0 %2622
      %2624 = vrot.lane.b32.xlu0 %v2316, 8
      %v2625 = vpop.permute.xlu0 %2624
      %2626 = vrot.lane.b32.xlu0 %v2317, 8
      %v2627 = vpop.permute.xlu0 %2626
      %2628 = vrot.lane.b32.xlu0 %v2318, 8
      %v2629 = vpop.permute.xlu0 %2628
      %2630 = vrot.lane.b32.xlu0 %v2319, 8
      %v2631 = vpop.permute.xlu0 %2630
      %2632 = vrot.lane.b32.xlu0 %v2320, 8
      %v2633 = vpop.permute.xlu0 %2632
      %2634 = vrot.lane.b32.xlu0 %v2321, 8
      %v2635 = vpop.permute.xlu0 %2634
      %2636 = vrot.lane.b32.xlu0 %v2322, 8
      %v2637 = vpop.permute.xlu0 %2636
      %2638 = vrot.lane.b32.xlu0 %v2323, 8
      %v2639 = vpop.permute.xlu0 %2638
      %2640 = vrot.lane.b32.xlu0 %v2324, 8
      %v2641 = vpop.permute.xlu0 %2640
      %2642 = vrot.lane.b32.xlu0 %v2325, 8
      %v2643 = vpop.permute.xlu0 %2642
      %2644 = vrot.lane.b32.xlu0 %v2326, 8
      %v2645 = vpop.permute.xlu0 %2644
      %2646 = vrot.lane.b32.xlu0 %v2327, 8
      %v2647 = vpop.permute.xlu0 %2646
      %2648 = vrot.lane.b32.xlu0 %v2328, 8
      %v2649 = vpop.permute.xlu0 %2648
      %2714 = vrot.lane.b32.xlu0 %v2329, 16
      %v2715 = vpop.permute.xlu0 %2714
      %2716 = vrot.lane.b32.xlu0 %v2330, 16
      %v2717 = vpop.permute.xlu0 %2716
      %2718 = vrot.lane.b32.xlu0 %v2331, 16
      %v2719 = vpop.permute.xlu0 %2718
      %2720 = vrot.lane.b32.xlu0 %v2332, 16
      %v2721 = vpop.permute.xlu0 %2720
      %2722 = vrot.lane.b32.xlu0 %v2333, 16
      %v2723 = vpop.permute.xlu0 %2722
      %2724 = vrot.lane.b32.xlu0 %v2334, 16
      %v2725 = vpop.permute.xlu0 %2724
      %2726 = vrot.lane.b32.xlu0 %v2335, 16
      %v2727 = vpop.permute.xlu0 %2726
      %2728 = vrot.lane.b32.xlu0 %v2336, 16
      %v2729 = vpop.permute.xlu0 %2728
      %2730 = vrot.lane.b32.xlu0 %v2337, 16
      %v2731 = vpop.permute.xlu0 %2730
      %2732 = vrot.lane.b32.xlu0 %v2338, 16
      %v2733 = vpop.permute.xlu0 %2732
      %2734 = vrot.lane.b32.xlu0 %v2339, 16
      %v2735 = vpop.permute.xlu0 %2734
      %2736 = vrot.lane.b32.xlu0 %v2340, 16
      %v2737 = vpop.permute.xlu0 %2736
      %2738 = vrot.lane.b32.xlu0 %v2341, 16
      %v2739 = vpop.permute.xlu0 %2738
      %2740 = vrot.lane.b32.xlu0 %v2342, 16
      %v2741 = vpop.permute.xlu0 %2740
      %2742 = vrot.lane.b32.xlu0 %v2343, 16
      %v2743 = vpop.permute.xlu0 %2742
      %2744 = vrot.lane.b32.xlu0 %v2344, 16
      %v2745 = vpop.permute.xlu0 %2744
      %2746 = vrot.lane.b32.xlu0 %v2345, 16
      %v2747 = vpop.permute.xlu0 %2746
      %2748 = vrot.lane.b32.xlu0 %v2346, 16
      %v2749 = vpop.permute.xlu0 %2748
      %2750 = vrot.lane.b32.xlu0 %v2347, 16
      %v2751 = vpop.permute.xlu0 %2750
      %2752 = vrot.lane.b32.xlu0 %v2348, 16
      %v2753 = vpop.permute.xlu0 %2752
      %2754 = vrot.lane.b32.xlu0 %v2349, 16
      %v2755 = vpop.permute.xlu0 %2754
      %2756 = vrot.lane.b32.xlu0 %v2350, 16
      %v2757 = vpop.permute.xlu0 %2756
      %2758 = vrot.lane.b32.xlu0 %v2351, 16
      %v2759 = vpop.permute.xlu0 %2758
      %2760 = vrot.lane.b32.xlu0 %v2352, 16
      %v2761 = vpop.permute.xlu0 %2760
      %2762 = vrot.lane.b32.xlu0 %v2353, 16
      %v2763 = vpop.permute.xlu0 %2762
      %2764 = vrot.lane.b32.xlu0 %v2354, 16
      %v2765 = vpop.permute.xlu0 %2764
      %2766 = vrot.lane.b32.xlu0 %v2355, 16
      %v2767 = vpop.permute.xlu0 %2766
      %2768 = vrot.lane.b32.xlu0 %v2356, 16
      %v2769 = vpop.permute.xlu0 %2768
      %2770 = vrot.lane.b32.xlu0 %v2357, 16
      %v2771 = vpop.permute.xlu0 %2770
      %2772 = vrot.lane.b32.xlu0 %v2358, 16
      %v2773 = vpop.permute.xlu0 %2772
      %2774 = vrot.lane.b32.xlu0 %v2359, 16
      %v2775 = vpop.permute.xlu0 %2774
      %2776 = vrot.lane.b32.xlu0 %v2360, 16
      %v2777 = vpop.permute.xlu0 %2776
      %2842 = vrot.lane.b32.xlu0 %v2361, 24
      %v2843 = vpop.permute.xlu0 %2842
      %2844 = vrot.lane.b32.xlu0 %v2362, 24
      %v2845 = vpop.permute.xlu0 %2844
      %2846 = vrot.lane.b32.xlu0 %v2363, 24
      %v2847 = vpop.permute.xlu0 %2846
      %2848 = vrot.lane.b32.xlu0 %v2364, 24
      %v2849 = vpop.permute.xlu0 %2848
      %2850 = vrot.lane.b32.xlu0 %v2365, 24
      %v2851 = vpop.permute.xlu0 %2850
      %2852 = vrot.lane.b32.xlu0 %v2366, 24
      %v2853 = vpop.permute.xlu0 %2852
      %2854 = vrot.lane.b32.xlu0 %v2367, 24
      %v2855 = vpop.permute.xlu0 %2854
      %2856 = vrot.lane.b32.xlu0 %v2368, 24
      %v2857 = vpop.permute.xlu0 %2856
      %2858 = vrot.lane.b32.xlu0 %v2369, 24
      %v2859 = vpop.permute.xlu0 %2858
      %2860 = vrot.lane.b32.xlu0 %v2370, 24
      %v2861 = vpop.permute.xlu0 %2860
      %2862 = vrot.lane.b32.xlu0 %v2371, 24
      %v2863 = vpop.permute.xlu0 %2862
      %2864 = vrot.lane.b32.xlu0 %v2372, 24
      %v2865 = vpop.permute.xlu0 %2864
      %2866 = vrot.lane.b32.xlu0 %v2373, 24
      %v2867 = vpop.permute.xlu0 %2866
      %2868 = vrot.lane.b32.xlu0 %v2374, 24
      %v2869 = vpop.permute.xlu0 %2868
      %2870 = vrot.lane.b32.xlu0 %v2375, 24
      %v2871 = vpop.permute.xlu0 %2870
      %2872 = vrot.lane.b32.xlu0 %v2376, 24
      %v2873 = vpop.permute.xlu0 %2872
      %2874 = vrot.lane.b32.xlu0 %v2377, 24
      %v2875 = vpop.permute.xlu0 %2874
      %2876 = vrot.lane.b32.xlu0 %v2378, 24
      %v2877 = vpop.permute.xlu0 %2876
      %2878 = vrot.lane.b32.xlu0 %v2379, 24
      %v2879 = vpop.permute.xlu0 %2878
      %2880 = vrot.lane.b32.xlu0 %v2380, 24
      %v2881 = vpop.permute.xlu0 %2880
      %2882 = vrot.lane.b32.xlu0 %v2381, 24
      %v2883 = vpop.permute.xlu0 %2882
      %2884 = vrot.lane.b32.xlu0 %v2382, 24
      %v2885 = vpop.permute.xlu0 %2884
      %2886 = vrot.lane.b32.xlu0 %v2383, 24
      %v2887 = vpop.permute.xlu0 %2886
      %2888 = vrot.lane.b32.xlu0 %v2384, 24
      %v2889 = vpop.permute.xlu0 %2888
      %2890 = vrot.lane.b32.xlu0 %v2385, 24
      %v2891 = vpop.permute.xlu0 %2890
      %2892 = vrot.lane.b32.xlu0 %v2386, 24
      %v2893 = vpop.permute.xlu0 %2892
      %2894 = vrot.lane.b32.xlu0 %v2387, 24
      %v2895 = vpop.permute.xlu0 %2894
      %2896 = vrot.lane.b32.xlu0 %v2388, 24
      %v2897 = vpop.permute.xlu0 %2896
      %2898 = vrot.lane.b32.xlu0 %v2389, 24
      %v2899 = vpop.permute.xlu0 %2898
      %2900 = vrot.lane.b32.xlu0 %v2390, 24
      %v2901 = vpop.permute.xlu0 %2900
      %2902 = vrot.lane.b32.xlu0 %v2391, 24
      %v2903 = vpop.permute.xlu0 %2902
      %2904 = vrot.lane.b32.xlu0 %v2392, 24
      %v2905 = vpop.permute.xlu0 %2904
      %2970 = vrot.lane.b32.xlu0 %v2393, 32
      %v2971 = vpop.permute.xlu0 %2970
      %2972 = vrot.lane.b32.xlu0 %v2394, 32
      %v2973 = vpop.permute.xlu0 %2972
      %2974 = vrot.lane.b32.xlu0 %v2395, 32
      %v2975 = vpop.permute.xlu0 %2974
      %2976 = vrot.lane.b32.xlu0 %v2396, 32
      %v2977 = vpop.permute.xlu0 %2976
      %2978 = vrot.lane.b32.xlu0 %v2397, 32
      %v2979 = vpop.permute.xlu0 %2978
      %2980 = vrot.lane.b32.xlu0 %v2398, 32
      %v2981 = vpop.permute.xlu0 %2980
      %2982 = vrot.lane.b32.xlu0 %v2399, 32
      %v2983 = vpop.permute.xlu0 %2982
      %2984 = vrot.lane.b32.xlu0 %v2400, 32
      %v2985 = vpop.permute.xlu0 %2984
      %2986 = vrot.lane.b32.xlu0 %v2401, 32
      %v2987 = vpop.permute.xlu0 %2986
      %2988 = vrot.lane.b32.xlu0 %v2402, 32
      %v2989 = vpop.permute.xlu0 %2988
      %2990 = vrot.lane.b32.xlu0 %v2403, 32
      %v2991 = vpop.permute.xlu0 %2990
      %2992 = vrot.lane.b32.xlu0 %v2404, 32
      %v2993 = vpop.permute.xlu0 %2992
      %2994 = vrot.lane.b32.xlu0 %v2405, 32
      %v2995 = vpop.permute.xlu0 %2994
      %2996 = vrot.lane.b32.xlu0 %v2406, 32
      %v2997 = vpop.permute.xlu0 %2996
      %2998 = vrot.lane.b32.xlu0 %v2407, 32
      %v2999 = vpop.permute.xlu0 %2998
      %3000 = vrot.lane.b32.xlu0 %v2408, 32
      %v3001 = vpop.permute.xlu0 %3000
      %3002 = vrot.lane.b32.xlu0 %v2409, 32
      %v3003 = vpop.permute.xlu0 %3002
      %3004 = vrot.lane.b32.xlu0 %v2410, 32
      %v3005 = vpop.permute.xlu0 %3004
      %3006 = vrot.lane.b32.xlu0 %v2411, 32
      %v3007 = vpop.permute.xlu0 %3006
      %3008 = vrot.lane.b32.xlu0 %v2412, 32
      %v3009 = vpop.permute.xlu0 %3008
      %3010 = vrot.lane.b32.xlu0 %v2413, 32
      %v3011 = vpop.permute.xlu0 %3010
      %3012 = vrot.lane.b32.xlu0 %v2414, 32
      %v3013 = vpop.permute.xlu0 %3012
      %3014 = vrot.lane.b32.xlu0 %v2415, 32
      %v3015 = vpop.permute.xlu0 %3014
      %3016 = vrot.lane.b32.xlu0 %v2416, 32
      %v3017 = vpop.permute.xlu0 %3016
      %3018 = vrot.lane.b32.xlu0 %v2417, 32
      %v3019 = vpop.permute.xlu0 %3018
      %3020 = vrot.lane.b32.xlu0 %v2418, 32
      %v3021 = vpop.permute.xlu0 %3020
      %3022 = vrot.lane.b32.xlu0 %v2419, 32
      %v3023 = vpop.permute.xlu0 %3022
      %3024 = vrot.lane.b32.xlu0 %v2420, 32
      %v3025 = vpop.permute.xlu0 %3024
      %3026 = vrot.lane.b32.xlu0 %v2421, 32
      %v3027 = vpop.permute.xlu0 %3026
      %3028 = vrot.lane.b32.xlu0 %v2422, 32
      %v3029 = vpop.permute.xlu0 %3028
      %3030 = vrot.lane.b32.xlu0 %v2423, 32
      %v3031 = vpop.permute.xlu0 %3030
      %3032 = vrot.lane.b32.xlu0 %v2424, 32
      %v3033 = vpop.permute.xlu0 %3032
      %3098 = vrot.lane.b32.xlu0 %v2425, 40
      %v3099 = vpop.permute.xlu0 %3098
      %3100 = vrot.lane.b32.xlu0 %v2426, 40
      %v3101 = vpop.permute.xlu0 %3100
      %3102 = vrot.lane.b32.xlu0 %v2427, 40
      %v3103 = vpop.permute.xlu0 %3102
      %3104 = vrot.lane.b32.xlu0 %v2428, 40
      %v3105 = vpop.permute.xlu0 %3104
      %3106 = vrot.lane.b32.xlu0 %v2429, 40
      %v3107 = vpop.permute.xlu0 %3106
      %3108 = vrot.lane.b32.xlu0 %v2430, 40
      %v3109 = vpop.permute.xlu0 %3108
      %3110 = vrot.lane.b32.xlu0 %v2431, 40
      %v3111 = vpop.permute.xlu0 %3110
      %3112 = vrot.lane.b32.xlu0 %v2432, 40
      %v3113 = vpop.permute.xlu0 %3112
      %3114 = vrot.lane.b32.xlu0 %v2433, 40
      %v3115 = vpop.permute.xlu0 %3114
      %3116 = vrot.lane.b32.xlu0 %v2434, 40
      %v3117 = vpop.permute.xlu0 %3116
      %3118 = vrot.lane.b32.xlu0 %v2435, 40
      %v3119 = vpop.permute.xlu0 %3118
      %3120 = vrot.lane.b32.xlu0 %v2436, 40
      %v3121 = vpop.permute.xlu0 %3120
      %3122 = vrot.lane.b32.xlu0 %v2437, 40
      %v3123 = vpop.permute.xlu0 %3122
      %3124 = vrot.lane.b32.xlu0 %v2438, 40
      %v3125 = vpop.permute.xlu0 %3124
      %3126 = vrot.lane.b32.xlu0 %v2439, 40
      %v3127 = vpop.permute.xlu0 %3126
      %3128 = vrot.lane.b32.xlu0 %v2440, 40
      %v3129 = vpop.permute.xlu0 %3128
      %3130 = vrot.lane.b32.xlu0 %v2441, 40
      %v3131 = vpop.permute.xlu0 %3130
      %3132 = vrot.lane.b32.xlu0 %v2442, 40
      %v3133 = vpop.permute.xlu0 %3132
      %3134 = vrot.lane.b32.xlu0 %v2443, 40
      %v3135 = vpop.permute.xlu0 %3134
      %3136 = vrot.lane.b32.xlu0 %v2444, 40
      %v3137 = vpop.permute.xlu0 %3136
      %3138 = vrot.lane.b32.xlu0 %v2445, 40
      %v3139 = vpop.permute.xlu0 %3138
      %3140 = vrot.lane.b32.xlu0 %v2446, 40
      %v3141 = vpop.permute.xlu0 %3140
      %3142 = vrot.lane.b32.xlu0 %v2447, 40
      %v3143 = vpop.permute.xlu0 %3142
      %3144 = vrot.lane.b32.xlu0 %v2448, 40
      %v3145 = vpop.permute.xlu0 %3144
      %3146 = vrot.lane.b32.xlu0 %v2449, 40
      %v3147 = vpop.permute.xlu0 %3146
      %3148 = vrot.lane.b32.xlu0 %v2450, 40
      %v3149 = vpop.permute.xlu0 %3148
      %3150 = vrot.lane.b32.xlu0 %v2451, 40
      %v3151 = vpop.permute.xlu0 %3150
      %3152 = vrot.lane.b32.xlu0 %v2452, 40
      %v3153 = vpop.permute.xlu0 %3152
      %3154 = vrot.lane.b32.xlu0 %v2453, 40
      %v3155 = vpop.permute.xlu0 %3154
      %3156 = vrot.lane.b32.xlu0 %v2454, 40
      %v3157 = vpop.permute.xlu0 %3156
      %3158 = vrot.lane.b32.xlu0 %v2455, 40
      %v3159 = vpop.permute.xlu0 %3158
      %3160 = vrot.lane.b32.xlu0 %v2456, 40
      %v3161 = vpop.permute.xlu0 %3160
      %3226 = vrot.lane.b32.xlu0 %v2458, 48
      %v3227 = vpop.permute.xlu0 %3226
      %3228 = vrot.lane.b32.xlu0 %v2459, 48
      %v3229 = vpop.permute.xlu0 %3228
      %3230 = vrot.lane.b32.xlu0 %v2460, 48
      %v3231 = vpop.permute.xlu0 %3230
      %3232 = vrot.lane.b32.xlu0 %v2461, 48
      %v3233 = vpop.permute.xlu0 %3232
      %3234 = vrot.lane.b32.xlu0 %v2462, 48
      %v3235 = vpop.permute.xlu0 %3234
      %3236 = vrot.lane.b32.xlu0 %v2463, 48
      %v3237 = vpop.permute.xlu0 %3236
      %3238 = vrot.lane.b32.xlu0 %v2464, 48
      %v3239 = vpop.permute.xlu0 %3238
      %3240 = vrot.lane.b32.xlu0 %v2465, 48
      %v3241 = vpop.permute.xlu0 %3240
      %3242 = vrot.lane.b32.xlu0 %v2466, 48
      %v3243 = vpop.permute.xlu0 %3242
      %3244 = vrot.lane.b32.xlu0 %v2467, 48
      %v3245 = vpop.permute.xlu0 %3244
      %3246 = vrot.lane.b32.xlu0 %v2468, 48
      %v3247 = vpop.permute.xlu0 %3246
      %3248 = vrot.lane.b32.xlu0 %v2469, 48
      %v3249 = vpop.permute.xlu0 %3248
      %3250 = vrot.lane.b32.xlu0 %v2470, 48
      %v3251 = vpop.permute.xlu0 %3250
      %3252 = vrot.lane.b32.xlu0 %v2471, 48
      %v3253 = vpop.permute.xlu0 %3252
      %3254 = vrot.lane.b32.xlu0 %v2472, 48
      %v3255 = vpop.permute.xlu0 %3254
      %3256 = vrot.lane.b32.xlu0 %v2473, 48
      %v3257 = vpop.permute.xlu0 %3256
      %3258 = vrot.lane.b32.xlu0 %v2474, 48
      %v3259 = vpop.permute.xlu0 %3258
      %3260 = vrot.lane.b32.xlu0 %v2475, 48
      %v3261 = vpop.permute.xlu0 %3260
      %3262 = vrot.lane.b32.xlu0 %v2476, 48
      %v3263 = vpop.permute.xlu0 %3262
      %3264 = vrot.lane.b32.xlu0 %v2477, 48
      %v3265 = vpop.permute.xlu0 %3264
      %3266 = vrot.lane.b32.xlu0 %v2478, 48
      %v3267 = vpop.permute.xlu0 %3266
      %3268 = vrot.lane.b32.xlu0 %v2479, 48
      %v3269 = vpop.permute.xlu0 %3268
      %3270 = vrot.lane.b32.xlu0 %v2480, 48
      %v3271 = vpop.permute.xlu0 %3270
      %3272 = vrot.lane.b32.xlu0 %v2481, 48
      %v3273 = vpop.permute.xlu0 %3272
      %3274 = vrot.lane.b32.xlu0 %v2482, 48
      %v3275 = vpop.permute.xlu0 %3274
      %3276 = vrot.lane.b32.xlu0 %v2483, 48
      %v3277 = vpop.permute.xlu0 %3276
      %3278 = vrot.lane.b32.xlu0 %v2484, 48
      %v3279 = vpop.permute.xlu0 %3278
      %3280 = vrot.lane.b32.xlu0 %v2485, 48
      %v3281 = vpop.permute.xlu0 %3280
      %3282 = vrot.lane.b32.xlu0 %v2486, 48
      %v3283 = vpop.permute.xlu0 %3282
      %3284 = vrot.lane.b32.xlu0 %v2487, 48
      %v3285 = vpop.permute.xlu0 %3284
      %3286 = vrot.lane.b32.xlu0 %v2488, 48
      %v3287 = vpop.permute.xlu0 %3286
      %3288 = vrot.lane.b32.xlu0 %v2489, 48
      %v3289 = vpop.permute.xlu0 %3288
      %3354 = vrot.lane.b32.xlu0 %v2490, 56
      %v3355 = vpop.permute.xlu0 %3354
      %3356 = vrot.lane.b32.xlu0 %v2491, 56
      %v3357 = vpop.permute.xlu0 %3356
      %3358 = vrot.lane.b32.xlu0 %v2492, 56
      %v3359 = vpop.permute.xlu0 %3358
      %3360 = vrot.lane.b32.xlu0 %v2493, 56
      %v3361 = vpop.permute.xlu0 %3360
      %3362 = vrot.lane.b32.xlu0 %v2494, 56
      %v3363 = vpop.permute.xlu0 %3362
      %3364 = vrot.lane.b32.xlu0 %v2495, 56
      %v3365 = vpop.permute.xlu0 %3364
      %3366 = vrot.lane.b32.xlu0 %v2496, 56
      %v3367 = vpop.permute.xlu0 %3366
      %3368 = vrot.lane.b32.xlu0 %v2497, 56
      %v3369 = vpop.permute.xlu0 %3368
      %3370 = vrot.lane.b32.xlu0 %v2498, 56
      %v3371 = vpop.permute.xlu0 %3370
      %3372 = vrot.lane.b32.xlu0 %v2499, 56
      %v3373 = vpop.permute.xlu0 %3372
      %3374 = vrot.lane.b32.xlu0 %v2500, 56
      %v3375 = vpop.permute.xlu0 %3374
      %3376 = vrot.lane.b32.xlu0 %v2501, 56
      %v3377 = vpop.permute.xlu0 %3376
      %3378 = vrot.lane.b32.xlu0 %v2502, 56
      %v3379 = vpop.permute.xlu0 %3378
      %3380 = vrot.lane.b32.xlu0 %v2503, 56
      %v3381 = vpop.permute.xlu0 %3380
      %3382 = vrot.lane.b32.xlu0 %v2504, 56
      %v3383 = vpop.permute.xlu0 %3382
      %3384 = vrot.lane.b32.xlu0 %v2505, 56
      %v3385 = vpop.permute.xlu0 %3384
      %3386 = vrot.lane.b32.xlu0 %v2506, 56
      %v3387 = vpop.permute.xlu0 %3386
      %3388 = vrot.lane.b32.xlu0 %v2507, 56
      %v3389 = vpop.permute.xlu0 %3388
      %3390 = vrot.lane.b32.xlu0 %v2508, 56
      %v3391 = vpop.permute.xlu0 %3390
      %3392 = vrot.lane.b32.xlu0 %v2509, 56
      %v3393 = vpop.permute.xlu0 %3392
      %3394 = vrot.lane.b32.xlu0 %v2510, 56
      %v3395 = vpop.permute.xlu0 %3394
      %3396 = vrot.lane.b32.xlu0 %v2511, 56
      %v3397 = vpop.permute.xlu0 %3396
      %3398 = vrot.lane.b32.xlu0 %v2512, 56
      %v3399 = vpop.permute.xlu0 %3398
      %3400 = vrot.lane.b32.xlu0 %v2513, 56
      %v3401 = vpop.permute.xlu0 %3400
      %3402 = vrot.lane.b32.xlu0 %v2514, 56
      %v3403 = vpop.permute.xlu0 %3402
      %3404 = vrot.lane.b32.xlu0 %v2515, 56
      %v3405 = vpop.permute.xlu0 %3404
      %3406 = vrot.lane.b32.xlu0 %v2516, 56
      %v3407 = vpop.permute.xlu0 %3406
      %3408 = vrot.lane.b32.xlu0 %v2517, 56
      %v3409 = vpop.permute.xlu0 %3408
      %3410 = vrot.lane.b32.xlu0 %v2518, 56
      %v3411 = vpop.permute.xlu0 %3410
      %3412 = vrot.lane.b32.xlu0 %v2519, 56
      %v3413 = vpop.permute.xlu0 %3412
      %3414 = vrot.lane.b32.xlu0 %v2520, 56
      %v3415 = vpop.permute.xlu0 %3414
      %3416 = vrot.lane.b32.xlu0 %v2521, 56
      %v3417 = vpop.permute.xlu0 %3416
      %3482 = vrot.lane.b32.xlu0 %v2522, 64
      %v3483 = vpop.permute.xlu0 %3482
      %3484 = vrot.lane.b32.xlu0 %v2523, 64
      %v3485 = vpop.permute.xlu0 %3484
      %3486 = vrot.lane.b32.xlu0 %v2524, 64
      %v3487 = vpop.permute.xlu0 %3486
      %3488 = vrot.lane.b32.xlu0 %v2525, 64
      %v3489 = vpop.permute.xlu0 %3488
      %3490 = vrot.lane.b32.xlu0 %v2526, 64
      %v3491 = vpop.permute.xlu0 %3490
      %3492 = vrot.lane.b32.xlu0 %v2527, 64
      %v3493 = vpop.permute.xlu0 %3492
      %3494 = vrot.lane.b32.xlu0 %v2528, 64
      %v3495 = vpop.permute.xlu0 %3494
      %3496 = vrot.lane.b32.xlu0 %v2529, 64
      %v3497 = vpop.permute.xlu0 %3496
      %3498 = vrot.lane.b32.xlu0 %v2530, 64
      %v3499 = vpop.permute.xlu0 %3498
      %3500 = vrot.lane.b32.xlu0 %v2531, 64
      %v3501 = vpop.permute.xlu0 %3500
      %3502 = vrot.lane.b32.xlu0 %v2532, 64
      %v3503 = vpop.permute.xlu0 %3502
      %3504 = vrot.lane.b32.xlu0 %v2533, 64
      %v3505 = vpop.permute.xlu0 %3504
      %3506 = vrot.lane.b32.xlu0 %v2534, 64
      %v3507 = vpop.permute.xlu0 %3506
      %3508 = vrot.lane.b32.xlu0 %v2535, 64
      %v3509 = vpop.permute.xlu0 %3508
      %3510 = vrot.lane.b32.xlu0 %v2536, 64
      %v3511 = vpop.permute.xlu0 %3510
      %3512 = vrot.lane.b32.xlu0 %v2537, 64
      %v3513 = vpop.permute.xlu0 %3512
      %3514 = vrot.lane.b32.xlu0 %v2538, 64
      %v3515 = vpop.permute.xlu0 %3514
      %3516 = vrot.lane.b32.xlu0 %v2539, 64
      %v3517 = vpop.permute.xlu0 %3516
      %3518 = vrot.lane.b32.xlu0 %v2540, 64
      %v3519 = vpop.permute.xlu0 %3518
      %3520 = vrot.lane.b32.xlu0 %v2541, 64
      %v3521 = vpop.permute.xlu0 %3520
      %3522 = vrot.lane.b32.xlu0 %v2542, 64
      %v3523 = vpop.permute.xlu0 %3522
      %3524 = vrot.lane.b32.xlu0 %v2543, 64
      %v3525 = vpop.permute.xlu0 %3524
      %3526 = vrot.lane.b32.xlu0 %v2544, 64
      %v3527 = vpop.permute.xlu0 %3526
      %3528 = vrot.lane.b32.xlu0 %v2545, 64
      %v3529 = vpop.permute.xlu0 %3528
      %3530 = vrot.lane.b32.xlu0 %v2546, 64
      %v3531 = vpop.permute.xlu0 %3530
      %3532 = vrot.lane.b32.xlu0 %v2547, 64
      %v3533 = vpop.permute.xlu0 %3532
      %3534 = vrot.lane.b32.xlu0 %v2548, 64
      %v3535 = vpop.permute.xlu0 %3534
      %3536 = vrot.lane.b32.xlu0 %v2549, 64
      %v3537 = vpop.permute.xlu0 %3536
      %3538 = vrot.lane.b32.xlu0 %v2550, 64
      %v3539 = vpop.permute.xlu0 %3538
      %3540 = vrot.lane.b32.xlu0 %v2551, 64
      %v3541 = vpop.permute.xlu0 %3540
      %3542 = vrot.lane.b32.xlu0 %v2552, 64
      %v3543 = vpop.permute.xlu0 %3542
      %3544 = vrot.lane.b32.xlu0 %v2553, 64
      %v3545 = vpop.permute.xlu0 %3544
      %v3578 = vsel %vm1691, %v2265, %v2587
      %v3579 = vsel %vm1691, %v2266, %v2589
      %v3580 = vsel %vm1691, %v2267, %v2591
      %v3581 = vsel %vm1691, %v2268, %v2593
      %v3582 = vsel %vm1691, %v2269, %v2595
      %v3583 = vsel %vm1691, %v2270, %v2597
      %v3584 = vsel %vm1691, %v2271, %v2599
      %v3585 = vsel %vm1691, %v2272, %v2601
      %v3586 = vsel %vm1691, %v2273, %v2603
      %v3587 = vsel %vm1691, %v2274, %v2605
      %v3588 = vsel %vm1691, %v2275, %v2607
      %v3589 = vsel %vm1691, %v2276, %v2609
      %v3590 = vsel %vm1691, %v2277, %v2611
      %v3591 = vsel %vm1691, %v2278, %v2613
      %v3592 = vsel %vm1691, %v2279, %v2615
      %v3593 = vsel %vm1691, %v2280, %v2617
      %v3594 = vsel %vm1691, %v2281, %v2619
      %v3595 = vsel %vm1691, %v2282, %v2621
      %v3596 = vsel %vm1691, %v2283, %v2623
      %v3597 = vsel %vm1691, %v2284, %v2625
      %v3598 = vsel %vm1691, %v2285, %v2627
      %v3599 = vsel %vm1691, %v2286, %v2629
      %v3600 = vsel %vm1691, %v2287, %v2631
      %v3601 = vsel %vm1691, %v2288, %v2633
      %v3602 = vsel %vm1691, %v2289, %v2635
      %v3603 = vsel %vm1691, %v2290, %v2637
      %v3604 = vsel %vm1691, %v2291, %v2639
      %v3605 = vsel %vm1691, %v2292, %v2641
      %v3606 = vsel %vm1691, %v2293, %v2643
      %v3607 = vsel %vm1691, %v2294, %v2645
      %v3608 = vsel %vm1691, %v2295, %v2647
      %v3609 = vsel %vm1691, %v2296, %v2649
      %v3610 = vsel %vm1757, %v3578, %v2715
      %v3611 = vsel %vm1757, %v3579, %v2717
      %v3612 = vsel %vm1757, %v3580, %v2719
      %v3613 = vsel %vm1757, %v3581, %v2721
      %v3614 = vsel %vm1757, %v3582, %v2723
      %v3615 = vsel %vm1757, %v3583, %v2725
      %v3616 = vsel %vm1757, %v3584, %v2727
      %v3617 = vsel %vm1757, %v3585, %v2729
      %v3618 = vsel %vm1757, %v3586, %v2731
      %v3619 = vsel %vm1757, %v3587, %v2733
      %v3620 = vsel %vm1757, %v3588, %v2735
      %v3621 = vsel %vm1757, %v3589, %v2737
      %v3622 = vsel %vm1757, %v3590, %v2739
      %v3623 = vsel %vm1757, %v3591, %v2741
      %v3624 = vsel %vm1757, %v3592, %v2743
      %v3625 = vsel %vm1757, %v3593, %v2745
      %v3626 = vsel %vm1757, %v3594, %v2747
      %v3627 = vsel %vm1757, %v3595, %v2749
      %v3628 = vsel %vm1757, %v3596, %v2751
      %v3629 = vsel %vm1757, %v3597, %v2753
      %v3630 = vsel %vm1757, %v3598, %v2755
      %v3631 = vsel %vm1757, %v3599, %v2757
      %v3632 = vsel %vm1757, %v3600, %v2759
      %v3633 = vsel %vm1757, %v3601, %v2761
      %v3634 = vsel %vm1757, %v3602, %v2763
      %v3635 = vsel %vm1757, %v3603, %v2765
      %v3636 = vsel %vm1757, %v3604, %v2767
      %v3637 = vsel %vm1757, %v3605, %v2769
      %v3638 = vsel %vm1757, %v3606, %v2771
      %v3639 = vsel %vm1757, %v3607, %v2773
      %v3640 = vsel %vm1757, %v3608, %v2775
      %v3641 = vsel %vm1757, %v3609, %v2777
      %v3642 = vsel %vm1823, %v3610, %v2843
      %v3643 = vsel %vm1823, %v3611, %v2845
      %v3644 = vsel %vm1823, %v3612, %v2847
      %v3645 = vsel %vm1823, %v3613, %v2849
      %v3646 = vsel %vm1823, %v3614, %v2851
      %v3647 = vsel %vm1823, %v3615, %v2853
      %v3648 = vsel %vm1823, %v3616, %v2855
      %v3649 = vsel %vm1823, %v3617, %v2857
      %v3650 = vsel %vm1823, %v3618, %v2859
      %v3651 = vsel %vm1823, %v3619, %v2861
      %v3652 = vsel %vm1823, %v3620, %v2863
      %v3653 = vsel %vm1823, %v3621, %v2865
      %v3654 = vsel %vm1823, %v3622, %v2867
      %v3655 = vsel %vm1823, %v3623, %v2869
      %v3656 = vsel %vm1823, %v3624, %v2871
      %v3657 = vsel %vm1823, %v3625, %v2873
      %v3658 = vsel %vm1823, %v3626, %v2875
      %v3659 = vsel %vm1823, %v3627, %v2877
      %v3660 = vsel %vm1823, %v3628, %v2879
      %v3661 = vsel %vm1823, %v3629, %v2881
      %v3662 = vsel %vm1823, %v3630, %v2883
      %v3663 = vsel %vm1823, %v3631, %v2885
      %v3664 = vsel %vm1823, %v3632, %v2887
      %v3665 = vsel %vm1823, %v3633, %v2889
      %v3666 = vsel %vm1823, %v3634, %v2891
      %v3667 = vsel %vm1823, %v3635, %v2893
      %v3668 = vsel %vm1823, %v3636, %v2895
      %v3669 = vsel %vm1823, %v3637, %v2897
      %v3670 = vsel %vm1823, %v3638, %v2899
      %v3671 = vsel %vm1823, %v3639, %v2901
      %v3672 = vsel %vm1823, %v3640, %v2903
      %v3673 = vsel %vm1823, %v3641, %v2905
      %v3674 = vsel %vm1889, %v3642, %v2971
      %v3675 = vsel %vm1889, %v3643, %v2973
      %v3676 = vsel %vm1889, %v3644, %v2975
      %v3677 = vsel %vm1889, %v3645, %v2977
      %v3678 = vsel %vm1889, %v3646, %v2979
      %v3679 = vsel %vm1889, %v3647, %v2981
      %v3680 = vsel %vm1889, %v3648, %v2983
      %v3681 = vsel %vm1889, %v3649, %v2985
      %v3682 = vsel %vm1889, %v3650, %v2987
      %v3683 = vsel %vm1889, %v3651, %v2989
      %v3684 = vsel %vm1889, %v3652, %v2991
      %v3685 = vsel %vm1889, %v3653, %v2993
      %v3686 = vsel %vm1889, %v3654, %v2995
      %v3687 = vsel %vm1889, %v3655, %v2997
      %v3688 = vsel %vm1889, %v3656, %v2999
      %v3689 = vsel %vm1889, %v3657, %v3001
      %v3690 = vsel %vm1889, %v3658, %v3003
      %v3691 = vsel %vm1889, %v3659, %v3005
      %v3692 = vsel %vm1889, %v3660, %v3007
      %v3693 = vsel %vm1889, %v3661, %v3009
      %v3694 = vsel %vm1889, %v3662, %v3011
      %v3695 = vsel %vm1889, %v3663, %v3013
      %v3696 = vsel %vm1889, %v3664, %v3015
      %v3697 = vsel %vm1889, %v3665, %v3017
      %v3698 = vsel %vm1889, %v3666, %v3019
      %v3699 = vsel %vm1889, %v3667, %v3021
      %v3700 = vsel %vm1889, %v3668, %v3023
      %v3701 = vsel %vm1889, %v3669, %v3025
      %v3702 = vsel %vm1889, %v3670, %v3027
      %v3703 = vsel %vm1889, %v3671, %v3029
      %v3704 = vsel %vm1889, %v3672, %v3031
      %v3705 = vsel %vm1889, %v3673, %v3033
      %vm3706 = vcmask 326656
      %v3707 = vsel %vm3706, %v3674, %v3099
      %v3708 = vsel %vm3706, %v3675, %v3101
      %v3709 = vsel %vm3706, %v3676, %v3103
      %v3710 = vsel %vm3706, %v3677, %v3105
      %v3711 = vsel %vm3706, %v3678, %v3107
      %v3712 = vsel %vm3706, %v3679, %v3109
      %v3713 = vsel %vm3706, %v3680, %v3111
      %v3714 = vsel %vm3706, %v3681, %v3113
      %v3715 = vsel %vm3706, %v3682, %v3115
      %v3716 = vsel %vm3706, %v3683, %v3117
      %v3717 = vsel %vm3706, %v3684, %v3119
      %v3718 = vsel %vm3706, %v3685, %v3121
      %v3719 = vsel %vm3706, %v3686, %v3123
      %v3720 = vsel %vm3706, %v3687, %v3125
      %v3721 = vsel %vm3706, %v3688, %v3127
      %v3722 = vsel %vm3706, %v3689, %v3129
      %v3723 = vsel %vm3706, %v3690, %v3131
      %v3724 = vsel %vm3706, %v3691, %v3133
      %v3725 = vsel %vm3706, %v3692, %v3135
      %v3726 = vsel %vm3706, %v3693, %v3137
      %v3727 = vsel %vm3706, %v3694, %v3139
      %v3728 = vsel %vm3706, %v3695, %v3141
      %v3729 = vsel %vm3706, %v3696, %v3143
      %v3730 = vsel %vm3706, %v3697, %v3145
      %v3731 = vsel %vm3706, %v3698, %v3147
      %v3732 = vsel %vm3706, %v3699, %v3149
      %v3733 = vsel %vm3706, %v3700, %v3151
      %v3734 = vsel %vm3706, %v3701, %v3153
      %v3735 = vsel %vm3706, %v3702, %v3155
      %v3736 = vsel %vm3706, %v3703, %v3157
      %v3737 = vsel %vm3706, %v3704, %v3159
      %v3738 = vsel %vm3706, %v3705, %v3161
      %vm3739 = vcmask 392192
      %v3740 = vsel %vm3739, %v3707, %v3227
      %v3741 = vsel %vm3739, %v3708, %v3229
      %v3742 = vsel %vm3739, %v3709, %v3231
      %v3743 = vsel %vm3739, %v3710, %v3233
      %v3744 = vsel %vm3739, %v3711, %v3235
      %v3745 = vsel %vm3739, %v3712, %v3237
      %v3746 = vsel %vm3739, %v3713, %v3239
      %v3747 = vsel %vm3739, %v3714, %v3241
      %v3748 = vsel %vm3739, %v3715, %v3243
      %v3749 = vsel %vm3739, %v3716, %v3245
      %v3750 = vsel %vm3739, %v3717, %v3247
      %v3751 = vsel %vm3739, %v3718, %v3249
      %v3752 = vsel %vm3739, %v3719, %v3251
      %v3753 = vsel %vm3739, %v3720, %v3253
      %v3754 = vsel %vm3739, %v3721, %v3255
      %v3755 = vsel %vm3739, %v3722, %v3257
      %v3756 = vsel %vm3739, %v3723, %v3259
      %v3757 = vsel %vm3739, %v3724, %v3261
      %v3758 = vsel %vm3739, %v3725, %v3263
      %v3759 = vsel %vm3739, %v3726, %v3265
      %v3760 = vsel %vm3739, %v3727, %v3267
      %v3761 = vsel %vm3739, %v3728, %v3269
      %v3762 = vsel %vm3739, %v3729, %v3271
      %v3763 = vsel %vm3739, %v3730, %v3273
      %v3764 = vsel %vm3739, %v3731, %v3275
      %v3765 = vsel %vm3739, %v3732, %v3277
      %v3766 = vsel %vm3739, %v3733, %v3279
      %v3767 = vsel %vm3739, %v3734, %v3281
      %v3768 = vsel %vm3739, %v3735, %v3283
      %v3769 = vsel %vm3739, %v3736, %v3285
      %v3770 = vsel %vm3739, %v3737, %v3287
      %v3771 = vsel %vm3739, %v3738, %v3289
      %vm3772 = vcmask 457728
      %v3773 = vsel %vm3772, %v3740, %v3355
      %v3774 = vsel %vm3772, %v3741, %v3357
      %v3775 = vsel %vm3772, %v3742, %v3359
      %v3776 = vsel %vm3772, %v3743, %v3361
      %v3777 = vsel %vm3772, %v3744, %v3363
      %v3778 = vsel %vm3772, %v3745, %v3365
      %v3779 = vsel %vm3772, %v3746, %v3367
      %v3780 = vsel %vm3772, %v3747, %v3369
      %v3781 = vsel %vm3772, %v3748, %v3371
      %v3782 = vsel %vm3772, %v3749, %v3373
      %v3783 = vsel %vm3772, %v3750, %v3375
      %v3784 = vsel %vm3772, %v3751, %v3377
      %v3785 = vsel %vm3772, %v3752, %v3379
      %v3786 = vsel %vm3772, %v3753, %v3381
      %v3787 = vsel %vm3772, %v3754, %v3383
      %v3788 = vsel %vm3772, %v3755, %v3385
      %v3789 = vsel %vm3772, %v3756, %v3387
      %v3790 = vsel %vm3772, %v3757, %v3389
      %v3791 = vsel %vm3772, %v3758, %v3391
      %v3792 = vsel %vm3772, %v3759, %v3393
      %v3793 = vsel %vm3772, %v3760, %v3395
      %v3794 = vsel %vm3772, %v3761, %v3397
      %v3795 = vsel %vm3772, %v3762, %v3399
      %v3796 = vsel %vm3772, %v3763, %v3401
      %v3797 = vsel %vm3772, %v3764, %v3403
      %v3798 = vsel %vm3772, %v3765, %v3405
      %v3799 = vsel %vm3772, %v3766, %v3407
      %v3800 = vsel %vm3772, %v3767, %v3409
      %v3801 = vsel %vm3772, %v3768, %v3411
      %v3802 = vsel %vm3772, %v3769, %v3413
      %v3803 = vsel %vm3772, %v3770, %v3415
      %v3804 = vsel %vm3772, %v3771, %v3417
      %vm3805 = vcmask 523264
      %v3806 = vsel %vm3805, %v3773, %v3483
      %v3807 = vsel %vm3805, %v3774, %v3485
      %v3808 = vsel %vm3805, %v3775, %v3487
      %v3809 = vsel %vm3805, %v3776, %v3489
      %v3810 = vsel %vm3805, %v3777, %v3491
      %v3811 = vsel %vm3805, %v3778, %v3493
      %v3812 = vsel %vm3805, %v3779, %v3495
      %v3813 = vsel %vm3805, %v3780, %v3497
      %v3814 = vsel %vm3805, %v3781, %v3499
      %v3815 = vsel %vm3805, %v3782, %v3501
      %v3816 = vsel %vm3805, %v3783, %v3503
      %v3817 = vsel %vm3805, %v3784, %v3505
      %v3818 = vsel %vm3805, %v3785, %v3507
      %v3819 = vsel %vm3805, %v3786, %v3509
      %v3820 = vsel %vm3805, %v3787, %v3511
      %v3821 = vsel %vm3805, %v3788, %v3513
      %v3822 = vsel %vm3805, %v3789, %v3515
      %v3823 = vsel %vm3805, %v3790, %v3517
      %v3824 = vsel %vm3805, %v3791, %v3519
      %v3825 = vsel %vm3805, %v3792, %v3521
      %v3826 = vsel %vm3805, %v3793, %v3523
      %v3827 = vsel %vm3805, %v3794, %v3525
      %v3828 = vsel %vm3805, %v3795, %v3527
      %v3829 = vsel %vm3805, %v3796, %v3529
      %v3830 = vsel %vm3805, %v3797, %v3531
      %v3831 = vsel %vm3805, %v3798, %v3533
      %v3832 = vsel %vm3805, %v3799, %v3535
      %v3833 = vsel %vm3805, %v3800, %v3537
      %v3834 = vsel %vm3805, %v3801, %v3539
      %v3835 = vsel %vm3805, %v3802, %v3541
      %v3836 = vsel %vm3805, %v3803, %v3543
      %v3837 = vsel %vm3805, %v3804, %v3545
      %v3838 = vld [vmem:[%s3] sm:$0xff]
      %v3839 = vld [vmem:[%s3 + $0x8] sm:$0xff]
      %v3840 = vld [vmem:[%s3 + $0x10] sm:$0xff]
      %v3841 = vld [vmem:[%s3 + $0x18] sm:$0xff]
      %v3842 = vld [vmem:[%s3 + $0x20] sm:$0xff]
      %v3843 = vld [vmem:[%s3 + $0x28] sm:$0xff]
      %v3844 = vld [vmem:[%s3 + $0x30] sm:$0xff]
      %v3845 = vld [vmem:[%s3 + $0x38] sm:$0xff]
      %v3846 = vld [vmem:[%s3 + $0x40] sm:$0xff]
      %v3847 = vld [vmem:[%s4] sm:$0x1]
      %v3849 = vperm.slane %v3847, 0
      %vm3851 = vcmask 588800
      %v3853 = vsel %vm3851, %v3806, 0
      %v3856 = vsel %vm3851, %v3807, 0
      %v3859 = vsel %vm3851, %v3808, 0
      %v3862 = vsel %vm3851, %v3809, 0
      %v3865 = vsel %vm3851, %v3810, 0
      %v3868 = vsel %vm3851, %v3811, 0
      %v3871 = vsel %vm3851, %v3812, 0
      %v3874 = vsel %vm3851, %v3813, 0
      %v3877 = vsel %vm3851, %v3814, 0
      %v3880 = vsel %vm3851, %v3815, 0
      %v3883 = vsel %vm3851, %v3816, 0
      %v3886 = vsel %vm3851, %v3817, 0
      %v3889 = vsel %vm3851, %v3818, 0
      %v3892 = vsel %vm3851, %v3819, 0
      %v3895 = vsel %vm3851, %v3820, 0
      %v3898 = vsel %vm3851, %v3821, 0
      %v3901 = vsel %vm3851, %v3822, 0
      %v3904 = vsel %vm3851, %v3823, 0
      %v3907 = vsel %vm3851, %v3824, 0
      %v3910 = vsel %vm3851, %v3825, 0
      %v3913 = vsel %vm3851, %v3826, 0
      %v3916 = vsel %vm3851, %v3827, 0
      %v3919 = vsel %vm3851, %v3828, 0
      %v3922 = vsel %vm3851, %v3829, 0
      %v3925 = vsel %vm3851, %v3830, 0
      %v3928 = vsel %vm3851, %v3831, 0
      %v3931 = vsel %vm3851, %v3832, 0
      %v3934 = vsel %vm3851, %v3833, 0
      %v3937 = vsel %vm3851, %v3834, 0
      %v3940 = vsel %vm3851, %v3835, 0
      %v3943 = vsel %vm3851, %v3836, 0
      %v3946 = vsel %vm3851, %v3837, 0
      %3948 = vmatpush.msra.mxu0 0.0
      %3949 = vmatpush.msra.mxu0 0.0
      %3950 = vmatpush.msra.mxu0 0.0
      %3951 = vmatpush.msra.mxu0 0.0
      %3952 = vmatpush.msra.mxu0 0.0
      %3953 = vmatpush.msra.mxu0 0.0
      %3954 = vmatpush.msra.mxu0 0.0
      %3955 = vmatpush.msra.mxu0 %v3846
      %3956 = vmatpush.msra.mxu0 %v3845
      %3957 = vmatpush.msra.mxu0 %v3844
      %3958 = vmatpush.msra.mxu0 %v3843
      %3959 = vmatpush.msra.mxu0 %v3842
      %3960 = vmatpush.msra.mxu0 %v3841
      %3961 = vmatpush.msra.mxu0 %v3840
      %3962 = vmatpush.msra.mxu0 %v3839
      %3963 = vmatpush.msra.mxu0 %v3838
      %3964 = vmatmul.f32.gmra.mxu0 %v3853
      %v3965 = vpop.f32.mrf.mxu0
      %v3966 = vadd.f32 %v3849, %v3965
      %3967 = vmatmul.f32.gmra.mxu0 %v3856
      %v3968 = vpop.f32.mrf.mxu0
      %v3969 = vadd.f32 %v3849, %v3968
      %3970 = vmatmul.f32.gmra.mxu0 %v3859
      %v3971 = vpop.f32.mrf.mxu0
      %v3972 = vadd.f32 %v3849, %v3971
      %3973 = vmatmul.f32.gmra.mxu0 %v3862
      %v3974 = vpop.f32.mrf.mxu0
      %v3975 = vadd.f32 %v3849, %v3974
      %3976 = vmatmul.f32.gmra.mxu0 %v3865
      %v3977 = vpop.f32.mrf.mxu0
      %v3978 = vadd.f32 %v3849, %v3977
      %3979 = vmatmul.f32.gmra.mxu0 %v3868
      %v3980 = vpop.f32.mrf.mxu0
      %v3981 = vadd.f32 %v3849, %v3980
      %3982 = vmatmul.f32.gmra.mxu0 %v3871
      %v3983 = vpop.f32.mrf.mxu0
      %v3984 = vadd.f32 %v3849, %v3983
      %3985 = vmatmul.f32.gmra.mxu0 %v3874
      %v3986 = vpop.f32.mrf.mxu0
      %v3987 = vadd.f32 %v3849, %v3986
      %3988 = vmatmul.f32.gmra.mxu0 %v3877
      %v3989 = vpop.f32.mrf.mxu0
      %v3990 = vadd.f32 %v3849, %v3989
      %3991 = vmatmul.f32.gmra.mxu0 %v3880
      %v3992 = vpop.f32.mrf.mxu0
      %v3993 = vadd.f32 %v3849, %v3992
      %3994 = vmatmul.f32.gmra.mxu0 %v3883
      %v3995 = vpop.f32.mrf.mxu0
      %v3996 = vadd.f32 %v3849, %v3995
      %3997 = vmatmul.f32.gmra.mxu0 %v3886
      %v3998 = vpop.f32.mrf.mxu0
      %v3999 = vadd.f32 %v3849, %v3998
      %4000 = vmatmul.f32.gmra.mxu0 %v3889
      %v4001 = vpop.f32.mrf.mxu0
      %v4002 = vadd.f32 %v3849, %v4001
      %4003 = vmatmul.f32.gmra.mxu0 %v3892
      %v4004 = vpop.f32.mrf.mxu0
      %v4005 = vadd.f32 %v3849, %v4004
      %4006 = vmatmul.f32.gmra.mxu0 %v3895
      %v4007 = vpop.f32.mrf.mxu0
      %v4008 = vadd.f32 %v3849, %v4007
      %4009 = vmatmul.f32.gmra.mxu0 %v3898
      %v4010 = vpop.f32.mrf.mxu0
      %v4011 = vadd.f32 %v3849, %v4010
      %4012 = vmatmul.f32.gmra.mxu0 %v3901
      %v4013 = vpop.f32.mrf.mxu0
      %v4014 = vadd.f32 %v3849, %v4013
      %4015 = vmatmul.f32.gmra.mxu0 %v3904
      %v4016 = vpop.f32.mrf.mxu0
      %v4017 = vadd.f32 %v3849, %v4016
      %4018 = vmatmul.f32.gmra.mxu0 %v3907
      %v4019 = vpop.f32.mrf.mxu0
      %v4020 = vadd.f32 %v3849, %v4019
      %4021 = vmatmul.f32.gmra.mxu0 %v3910
      %v4022 = vpop.f32.mrf.mxu0
      %v4023 = vadd.f32 %v3849, %v4022
      %4024 = vmatmul.f32.gmra.mxu0 %v3913
      %v4025 = vpop.f32.mrf.mxu0
      %v4026 = vadd.f32 %v3849, %v4025
      %4027 = vmatmul.f32.gmra.mxu0 %v3916
      %v4028 = vpop.f32.mrf.mxu0
      %v4029 = vadd.f32 %v3849, %v4028
      %4030 = vmatmul.f32.gmra.mxu0 %v3919
      %v4031 = vpop.f32.mrf.mxu0
      %v4032 = vadd.f32 %v3849, %v4031
      %4033 = vmatmul.f32.gmra.mxu0 %v3922
      %v4034 = vpop.f32.mrf.mxu0
      %v4035 = vadd.f32 %v3849, %v4034
      %4036 = vmatmul.f32.gmra.mxu0 %v3925
      %v4037 = vpop.f32.mrf.mxu0
      %v4038 = vadd.f32 %v3849, %v4037
      %4039 = vmatmul.f32.gmra.mxu0 %v3928
      %v4040 = vpop.f32.mrf.mxu0
      %v4041 = vadd.f32 %v3849, %v4040
      %4042 = vmatmul.f32.gmra.mxu0 %v3931
      %v4043 = vpop.f32.mrf.mxu0
      %v4044 = vadd.f32 %v3849, %v4043
      %4045 = vmatmul.f32.gmra.mxu0 %v3934
      %v4046 = vpop.f32.mrf.mxu0
      %v4047 = vadd.f32 %v3849, %v4046
      %4048 = vmatmul.f32.gmra.mxu0 %v3937
      %v4049 = vpop.f32.mrf.mxu0
      %v4050 = vadd.f32 %v3849, %v4049
      %4051 = vmatmul.f32.gmra.mxu0 %v3940
      %v4052 = vpop.f32.mrf.mxu0
      %v4053 = vadd.f32 %v3849, %v4052
      %4054 = vmatmul.f32.gmra.mxu0 %v3943
      %v4055 = vpop.f32.mrf.mxu0
      %v4056 = vadd.f32 %v3849, %v4055
      %4057 = vmatmul.f32.gmra.mxu0 %v3946
      %v4058 = vpop.f32.mrf.mxu0
      %v4059 = vadd.f32 %v3849, %v4058
      %4060 = vdwg.mxu0
      %v4061 = vsel %vm1691, %v3966, 0.0
      %v4062 = vsel %vm1691, %v3969, 0.0
      %v4063 = vadd.f32 %v4061, %v4062
      %v4064 = vsel %vm1691, %v3972, 0.0
      %v4065 = vadd.f32 %v4063, %v4064
      %v4066 = vsel %vm1691, %v3975, 0.0
      %v4067 = vadd.f32 %v4065, %v4066
      %v4068 = vsel %vm1691, %v3978, 0.0
      %v4069 = vadd.f32 %v4067, %v4068
      %v4070 = vsel %vm1691, %v3981, 0.0
      %v4071 = vadd.f32 %v4069, %v4070
      %v4072 = vsel %vm1691, %v3984, 0.0
      %v4073 = vadd.f32 %v4071, %v4072
      %v4074 = vsel %vm1691, %v3987, 0.0
      %v4075 = vadd.f32 %v4073, %v4074
      %v4076 = vsel %vm1691, %v3990, 0.0
      %v4077 = vadd.f32 %v4075, %v4076
      %v4078 = vsel %vm1691, %v3993, 0.0
      %v4079 = vadd.f32 %v4077, %v4078
      %v4080 = vsel %vm1691, %v3996, 0.0
      %v4081 = vadd.f32 %v4079, %v4080
      %v4082 = vsel %vm1691, %v3999, 0.0
      %v4083 = vadd.f32 %v4081, %v4082
      %v4084 = vsel %vm1691, %v4002, 0.0
      %v4085 = vadd.f32 %v4083, %v4084
      %v4086 = vsel %vm1691, %v4005, 0.0
      %v4087 = vadd.f32 %v4085, %v4086
      %v4088 = vsel %vm1691, %v4008, 0.0
      %v4089 = vadd.f32 %v4087, %v4088
      %v4090 = vsel %vm1691, %v4011, 0.0
      %v4091 = vadd.f32 %v4089, %v4090
      %v4092 = vsel %vm1691, %v4014, 0.0
      %v4093 = vadd.f32 %v4091, %v4092
      %v4094 = vsel %vm1691, %v4017, 0.0
      %v4095 = vadd.f32 %v4093, %v4094
      %v4096 = vsel %vm1691, %v4020, 0.0
      %v4097 = vadd.f32 %v4095, %v4096
      %v4098 = vsel %vm1691, %v4023, 0.0
      %v4099 = vadd.f32 %v4097, %v4098
      %v4100 = vsel %vm1691, %v4026, 0.0
      %v4101 = vadd.f32 %v4099, %v4100
      %v4102 = vsel %vm1691, %v4029, 0.0
      %v4103 = vadd.f32 %v4101, %v4102
      %v4104 = vsel %vm1691, %v4032, 0.0
      %v4105 = vadd.f32 %v4103, %v4104
      %v4106 = vsel %vm1691, %v4035, 0.0
      %v4107 = vadd.f32 %v4105, %v4106
      %v4108 = vsel %vm1691, %v4038, 0.0
      %v4109 = vadd.f32 %v4107, %v4108
      %v4110 = vsel %vm1691, %v4041, 0.0
      %v4111 = vadd.f32 %v4109, %v4110
      %v4112 = vsel %vm1691, %v4044, 0.0
      %v4113 = vadd.f32 %v4111, %v4112
      %v4114 = vsel %vm1691, %v4047, 0.0
      %v4115 = vadd.f32 %v4113, %v4114
      %v4116 = vsel %vm1691, %v4050, 0.0
      %v4117 = vadd.f32 %v4115, %v4116
      %v4118 = vsel %vm1691, %v4053, 0.0
      %v4119 = vadd.f32 %v4117, %v4118
      %v4120 = vsel %vm1691, %v4056, 0.0
      %v4121 = vadd.f32 %v4119, %v4120
      %v4122 = vsel %vm1691, %v4059, 0.0
      %v4123 = vadd.f32 %v4121, %v4122
      %v4124 = vrot.slane %v4123, 4
      %v4125 = vadd.f32 %v4123, %v4124
      %v4126 = vrot.slane %v4125, 2
      %v4127 = vadd.f32 %v4125, %v4126
      %v4128 = vrot.slane %v4127, 1
      %v4129 = vadd.f32 %v4127, %v4128
      %v4130 = vrcp.pop 256.0
      %v4131 = vmul.f32 256.0, %v4130
      %v4132 = vsub.f32 1.0, %v4131
      %v4133 = vmul.f32 %v4130, %v4132
      %v4134 = vadd.f32 %v4130, %v4133
      %vm4135 = vweird.f32 %v4130
      %v4136 = vsel %vm4135, %v4130, %v4134
      %v4137 = vmul.f32 %v4129, %v4136
      %v4138 = vsub.f32 %v3966, %v4137
      %v4139 = vsub.f32 %v3969, %v4137
      %v4140 = vsub.f32 %v3972, %v4137
      %v4141 = vsub.f32 %v3975, %v4137
      %v4142 = vsub.f32 %v3978, %v4137
      %v4143 = vsub.f32 %v3981, %v4137
      %v4144 = vsub.f32 %v3984, %v4137
      %v4145 = vsub.f32 %v3987, %v4137
      %v4146 = vsub.f32 %v3990, %v4137
      %v4147 = vsub.f32 %v3993, %v4137
      %v4148 = vsub.f32 %v3996, %v4137
      %v4149 = vsub.f32 %v3999, %v4137
      %v4150 = vsub.f32 %v4002, %v4137
      %v4151 = vsub.f32 %v4005, %v4137
      %v4152 = vsub.f32 %v4008, %v4137
      %v4153 = vsub.f32 %v4011, %v4137
      %v4154 = vsub.f32 %v4014, %v4137
      %v4155 = vsub.f32 %v4017, %v4137
      %v4156 = vsub.f32 %v4020, %v4137
      %v4157 = vsub.f32 %v4023, %v4137
      %v4158 = vsub.f32 %v4026, %v4137
      %v4159 = vsub.f32 %v4029, %v4137
      %v4160 = vsub.f32 %v4032, %v4137
      %v4161 = vsub.f32 %v4035, %v4137
      %v4162 = vsub.f32 %v4038, %v4137
      %v4163 = vsub.f32 %v4041, %v4137
      %v4164 = vsub.f32 %v4044, %v4137
      %v4165 = vsub.f32 %v4047, %v4137
      %v4166 = vsub.f32 %v4050, %v4137
      %v4167 = vsub.f32 %v4053, %v4137
      %v4168 = vsub.f32 %v4056, %v4137
      %v4169 = vsub.f32 %v4059, %v4137
      %v4170 = vmul.f32 %v4138, %v4138
      %v4171 = vmul.f32 %v4139, %v4139
      %v4172 = vmul.f32 %v4140, %v4140
      %v4173 = vmul.f32 %v4141, %v4141
      %v4174 = vmul.f32 %v4142, %v4142
      %v4175 = vmul.f32 %v4143, %v4143
      %v4176 = vmul.f32 %v4144, %v4144
      %v4177 = vmul.f32 %v4145, %v4145
      %v4178 = vmul.f32 %v4146, %v4146
      %v4179 = vmul.f32 %v4147, %v4147
      %v4180 = vmul.f32 %v4148, %v4148
      %v4181 = vmul.f32 %v4149, %v4149
      %v4182 = vmul.f32 %v4150, %v4150
      %v4183 = vmul.f32 %v4151, %v4151
      %v4184 = vmul.f32 %v4152, %v4152
      %v4185 = vmul.f32 %v4153, %v4153
      %v4186 = vmul.f32 %v4154, %v4154
      %v4187 = vmul.f32 %v4155, %v4155
      %v4188 = vmul.f32 %v4156, %v4156
      %v4189 = vmul.f32 %v4157, %v4157
      %v4190 = vmul.f32 %v4158, %v4158
      %v4191 = vmul.f32 %v4159, %v4159
      %v4192 = vmul.f32 %v4160, %v4160
      %v4193 = vmul.f32 %v4161, %v4161
      %v4194 = vmul.f32 %v4162, %v4162
      %v4195 = vmul.f32 %v4163, %v4163
      %v4196 = vmul.f32 %v4164, %v4164
      %v4197 = vmul.f32 %v4165, %v4165
      %v4198 = vmul.f32 %v4166, %v4166
      %v4199 = vmul.f32 %v4167, %v4167
      %v4200 = vmul.f32 %v4168, %v4168
      %v4201 = vmul.f32 %v4169, %v4169
      %v4202 = vsel %vm1691, %v4170, 0.0
      %v4203 = vsel %vm1691, %v4171, 0.0
      %v4204 = vadd.f32 %v4202, %v4203
      %v4205 = vsel %vm1691, %v4172, 0.0
      %v4206 = vadd.f32 %v4204, %v4205
      %v4207 = vsel %vm1691, %v4173, 0.0
      %v4208 = vadd.f32 %v4206, %v4207
      %v4209 = vsel %vm1691, %v4174, 0.0
      %v4210 = vadd.f32 %v4208, %v4209
      %v4211 = vsel %vm1691, %v4175, 0.0
      %v4212 = vadd.f32 %v4210, %v4211
      %v4213 = vsel %vm1691, %v4176, 0.0
      %v4214 = vadd.f32 %v4212, %v4213
      %v4215 = vsel %vm1691, %v4177, 0.0
      %v4216 = vadd.f32 %v4214, %v4215
      %v4217 = vsel %vm1691, %v4178, 0.0
      %v4218 = vadd.f32 %v4216, %v4217
      %v4219 = vsel %vm1691, %v4179, 0.0
      %v4220 = vadd.f32 %v4218, %v4219
      %v4221 = vsel %vm1691, %v4180, 0.0
      %v4222 = vadd.f32 %v4220, %v4221
      %v4223 = vsel %vm1691, %v4181, 0.0
      %v4224 = vadd.f32 %v4222, %v4223
      %v4225 = vsel %vm1691, %v4182, 0.0
      %v4226 = vadd.f32 %v4224, %v4225
      %v4227 = vsel %vm1691, %v4183, 0.0
      %v4228 = vadd.f32 %v4226, %v4227
      %v4229 = vsel %vm1691, %v4184, 0.0
      %v4230 = vadd.f32 %v4228, %v4229
      %v4231 = vsel %vm1691, %v4185, 0.0
      %v4232 = vadd.f32 %v4230, %v4231
      %v4233 = vsel %vm1691, %v4186, 0.0
      %v4234 = vadd.f32 %v4232, %v4233
      %v4235 = vsel %vm1691, %v4187, 0.0
      %v4236 = vadd.f32 %v4234, %v4235
      %v4237 = vsel %vm1691, %v4188, 0.0
      %v4238 = vadd.f32 %v4236, %v4237
      %v4239 = vsel %vm1691, %v4189, 0.0
      %v4240 = vadd.f32 %v4238, %v4239
      %v4241 = vsel %vm1691, %v4190, 0.0
      %v4242 = vadd.f32 %v4240, %v4241
      %v4243 = vsel %vm1691, %v4191, 0.0
      %v4244 = vadd.f32 %v4242, %v4243
      %v4245 = vsel %vm1691, %v4192, 0.0
      %v4246 = vadd.f32 %v4244, %v4245
      %v4247 = vsel %vm1691, %v4193, 0.0
      %v4248 = vadd.f32 %v4246, %v4247
      %v4249 = vsel %vm1691, %v4194, 0.0
      %v4250 = vadd.f32 %v4248, %v4249
      %v4251 = vsel %vm1691, %v4195, 0.0
      %v4252 = vadd.f32 %v4250, %v4251
      %v4253 = vsel %vm1691, %v4196, 0.0
      %v4254 = vadd.f32 %v4252, %v4253
      %v4255 = vsel %vm1691, %v4197, 0.0
      %v4256 = vadd.f32 %v4254, %v4255
      %v4257 = vsel %vm1691, %v4198, 0.0
      %v4258 = vadd.f32 %v4256, %v4257
      %v4259 = vsel %vm1691, %v4199, 0.0
      %v4260 = vadd.f32 %v4258, %v4259
      %v4261 = vsel %vm1691, %v4200, 0.0
      %v4262 = vadd.f32 %v4260, %v4261
      %v4263 = vsel %vm1691, %v4201, 0.0
      %v4264 = vadd.f32 %v4262, %v4263
      %v4265 = vrot.slane %v4264, 4
      %v4266 = vadd.f32 %v4264, %v4265
      %v4267 = vrot.slane %v4266, 2
      %v4268 = vadd.f32 %v4266, %v4267
      %v4269 = vrot.slane %v4268, 1
      %v4270 = vadd.f32 %v4268, %v4269
      %v4271 = vmul.f32 %v4270, %v4136
      %v4272 = vadd.f32 %v4271, 1e-05
      %v4273 = vrsqrt.pop %v4272
      %v4274 = vmul.f32 %v4273, %v4272
      %v4275 = vmul.f32 %v4274, %v4273
      %v4276 = vmul.f32 0.5, %v4275
      %v4277 = vsub.f32 1.5, %v4276
      %v4278 = vmul.f32 %v4273, %v4277
      %vm4279 = vweird.f32 %v4272
      %vm4280 = vweird.f32 %v4273
      %vm4281 = vmor %vm4279, %vm4280
      %v4282 = vsel %vm4281, %v4273, %v4278
      %v4283 = vmul.f32 %v4138, %v4282
      %v4284 = vmul.f32 %v4139, %v4282
      %v4285 = vmul.f32 %v4140, %v4282
      %v4286 = vmul.f32 %v4141, %v4282
      %v4287 = vmul.f32 %v4142, %v4282
      %v4288 = vmul.f32 %v4143, %v4282
      %v4289 = vmul.f32 %v4144, %v4282
      %v4290 = vmul.f32 %v4145, %v4282
      %v4291 = vmul.f32 %v4146, %v4282
      %v4292 = vmul.f32 %v4147, %v4282
      %v4293 = vmul.f32 %v4148, %v4282
      %v4294 = vmul.f32 %v4149, %v4282
      %v4295 = vmul.f32 %v4150, %v4282
      %v4296 = vmul.f32 %v4151, %v4282
      %v4297 = vmul.f32 %v4152, %v4282
      %v4298 = vmul.f32 %v4153, %v4282
      %v4299 = vmul.f32 %v4154, %v4282
      %v4300 = vmul.f32 %v4155, %v4282
      %v4301 = vmul.f32 %v4156, %v4282
      %v4302 = vmul.f32 %v4157, %v4282
      %v4303 = vmul.f32 %v4158, %v4282
      %v4304 = vmul.f32 %v4159, %v4282
      %v4305 = vmul.f32 %v4160, %v4282
      %v4306 = vmul.f32 %v4161, %v4282
      %v4307 = vmul.f32 %v4162, %v4282
      %v4308 = vmul.f32 %v4163, %v4282
      %v4309 = vmul.f32 %v4164, %v4282
      %v4310 = vmul.f32 %v4165, %v4282
      %v4311 = vmul.f32 %v4166, %v4282
      %v4312 = vmul.f32 %v4167, %v4282
      %v4313 = vmul.f32 %v4168, %v4282
      %v4314 = vmul.f32 %v4169, %v4282
      %v4315 = vmax.f32 %v4283, 0.0
      %v4316 = vmax.f32 %v4284, 0.0
      %v4317 = vmax.f32 %v4285, 0.0
      %v4318 = vmax.f32 %v4286, 0.0
      %v4319 = vmax.f32 %v4287, 0.0
      %v4320 = vmax.f32 %v4288, 0.0
      %v4321 = vmax.f32 %v4289, 0.0
      %v4322 = vmax.f32 %v4290, 0.0
      %v4323 = vmax.f32 %v4291, 0.0
      %v4324 = vmax.f32 %v4292, 0.0
      %v4325 = vmax.f32 %v4293, 0.0
      %v4326 = vmax.f32 %v4294, 0.0
      %v4327 = vmax.f32 %v4295, 0.0
      %v4328 = vmax.f32 %v4296, 0.0
      %v4329 = vmax.f32 %v4297, 0.0
      %v4330 = vmax.f32 %v4298, 0.0
      %v4331 = vmax.f32 %v4299, 0.0
      %v4332 = vmax.f32 %v4300, 0.0
      %v4333 = vmax.f32 %v4301, 0.0
      %v4334 = vmax.f32 %v4302, 0.0
      %v4335 = vmax.f32 %v4303, 0.0
      %v4336 = vmax.f32 %v4304, 0.0
      %v4337 = vmax.f32 %v4305, 0.0
      %v4338 = vmax.f32 %v4306, 0.0
      %v4339 = vmax.f32 %v4307, 0.0
      %v4340 = vmax.f32 %v4308, 0.0
      %v4341 = vmax.f32 %v4309, 0.0
      %v4342 = vmax.f32 %v4310, 0.0
      %v4343 = vmax.f32 %v4311, 0.0
      %v4344 = vmax.f32 %v4312, 0.0
      %v4345 = vmax.f32 %v4313, 0.0
      %v4346 = vmax.f32 %v4314, 0.0
      %4347 = vxpose.xlu0.b32.start [1/16] %v4315, 128
      %4348 = vxpose.xlu0.b32.cont [2/16] %v4316, 128
      %4349 = vxpose.xlu0.b32.cont [3/16] %v4317, 128
      %4350 = vxpose.xlu0.b32.cont [4/16] %v4318, 128
      %4351 = vxpose.xlu0.b32.cont [5/16] %v4319, 128
      %4352 = vxpose.xlu0.b32.cont [6/16] %v4320, 128
      %4353 = vxpose.xlu0.b32.cont [7/16] %v4321, 128
      %4354 = vxpose.xlu0.b32.cont [8/16] %v4322, 128
      %4355 = vxpose.xlu0.b32.cont [9/16] %v4323, 128
      %4356 = vxpose.xlu0.b32.cont [10/16] %v4324, 128
      %4357 = vxpose.xlu0.b32.cont [11/16] %v4325, 128
      %4358 = vxpose.xlu0.b32.cont [12/16] %v4326, 128
      %4359 = vxpose.xlu0.b32.cont [13/16] %v4327, 128
      %4360 = vxpose.xlu0.b32.cont [14/16] %v4328, 128
      %4361 = vxpose.xlu0.b32.cont [15/16] %v4329, 128
      %4362 = vxpose.xlu0.b32.end [16/16] %v4330, 128
      %v4363 = vpop.trf.xlu0
      %v4364 = vpop.trf.xlu0
      %v4365 = vpop.trf.xlu0
      %v4366 = vpop.trf.xlu0
      %v4367 = vpop.trf.xlu0
      %v4368 = vpop.trf.xlu0
      %v4369 = vpop.trf.xlu0
      %v4370 = vpop.trf.xlu0
      %v4371 = vpop.trf.xlu0
      %v4372 = vpop.trf.xlu0
      %v4373 = vpop.trf.xlu0
      %v4374 = vpop.trf.xlu0
      %v4375 = vpop.trf.xlu0
      %v4376 = vpop.trf.xlu0
      %v4377 = vpop.trf.xlu0
      %v4378 = vpop.trf.xlu0
      %4379 = vxpose.xlu0.b32.start [1/16] %v4331, 128
      %4380 = vxpose.xlu0.b32.cont [2/16] %v4332, 128
      %4381 = vxpose.xlu0.b32.cont [3/16] %v4333, 128
      %4382 = vxpose.xlu0.b32.cont [4/16] %v4334, 128
      %4383 = vxpose.xlu0.b32.cont [5/16] %v4335, 128
      %4384 = vxpose.xlu0.b32.cont [6/16] %v4336, 128
      %4385 = vxpose.xlu0.b32.cont [7/16] %v4337, 128
      %4386 = vxpose.xlu0.b32.cont [8/16] %v4338, 128
      %4387 = vxpose.xlu0.b32.cont [9/16] %v4339, 128
      %4388 = vxpose.xlu0.b32.cont [10/16] %v4340, 128
      %4389 = vxpose.xlu0.b32.cont [11/16] %v4341, 128
      %4390 = vxpose.xlu0.b32.cont [12/16] %v4342, 128
      %4391 = vxpose.xlu0.b32.cont [13/16] %v4343, 128
      %4392 = vxpose.xlu0.b32.cont [14/16] %v4344, 128
      %4393 = vxpose.xlu0.b32.cont [15/16] %v4345, 128
      %4394 = vxpose.xlu0.b32.end [16/16] %v4346, 128
      %v4395 = vpop.trf.xlu0
      %v4396 = vpop.trf.xlu0
      %v4397 = vpop.trf.xlu0
      %v4398 = vpop.trf.xlu0
      %v4399 = vpop.trf.xlu0
      %v4400 = vpop.trf.xlu0
      %v4401 = vpop.trf.xlu0
      %v4402 = vpop.trf.xlu0
      %v4403 = vpop.trf.xlu0
      %v4404 = vpop.trf.xlu0
      %v4405 = vpop.trf.xlu0
      %v4406 = vpop.trf.xlu0
      %v4407 = vpop.trf.xlu0
      %v4408 = vpop.trf.xlu0
      %v4409 = vpop.trf.xlu0
      %v4410 = vpop.trf.xlu0
      %4411 = vst [vmem:[%s224] sm:$0xff] %v4363
      %4412 = vst [vmem:[%s224 + $0x8] sm:$0xff] %v4395
      %p4413 = scmp.lt.s32.totalorder %s16, 1
      %s4414 = scalar_select %p4413, %s16, 1
      %s4415 = smul.addr %s4414, 2
      %s4416 = smul.addr %s4415, 8
      %s4417 = scalar_lea.vmem %s5, %s4416
      // Predicated region
      $region41: #{input_layer_forward.1} parent=39 // pred_check
        %p4418 = pneg %p144
      $region42: #{input_layer_forward.1} parent=39 // pred_check_branch
        %4420 = sbr.rel (%p4418) target = $region44
      $region43: #{input_layer_forward.1} parent=39 // pred_region
        _
      $region44: #{input_layer_forward.1} parent=39 // pred_fallthru
        _
    $region40: #{input_layer_forward.1} parent=5 // pred_fallthru
      _
    %p4421 = scmp.le.s32.totalorder 2, %s11
    // Predicated region
    $region45: #{input_layer_forward.1} parent=5 // pred_check
      %p4422 = pneg %p4421
    $region46: #{input_layer_forward.1} parent=5 // pred_check_branch
      %4424 = sbr.rel (%p4422) target = $region48
    $region47: #{input_layer_forward.1} parent=5 // pred_region
      %s4425 = ssub.s32 %s11, 2
      // Predicated region
      $region49: #{input_layer_forward.1} parent=47 // pred_check
        %p4426 = pneg %p150
      $region50: #{input_layer_forward.1} parent=47 // pred_check_branch
        %4428 = sbr.rel (%p4426) target = $region52
      $region51: #{input_layer_forward.1} parent=47 // pred_region
        %p4429 = scmp.lt.s32.totalorder %s17, 1
        %s4430 = scalar_select %p4429, %s17, 1
        %s4431 = smul.addr %s4430, 2
        %s4432 = smul.addr %s4431, 8
        %s4433 = scalar_lea.vmem %s5, %s4432
      $region52: #{input_layer_forward.1} parent=47 // pred_fallthru
        _
    $region48: #{input_layer_forward.1} parent=5 // pred_fallthru
      _
  $region6: #{input_layer_forward.1} parent=0 // loop_footer
    %s15 = sadd.s32 1, %s11
  $region7: #{input_layer_forward.1} parent=0 // loop_footer_branch
    %10 = sbr.rel target = $region3
  $region8: #{input_layer_forward.1} parent=0 // loop_exit
    _

</llo_original>
